<compile_context>
chip_gen: v7x
topology: tpu7x:2x2x1
jax: 0.10.0
libtpu: 0.0.40
codegen_flags: <defaults>
</compile_context>

<pallas_src>
import jax
import jax.numpy as jnp
from jax import lax
from jax.experimental import pallas as pl
from jax.experimental.pallas import tpu as pltpu


# ------------------------- Pallas kernel ---------------------------------

def _fpn_kernel(x2_ref, x3_ref, x4_ref, x5_ref,
                w2_ref, w3_ref, w4_ref, w5_ref,
                b2_ref, b3_ref, b4_ref, b5_ref,
                rh4_ref, rh3_ref, rh2_ref,
                rw4_ref, rw3_ref, rw2_ref,
                a_ref, m_ref, bc_ref,
                o_ref):
    """Whole FPN forward for one image, entirely in VMEM (matmuls + adds only)."""

    def mm(a, b):
        return jnp.dot(a, b, preferred_element_type=jnp.float32)

    # lateral 1x1 convs (block-diagonal weights) + fused nearest-2x residuals
    m5 = mm(x5_ref[...], w5_ref[...]) + b5_ref[...]
    m4 = (mm(rh4_ref[...], mm(m5, rw4_ref[...]))
          + mm(x4_ref[...], w4_ref[...]) + b4_ref[...])
    m3 = (mm(rh3_ref[...], mm(m4, rw3_ref[...]))
          + mm(x3_ref[...], w3_ref[...]) + b3_ref[...])
    m2 = (mm(rh2_ref[...], mm(m3, rw2_ref[...]))
          + mm(x2_ref[...], w2_ref[...]) + b2_ref[...])

    # 3x3 conv (pad=1) as 3 banded matmuls -- no im2col, no padded scratch.
    p2 = jnp.broadcast_to(bc_ref[...], m2.shape)
    for dy in range(3):                       # static 3-tap loop
        p2 = p2 + mm(a_ref[dy], mm(m2, m_ref[dy]))
    o_ref[...] = p2.astype(o_ref.dtype)


# ------------------------- glue: constant matrices -------------------------

def _nchw_to_rows(x):
    """NCHW -> (N, H, W*C), channels fastest (lane-dense slab)."""
    n, c, h, w = x.shape
    return jnp.transpose(x, (0, 2, 3, 1)).reshape(n, h, w * c)


def _upsample_mats(h_src, w_src, c, dtype):
    """Nearest-2x as exact 0/1 matrices: up = Rh @ x @ Rw."""
    rh = jnp.repeat(jnp.eye(h_src, dtype=dtype), 2, axis=0)        # (2h, h)
    u = jnp.repeat(jnp.eye(w_src, dtype=dtype), 2, axis=0).T       # (w, 2w)
    rw = jnp.kron(u, jnp.eye(c, dtype=dtype))                      # (w*c, 2w*c)
    return rh, rw


def _conv3x3_mats(w_hwio, h_out, w_out):
    """3x3 'same' conv as  sum_dy  A_dy @ x @ M_dy  on (H, W*C) slabs."""
    dtype = w_hwio.dtype
    a = jnp.stack([jnp.eye(h_out, k=dy - 1, dtype=dtype)
                   for dy in range(3)])                            # (3, H, H)
    m = jnp.stack([
        sum(jnp.kron(jnp.eye(w_out, k=1 - dx, dtype=dtype), w_hwio[dy, dx])
            for dx in range(3))
        for dy in range(3)])                                       # (3, W*C, W*C)
    return a, m


# ------------------------- forward ----------------------------------------

def fpn_forward(feats_nchw, params):
    """feats_nchw = (c2, c3, c4, c5) in PyTorch NCHW; returns p2 in NCHW."""
    c2, c3, c4, c5 = feats_nchw
    lat_w, lat_b = params["lat_w"], params["lat_b"]
    fw, fb = params["fpn_w3"], params["fpn_b"]       # (3,3,C,C) HWIO, (C,)

    n_batch = c2.shape[0]
    cout = lat_w[0].shape[1]
    dt = c2.dtype

    xs = [_nchw_to_rows(x) for x in (c2, c3, c4, c5)]
    dims = [(x.shape[2], x.shape[3]) for x in (c2, c3, c4, c5)]    # (H, W)
    (h2, w2), (h3, w3d), (h4, w4), (h5, w5) = dims

    # block-diagonal 1x1 weights + width-tiled biases (lane-dense layout).
    bdw = [jnp.kron(jnp.eye(w, dtype=dt), lw) for (_, w), lw in zip(dims, lat_w)]
    bt = [jnp.tile(lb, w)[None, :] for (_, w), lb in zip(dims, lat_b)]

    # nearest-2x replication matrices, level l+1 -> level l (l = 4, 3, 2).
    rh4, rw4 = _upsample_mats(h5, w5, cout, dt)
    rh3, rw3 = _upsample_mats(h4, w4, cout, dt)
    rh2, rw2 = _upsample_mats(h3, w3d, cout, dt)

    # banded 3x3-conv matrices + tiled bias.
    a_mats, m_mats = _conv3x3_mats(fw, h2, w2)
    bconv = jnp.tile(fb, w2)[None, :]

    x2r, x3r, x4r, x5r = xs
    out_wc = w2 * cout

    def per_image(arr):
        hh, wc = arr.shape[1], arr.shape[2]
        return pl.BlockSpec((None, hh, wc), lambda n: (n, 0, 0))

    def resident(arr):
        if arr.ndim == 2:
            return pl.BlockSpec(arr.shape, lambda n: (0, 0))
        return pl.BlockSpec(arr.shape, lambda n: (0, 0, 0))

    out = pl.pallas_call(
        _fpn_kernel,
        out_shape=jax.ShapeDtypeStruct((n_batch, h2, out_wc), dt),
        grid_spec=pltpu.PrefetchScalarGridSpec(
            num_scalar_prefetch=0,
            grid=(n_batch,),
            in_specs=[
                per_image(x2r), per_image(x3r), per_image(x4r), per_image(x5r),
                resident(bdw[0]), resident(bdw[1]), resident(bdw[2]), resident(bdw[3]),
                resident(bt[0]), resident(bt[1]), resident(bt[2]), resident(bt[3]),
                resident(rh4), resident(rh3), resident(rh2),
                resident(rw4), resident(rw3), resident(rw2),
                resident(a_mats), resident(m_mats), resident(bconv),
            ],
            out_specs=pl.BlockSpec((None, h2, out_wc), lambda n: (n, 0, 0)),
        ),
        compiler_params=pltpu.CompilerParams(
            dimension_semantics=("parallel",),       # 2 images -> 2 TCs on v7x
            vmem_limit_bytes=32 * 1024 * 1024),      # ~8 MiB used; safe on v5e/v6e/v7x
    )(x2r, x3r, x4r, x5r,
      bdw[0], bdw[1], bdw[2], bdw[3],
      bt[0], bt[1], bt[2], bt[3],
      rh4, rh3, rh2, rw4, rw3, rw2,
      a_mats, m_mats, bconv)

    p2 = out.reshape(n_batch, h2, w2, cout)
    return jnp.transpose(p2, (0, 3, 1, 2))


# ------------------------- pure-JAX reference ------------------------------

def ref_forward(feats_nchw, params):
    c2, c3, c4, c5 = [jnp.transpose(c, (0, 2, 3, 1)) for c in feats_nchw]
    lw, lb = params["lat_w"], params["lat_b"]

    def conv1(x, w, b):
        y = lax.conv_general_dilated(
            x, w.reshape(1, 1, *w.shape), (1, 1), "VALID",
            dimension_numbers=("NHWC", "HWIO", "NHWC"),
            precision=lax.Precision.HIGHEST)
        return y + b.reshape(1, 1, 1, -1)

    def up2(x):
        return jnp.repeat(jnp.repeat(x, 2, axis=1), 2, axis=2)

    m5 = conv1(c5, lw[3], lb[3])
    m4 = up2(m5) + conv1(c4, lw[2], lb[2])
    m3 = up2(m4) + conv1(c3, lw[1], lb[1])
    m2 = up2(m3) + conv1(c2, lw[0], lb[0])
    p2 = lax.conv_general_dilated(
        m2, params["fpn_w3"], (1, 1), "SAME",
        dimension_numbers=("NHWC", "HWIO", "NHWC"),
        precision=lax.Precision.HIGHEST) + params["fpn_b"].reshape(1, 1, 1, -1)
    return jnp.transpose(p2, (0, 3, 1, 2))


# ------------------------- main --------------------------------------------

if __name__ == "__main__":
    key = jax.random.PRNGKey(0)
    N, in_c, out_c, H = 2, 32, 32, 16   # small, consistent with the module

    ks = jax.random.split(key, 9)
    # c2..c5: channels [in_c/8, in_c/4, in_c/2, in_c], spatial halves each level
    c2 = jax.random.normal(ks[0], (N, in_c // 8, H, H), jnp.float32)
    c3 = jax.random.normal(ks[1], (N, in_c // 4, H // 2, H // 2), jnp.float32)
    c4 = jax.random.normal(ks[2], (N, in_c // 2, H // 4, H // 4), jnp.float32)
    c5 = jax.random.normal(ks[3], (N, in_c, H // 8, H // 8), jnp.float32)

    lat_in = [in_c // 8, in_c // 4, in_c // 2, in_c]
    lat_w = [0.1 * jax.random.normal(ks[4 + i], (ci, out_c), jnp.float32)
             for i, ci in enumerate(lat_in)]
    lat_b = [0.01 * (i + 1) * jnp.ones((out_c,), jnp.float32) for i in range(4)]
    fw = 0.1 * jax.random.normal(ks[8], (3, 3, out_c, out_c), jnp.float32)  # HWIO
    fb = 0.01 * jnp.ones((out_c,), jnp.float32)

    params = {"lat_w": lat_w, "lat_b": lat_b, "fpn_w3": fw, "fpn_b": fb}

    out = fpn_forward((c2, c3, c4, c5), params)
    out = jax.block_until_ready(out)
    assert out.shape == (N, out_c, H, H), out.shape

    ref = ref_forward((c2, c3, c4, c5), params)
    assert bool(jnp.allclose(out, ref, rtol=2e-2, atol=5e-2)), float(
        jnp.max(jnp.abs(out - ref)))

    print("KERNEL_OK")
</pallas_src>

<mosaic_0001>
module attributes {stable_mosaic.version = 11 : i64} {
  func.func @_fpn_kernel(%arg0: i32, %arg1: memref<1x16x64xf32, #tpu.memory_space<vmem>>, %arg2: memref<1x8x64xf32, #tpu.memory_space<vmem>>, %arg3: memref<1x4x64xf32, #tpu.memory_space<vmem>>, %arg4: memref<1x2x64xf32, #tpu.memory_space<vmem>>, %arg5: memref<64x512xf32, #tpu.memory_space<vmem>>, %arg6: memref<64x256xf32, #tpu.memory_space<vmem>>, %arg7: memref<64x128xf32, #tpu.memory_space<vmem>>, %arg8: memref<64x64xf32, #tpu.memory_space<vmem>>, %arg9: memref<1x512xf32, #tpu.memory_space<vmem>>, %arg10: memref<1x256xf32, #tpu.memory_space<vmem>>, %arg11: memref<1x128xf32, #tpu.memory_space<vmem>>, %arg12: memref<1x64xf32, #tpu.memory_space<vmem>>, %arg13: memref<4x2xf32, #tpu.memory_space<vmem>>, %arg14: memref<8x4xf32, #tpu.memory_space<vmem>>, %arg15: memref<16x8xf32, #tpu.memory_space<vmem>>, %arg16: memref<64x128xf32, #tpu.memory_space<vmem>>, %arg17: memref<128x256xf32, #tpu.memory_space<vmem>>, %arg18: memref<256x512xf32, #tpu.memory_space<vmem>>, %arg19: memref<3x16x16xf32, #tpu.memory_space<vmem>>, %arg20: memref<3x512x512xf32, #tpu.memory_space<vmem>>, %arg21: memref<1x512xf32, #tpu.memory_space<vmem>>, %arg22: memref<1x16x512xf32, #tpu.memory_space<vmem>>) attributes {dimension_semantics = [#tpu.dimension_semantics<parallel>], iteration_bounds = array<i64: 2>, scalar_prefetch = 0 : i64, scratch_operands = 0 : i64, tpu.core_type = #tpu.core_type<tc>, window_params = [{transform_indices = @transform_0, window_bounds = array<i64: 1, 16, 64>}, {transform_indices = @transform_1, window_bounds = array<i64: 1, 8, 64>}, {transform_indices = @transform_2, window_bounds = array<i64: 1, 4, 64>}, {transform_indices = @transform_3, window_bounds = array<i64: 1, 2, 64>}, {pipeline_mode = #tpu.pipeline_mode<synchronous>, transform_indices = @transform_4, window_bounds = array<i64: 64, 512>}, {pipeline_mode = #tpu.pipeline_mode<synchronous>, transform_indices = @transform_5, window_bounds = array<i64: 64, 256>}, {pipeline_mode = #tpu.pipeline_mode<synchronous>, transform_indices = @transform_6, window_bounds = array<i64: 64, 128>}, {pipeline_mode = #tpu.pipeline_mode<synchronous>, transform_indices = @transform_7, window_bounds = array<i64: 64, 64>}, {pipeline_mode = #tpu.pipeline_mode<synchronous>, transform_indices = @transform_8, window_bounds = array<i64: 1, 512>}, {pipeline_mode = #tpu.pipeline_mode<synchronous>, transform_indices = @transform_9, window_bounds = array<i64: 1, 256>}, {pipeline_mode = #tpu.pipeline_mode<synchronous>, transform_indices = @transform_10, window_bounds = array<i64: 1, 128>}, {pipeline_mode = #tpu.pipeline_mode<synchronous>, transform_indices = @transform_11, window_bounds = array<i64: 1, 64>}, {pipeline_mode = #tpu.pipeline_mode<synchronous>, transform_indices = @transform_12, window_bounds = array<i64: 4, 2>}, {pipeline_mode = #tpu.pipeline_mode<synchronous>, transform_indices = @transform_13, window_bounds = array<i64: 8, 4>}, {pipeline_mode = #tpu.pipeline_mode<synchronous>, transform_indices = @transform_14, window_bounds = array<i64: 16, 8>}, {pipeline_mode = #tpu.pipeline_mode<synchronous>, transform_indices = @transform_15, window_bounds = array<i64: 64, 128>}, {pipeline_mode = #tpu.pipeline_mode<synchronous>, transform_indices = @transform_16, window_bounds = array<i64: 128, 256>}, {pipeline_mode = #tpu.pipeline_mode<synchronous>, transform_indices = @transform_17, window_bounds = array<i64: 256, 512>}, {pipeline_mode = #tpu.pipeline_mode<synchronous>, transform_indices = @transform_18, window_bounds = array<i64: 3, 16, 16>}, {pipeline_mode = #tpu.pipeline_mode<synchronous>, transform_indices = @transform_19, window_bounds = array<i64: 3, 512, 512>}, {pipeline_mode = #tpu.pipeline_mode<synchronous>, transform_indices = @transform_20, window_bounds = array<i64: 1, 512>}, {transform_indices = @transform_21, window_bounds = array<i64: 1, 16, 512>}]} {
    %c0 = arith.constant 0 : index
    %c0_0 = arith.constant 0 : index
    %c0_1 = arith.constant 0 : index
    %0 = vector.load %arg4[%c0, %c0_0, %c0_1] : memref<1x2x64xf32, #tpu.memory_space<vmem>>, vector<1x2x64xf32>
    %1 = vector.shape_cast %0 : vector<1x2x64xf32> to vector<2x64xf32>
    %c0_2 = arith.constant 0 : index
    %c0_3 = arith.constant 0 : index
    %2 = vector.load %arg8[%c0_2, %c0_3] : memref<64x64xf32, #tpu.memory_space<vmem>>, vector<64x64xf32>
    %cst = arith.constant dense<0.000000e+00> : vector<2x64xf32>
    %3 = tpu.matmul %1, %2, %cst {dimension_numbers = #tpu.dot_dimension_numbers<[1], [0], [0], [1], [0, 0, 1, 1], [], []>} : vector<2x64xf32>, vector<64x64xf32>, vector<2x64xf32> -> vector<2x64xf32>
    %c0_4 = arith.constant 0 : index
    %c0_5 = arith.constant 0 : index
    %4 = vector.load %arg12[%c0_4, %c0_5] : memref<1x64xf32, #tpu.memory_space<vmem>>, vector<1x64xf32>
    %5 = vector.broadcast %4 : vector<1x64xf32> to vector<2x64xf32>
    %6 = arith.addf %3, %5 : vector<2x64xf32>
    %c0_6 = arith.constant 0 : index
    %c0_7 = arith.constant 0 : index
    %7 = vector.load %arg13[%c0_6, %c0_7] : memref<4x2xf32, #tpu.memory_space<vmem>>, vector<4x2xf32>
    %c0_8 = arith.constant 0 : index
    %c0_9 = arith.constant 0 : index
    %8 = vector.load %arg16[%c0_8, %c0_9] : memref<64x128xf32, #tpu.memory_space<vmem>>, vector<64x128xf32>
    %cst_10 = arith.constant dense<0.000000e+00> : vector<2x128xf32>
    %9 = tpu.matmul %6, %8, %cst_10 {dimension_numbers = #tpu.dot_dimension_numbers<[1], [0], [0], [1], [0, 0, 1, 1], [], []>} : vector<2x64xf32>, vector<64x128xf32>, vector<2x128xf32> -> vector<2x128xf32>
    %cst_11 = arith.constant dense<0.000000e+00> : vector<4x128xf32>
    %10 = tpu.matmul %7, %9, %cst_11 {dimension_numbers = #tpu.dot_dimension_numbers<[1], [0], [0], [1], [0, 0, 1, 1], [], []>} : vector<4x2xf32>, vector<2x128xf32>, vector<4x128xf32> -> vector<4x128xf32>
    %c0_12 = arith.constant 0 : index
    %c0_13 = arith.constant 0 : index
    %c0_14 = arith.constant 0 : index
    %11 = vector.load %arg3[%c0_12, %c0_13, %c0_14] : memref<1x4x64xf32, #tpu.memory_space<vmem>>, vector<1x4x64xf32>
    %12 = vector.shape_cast %11 : vector<1x4x64xf32> to vector<4x64xf32>
    %c0_15 = arith.constant 0 : index
    %c0_16 = arith.constant 0 : index
    %13 = vector.load %arg7[%c0_15, %c0_16] : memref<64x128xf32, #tpu.memory_space<vmem>>, vector<64x128xf32>
    %cst_17 = arith.constant dense<0.000000e+00> : vector<4x128xf32>
    %14 = tpu.matmul %12, %13, %cst_17 {dimension_numbers = #tpu.dot_dimension_numbers<[1], [0], [0], [1], [0, 0, 1, 1], [], []>} : vector<4x64xf32>, vector<64x128xf32>, vector<4x128xf32> -> vector<4x128xf32>
    %15 = arith.addf %10, %14 : vector<4x128xf32>
    %c0_18 = arith.constant 0 : index
    %c0_19 = arith.constant 0 : index
    %16 = vector.load %arg11[%c0_18, %c0_19] : memref<1x128xf32, #tpu.memory_space<vmem>>, vector<1x128xf32>
    %17 = vector.broadcast %16 : vector<1x128xf32> to vector<4x128xf32>
    %18 = arith.addf %15, %17 : vector<4x128xf32>
    %c0_20 = arith.constant 0 : index
    %c0_21 = arith.constant 0 : index
    %19 = vector.load %arg14[%c0_20, %c0_21] : memref<8x4xf32, #tpu.memory_space<vmem>>, vector<8x4xf32>
    %c0_22 = arith.constant 0 : index
    %c0_23 = arith.constant 0 : index
    %20 = vector.load %arg17[%c0_22, %c0_23] : memref<128x256xf32, #tpu.memory_space<vmem>>, vector<128x256xf32>
    %cst_24 = arith.constant dense<0.000000e+00> : vector<4x256xf32>
    %21 = tpu.matmul %18, %20, %cst_24 {dimension_numbers = #tpu.dot_dimension_numbers<[1], [0], [0], [1], [0, 0, 1, 1], [], []>} : vector<4x128xf32>, vector<128x256xf32>, vector<4x256xf32> -> vector<4x256xf32>
    %cst_25 = arith.constant dense<0.000000e+00> : vector<8x256xf32>
    %22 = tpu.matmul %19, %21, %cst_25 {dimension_numbers = #tpu.dot_dimension_numbers<[1], [0], [0], [1], [0, 0, 1, 1], [], []>} : vector<8x4xf32>, vector<4x256xf32>, vector<8x256xf32> -> vector<8x256xf32>
    %c0_26 = arith.constant 0 : index
    %c0_27 = arith.constant 0 : index
    %c0_28 = arith.constant 0 : index
    %23 = vector.load %arg2[%c0_26, %c0_27, %c0_28] : memref<1x8x64xf32, #tpu.memory_space<vmem>>, vector<1x8x64xf32>
    %24 = vector.shape_cast %23 : vector<1x8x64xf32> to vector<8x64xf32>
    %c0_29 = arith.constant 0 : index
    %c0_30 = arith.constant 0 : index
    %25 = vector.load %arg6[%c0_29, %c0_30] : memref<64x256xf32, #tpu.memory_space<vmem>>, vector<64x256xf32>
    %cst_31 = arith.constant dense<0.000000e+00> : vector<8x256xf32>
    %26 = tpu.matmul %24, %25, %cst_31 {dimension_numbers = #tpu.dot_dimension_numbers<[1], [0], [0], [1], [0, 0, 1, 1], [], []>} : vector<8x64xf32>, vector<64x256xf32>, vector<8x256xf32> -> vector<8x256xf32>
    %27 = arith.addf %22, %26 : vector<8x256xf32>
    %c0_32 = arith.constant 0 : index
    %c0_33 = arith.constant 0 : index
    %28 = vector.load %arg10[%c0_32, %c0_33] : memref<1x256xf32, #tpu.memory_space<vmem>>, vector<1x256xf32>
    %29 = vector.broadcast %28 : vector<1x256xf32> to vector<8x256xf32>
    %30 = arith.addf %27, %29 : vector<8x256xf32>
    %c0_34 = arith.constant 0 : index
    %c0_35 = arith.constant 0 : index
    %31 = vector.load %arg15[%c0_34, %c0_35] : memref<16x8xf32, #tpu.memory_space<vmem>>, vector<16x8xf32>
    %c0_36 = arith.constant 0 : index
    %c0_37 = arith.constant 0 : index
    %32 = vector.load %arg18[%c0_36, %c0_37] : memref<256x512xf32, #tpu.memory_space<vmem>>, vector<256x512xf32>
    %cst_38 = arith.constant dense<0.000000e+00> : vector<8x512xf32>
    %33 = tpu.matmul %30, %32, %cst_38 {dimension_numbers = #tpu.dot_dimension_numbers<[1], [0], [0], [1], [0, 0, 1, 1], [], []>} : vector<8x256xf32>, vector<256x512xf32>, vector<8x512xf32> -> vector<8x512xf32>
    %cst_39 = arith.constant dense<0.000000e+00> : vector<16x512xf32>
    %34 = tpu.matmul %31, %33, %cst_39 {dimension_numbers = #tpu.dot_dimension_numbers<[1], [0], [0], [1], [0, 0, 1, 1], [], []>} : vector<16x8xf32>, vector<8x512xf32>, vector<16x512xf32> -> vector<16x512xf32>
    %c0_40 = arith.constant 0 : index
    %c0_41 = arith.constant 0 : index
    %c0_42 = arith.constant 0 : index
    %35 = vector.load %arg1[%c0_40, %c0_41, %c0_42] : memref<1x16x64xf32, #tpu.memory_space<vmem>>, vector<1x16x64xf32>
    %36 = vector.shape_cast %35 : vector<1x16x64xf32> to vector<16x64xf32>
    %c0_43 = arith.constant 0 : index
    %c0_44 = arith.constant 0 : index
    %37 = vector.load %arg5[%c0_43, %c0_44] : memref<64x512xf32, #tpu.memory_space<vmem>>, vector<64x512xf32>
    %cst_45 = arith.constant dense<0.000000e+00> : vector<16x512xf32>
    %38 = tpu.matmul %36, %37, %cst_45 {dimension_numbers = #tpu.dot_dimension_numbers<[1], [0], [0], [1], [0, 0, 1, 1], [], []>} : vector<16x64xf32>, vector<64x512xf32>, vector<16x512xf32> -> vector<16x512xf32>
    %39 = arith.addf %34, %38 : vector<16x512xf32>
    %c0_46 = arith.constant 0 : index
    %c0_47 = arith.constant 0 : index
    %40 = vector.load %arg9[%c0_46, %c0_47] : memref<1x512xf32, #tpu.memory_space<vmem>>, vector<1x512xf32>
    %41 = vector.broadcast %40 : vector<1x512xf32> to vector<16x512xf32>
    %42 = arith.addf %39, %41 : vector<16x512xf32>
    %c0_48 = arith.constant 0 : index
    %c0_49 = arith.constant 0 : index
    %43 = vector.load %arg21[%c0_48, %c0_49] : memref<1x512xf32, #tpu.memory_space<vmem>>, vector<1x512xf32>
    %44 = vector.shape_cast %43 : vector<1x512xf32> to vector<1x512xf32>
    %45 = vector.broadcast %44 : vector<1x512xf32> to vector<16x512xf32>
    %c0_50 = arith.constant 0 : index
    %c0_51 = arith.constant 0 : index
    %c0_52 = arith.constant 0 : index
    %46 = vector.load %arg19[%c0_50, %c0_51, %c0_52] : memref<3x16x16xf32, #tpu.memory_space<vmem>>, vector<1x16x16xf32>
    %47 = vector.shape_cast %46 : vector<1x16x16xf32> to vector<16x16xf32>
    %c0_53 = arith.constant 0 : index
    %c0_54 = arith.constant 0 : index
    %c0_55 = arith.constant 0 : index
    %48 = vector.load %arg20[%c0_53, %c0_54, %c0_55] : memref<3x512x512xf32, #tpu.memory_space<vmem>>, vector<1x512x512xf32>
    %49 = vector.shape_cast %48 : vector<1x512x512xf32> to vector<512x512xf32>
    %cst_56 = arith.constant dense<0.000000e+00> : vector<16x512xf32>
    %50 = tpu.matmul %42, %49, %cst_56 {dimension_numbers = #tpu.dot_dimension_numbers<[1], [0], [0], [1], [0, 0, 1, 1], [], []>} : vector<16x512xf32>, vector<512x512xf32>, vector<16x512xf32> -> vector<16x512xf32>
    %cst_57 = arith.constant dense<0.000000e+00> : vector<16x512xf32>
    %51 = tpu.matmul %47, %50, %cst_57 {dimension_numbers = #tpu.dot_dimension_numbers<[1], [0], [0], [1], [0, 0, 1, 1], [], []>} : vector<16x16xf32>, vector<16x512xf32>, vector<16x512xf32> -> vector<16x512xf32>
    %52 = arith.addf %45, %51 : vector<16x512xf32>
    %c1 = arith.constant 1 : index
    %c0_58 = arith.constant 0 : index
    %c0_59 = arith.constant 0 : index
    %53 = vector.load %arg19[%c1, %c0_58, %c0_59] : memref<3x16x16xf32, #tpu.memory_space<vmem>>, vector<1x16x16xf32>
    %54 = vector.shape_cast %53 : vector<1x16x16xf32> to vector<16x16xf32>
    %c1_60 = arith.constant 1 : index
    %c0_61 = arith.constant 0 : index
    %c0_62 = arith.constant 0 : index
    %55 = vector.load %arg20[%c1_60, %c0_61, %c0_62] : memref<3x512x512xf32, #tpu.memory_space<vmem>>, vector<1x512x512xf32>
    %56 = vector.shape_cast %55 : vector<1x512x512xf32> to vector<512x512xf32>
    %cst_63 = arith.constant dense<0.000000e+00> : vector<16x512xf32>
    %57 = tpu.matmul %42, %56, %cst_63 {dimension_numbers = #tpu.dot_dimension_numbers<[1], [0], [0], [1], [0, 0, 1, 1], [], []>} : vector<16x512xf32>, vector<512x512xf32>, vector<16x512xf32> -> vector<16x512xf32>
    %cst_64 = arith.constant dense<0.000000e+00> : vector<16x512xf32>
    %58 = tpu.matmul %54, %57, %cst_64 {dimension_numbers = #tpu.dot_dimension_numbers<[1], [0], [0], [1], [0, 0, 1, 1], [], []>} : vector<16x16xf32>, vector<16x512xf32>, vector<16x512xf32> -> vector<16x512xf32>
    %59 = arith.addf %52, %58 : vector<16x512xf32>
    %c2 = arith.constant 2 : index
    %c0_65 = arith.constant 0 : index
    %c0_66 = arith.constant 0 : index
    %60 = vector.load %arg19[%c2, %c0_65, %c0_66] : memref<3x16x16xf32, #tpu.memory_space<vmem>>, vector<1x16x16xf32>
    %61 = vector.shape_cast %60 : vector<1x16x16xf32> to vector<16x16xf32>
    %c2_67 = arith.constant 2 : index
    %c0_68 = arith.constant 0 : index
    %c0_69 = arith.constant 0 : index
    %62 = vector.load %arg20[%c2_67, %c0_68, %c0_69] : memref<3x512x512xf32, #tpu.memory_space<vmem>>, vector<1x512x512xf32>
    %63 = vector.shape_cast %62 : vector<1x512x512xf32> to vector<512x512xf32>
    %cst_70 = arith.constant dense<0.000000e+00> : vector<16x512xf32>
    %64 = tpu.matmul %42, %63, %cst_70 {dimension_numbers = #tpu.dot_dimension_numbers<[1], [0], [0], [1], [0, 0, 1, 1], [], []>} : vector<16x512xf32>, vector<512x512xf32>, vector<16x512xf32> -> vector<16x512xf32>
    %cst_71 = arith.constant dense<0.000000e+00> : vector<16x512xf32>
    %65 = tpu.matmul %61, %64, %cst_71 {dimension_numbers = #tpu.dot_dimension_numbers<[1], [0], [0], [1], [0, 0, 1, 1], [], []>} : vector<16x16xf32>, vector<16x512xf32>, vector<16x512xf32> -> vector<16x512xf32>
    %66 = arith.addf %59, %65 : vector<16x512xf32>
    %c0_72 = arith.constant 0 : index
    %c0_73 = arith.constant 0 : index
    %c0_74 = arith.constant 0 : index
    %67 = vector.load %arg22[%c0_72, %c0_73, %c0_74] : memref<1x16x512xf32, #tpu.memory_space<vmem>>, vector<1x16x512xf32>
    %68 = vector.shape_cast %67 : vector<1x16x512xf32> to vector<16x512xf32>
    %69 = vector.shape_cast %66 : vector<16x512xf32> to vector<1x16x512xf32>
    tpu.vector_store %arg22[%c0_72, %c0_73, %c0_74], %69 {strides = array<i32>} : memref<1x16x512xf32, #tpu.memory_space<vmem>>, vector<1x16x512xf32>,
    return
  }
  func.func @transform_0(%arg0: i32) -> (i32, i32, i32) {
    %c0_i32 = arith.constant 0 : i32
    %c0_i32_0 = arith.constant 0 : i32
    %c0_i32_1 = arith.constant 0 : i32
    return %arg0, %c0_i32, %c0_i32_0 : i32, i32, i32
  }
  func.func @transform_1(%arg0: i32) -> (i32, i32, i32) {
    %c0_i32 = arith.constant 0 : i32
    %c0_i32_0 = arith.constant 0 : i32
    %c0_i32_1 = arith.constant 0 : i32
    return %arg0, %c0_i32, %c0_i32_0 : i32, i32, i32
  }
  func.func @transform_2(%arg0: i32) -> (i32, i32, i32) {
    %c0_i32 = arith.constant 0 : i32
    %c0_i32_0 = arith.constant 0 : i32
    %c0_i32_1 = arith.constant 0 : i32
    return %arg0, %c0_i32, %c0_i32_0 : i32, i32, i32
  }
  func.func @transform_3(%arg0: i32) -> (i32, i32, i32) {
    %c0_i32 = arith.constant 0 : i32
    %c0_i32_0 = arith.constant 0 : i32
    %c0_i32_1 = arith.constant 0 : i32
    return %arg0, %c0_i32, %c0_i32_0 : i32, i32, i32
  }
  func.func @transform_4(%arg0: i32) -> (i32, i32) {
    %c0_i32 = arith.constant 0 : i32
    %c0_i32_0 = arith.constant 0 : i32
    %c0_i32_1 = arith.constant 0 : i32
    return %c0_i32, %c0_i32_0 : i32, i32
  }
  func.func @transform_5(%arg0: i32) -> (i32, i32) {
    %c0_i32 = arith.constant 0 : i32
    %c0_i32_0 = arith.constant 0 : i32
    %c0_i32_1 = arith.constant 0 : i32
    return %c0_i32, %c0_i32_0 : i32, i32
  }
  func.func @transform_6(%arg0: i32) -> (i32, i32) {
    %c0_i32 = arith.constant 0 : i32
    %c0_i32_0 = arith.constant 0 : i32
    %c0_i32_1 = arith.constant 0 : i32
    return %c0_i32, %c0_i32_0 : i32, i32
  }
  func.func @transform_7(%arg0: i32) -> (i32, i32) {
    %c0_i32 = arith.constant 0 : i32
    %c0_i32_0 = arith.constant 0 : i32
    %c0_i32_1 = arith.constant 0 : i32
    return %c0_i32, %c0_i32_0 : i32, i32
  }
  func.func @transform_8(%arg0: i32) -> (i32, i32) {
    %c0_i32 = arith.constant 0 : i32
    %c0_i32_0 = arith.constant 0 : i32
    %c0_i32_1 = arith.constant 0 : i32
    return %c0_i32, %c0_i32_0 : i32, i32
  }
  func.func @transform_9(%arg0: i32) -> (i32, i32) {
    %c0_i32 = arith.constant 0 : i32
    %c0_i32_0 = arith.constant 0 : i32
    %c0_i32_1 = arith.constant 0 : i32
    return %c0_i32, %c0_i32_0 : i32, i32
  }
  func.func @transform_10(%arg0: i32) -> (i32, i32) {
    %c0_i32 = arith.constant 0 : i32
    %c0_i32_0 = arith.constant 0 : i32
    %c0_i32_1 = arith.constant 0 : i32
    return %c0_i32, %c0_i32_0 : i32, i32
  }
  func.func @transform_11(%arg0: i32) -> (i32, i32) {
    %c0_i32 = arith.constant 0 : i32
    %c0_i32_0 = arith.constant 0 : i32
    %c0_i32_1 = arith.constant 0 : i32
    return %c0_i32, %c0_i32_0 : i32, i32
  }
  func.func @transform_12(%arg0: i32) -> (i32, i32) {
    %c0_i32 = arith.constant 0 : i32
    %c0_i32_0 = arith.constant 0 : i32
    %c0_i32_1 = arith.constant 0 : i32
    return %c0_i32, %c0_i32_0 : i32, i32
  }
  func.func @transform_13(%arg0: i32) -> (i32, i32) {
    %c0_i32 = arith.constant 0 : i32
    %c0_i32_0 = arith.constant 0 : i32
    %c0_i32_1 = arith.constant 0 : i32
    return %c0_i32, %c0_i32_0 : i32, i32
  }
  func.func @transform_14(%arg0: i32) -> (i32, i32) {
    %c0_i32 = arith.constant 0 : i32
    %c0_i32_0 = arith.constant 0 : i32
    %c0_i32_1 = arith.constant 0 : i32
    return %c0_i32, %c0_i32_0 : i32, i32
  }
  func.func @transform_15(%arg0: i32) -> (i32, i32) {
    %c0_i32 = arith.constant 0 : i32
    %c0_i32_0 = arith.constant 0 : i32
    %c0_i32_1 = arith.constant 0 : i32
    return %c0_i32, %c0_i32_0 : i32, i32
  }
  func.func @transform_16(%arg0: i32) -> (i32, i32) {
    %c0_i32 = arith.constant 0 : i32
    %c0_i32_0 = arith.constant 0 : i32
    %c0_i32_1 = arith.constant 0 : i32
    return %c0_i32, %c0_i32_0 : i32, i32
  }
  func.func @transform_17(%arg0: i32) -> (i32, i32) {
    %c0_i32 = arith.constant 0 : i32
    %c0_i32_0 = arith.constant 0 : i32
    %c0_i32_1 = arith.constant 0 : i32
    return %c0_i32, %c0_i32_0 : i32, i32
  }
  func.func @transform_18(%arg0: i32) -> (i32, i32, i32) {
    %c0_i32 = arith.constant 0 : i32
    %c0_i32_0 = arith.constant 0 : i32
    %c0_i32_1 = arith.constant 0 : i32
    %c0_i32_2 = arith.constant 0 : i32
    return %c0_i32, %c0_i32_0, %c0_i32_1 : i32, i32, i32
  }
  func.func @transform_19(%arg0: i32) -> (i32, i32, i32) {
    %c0_i32 = arith.constant 0 : i32
    %c0_i32_0 = arith.constant 0 : i32
    %c0_i32_1 = arith.constant 0 : i32
    %c0_i32_2 = arith.constant 0 : i32
    return %c0_i32, %c0_i32_0, %c0_i32_1 : i32, i32, i32
  }
  func.func @transform_20(%arg0: i32) -> (i32, i32) {
    %c0_i32 = arith.constant 0 : i32
    %c0_i32_0 = arith.constant 0 : i32
    %c0_i32_1 = arith.constant 0 : i32
    return %c0_i32, %c0_i32_0 : i32, i32
  }
  func.func @transform_21(%arg0: i32) -> (i32, i32, i32) {
    %c0_i32 = arith.constant 0 : i32
    %c0_i32_0 = arith.constant 0 : i32
    %c0_i32_1 = arith.constant 0 : i32
    return %arg0, %c0_i32, %c0_i32_0 : i32, i32, i32
  }
}

</mosaic_0001>

<llo_original>
// kernel: tpu_custom_call.1
$region0: #{tpu_custom_call.1}
  #allocation0 [shape = 'u32[]', space=smem, size = 0x4, offset = 0x4, fixed_abs, tag = 'smem constant byte address 0x4 - core index']
  #allocation1 [shape = 'u32[144,128]{1,0:T(1,128)}', space=vmem, size = 0x12000, scoped, tag = 'internal scratch']
  %s0 = inlined_call_operand.hbm [shape: f32[2,16,64], index: 0, kind: input, shape index: {}]
  %s1 = inlined_call_operand.hbm [shape: f32[2,8,64], index: 1, kind: input, shape index: {}]
  %s2 = inlined_call_operand.hbm [shape: f32[2,4,64], index: 2, kind: input, shape index: {}]
  %s3 = inlined_call_operand.hbm [shape: f32[2,2,64], index: 3, kind: input, shape index: {}]
  %s4 = inlined_call_operand.hbm [shape: f32[64,512], index: 4, kind: input, shape index: {}]
  %s5 = inlined_call_operand.hbm [shape: f32[64,256], index: 5, kind: input, shape index: {}]
  %s6 = inlined_call_operand.hbm [shape: f32[64,128], index: 6, kind: input, shape index: {}]
  %s7 = inlined_call_operand.hbm [shape: f32[64,64], index: 7, kind: input, shape index: {}]
  %s8 = inlined_call_operand.hbm [shape: f32[1,512], index: 8, kind: input, shape index: {}]
  %s9 = inlined_call_operand.hbm [shape: f32[1,256], index: 9, kind: input, shape index: {}]
  %s10 = inlined_call_operand.hbm [shape: f32[1,128], index: 10, kind: input, shape index: {}]
  %s11 = inlined_call_operand.hbm [shape: f32[1,64], index: 11, kind: input, shape index: {}]
  %s12 = inlined_call_operand.vmem [shape: f32[4,2], index: 12, kind: input, shape index: {}]
  %s13 = inlined_call_operand.vmem [shape: f32[8,4], index: 13, kind: input, shape index: {}]
  %s14 = inlined_call_operand.vmem [shape: f32[16,8], index: 14, kind: input, shape index: {}]
  %s15 = inlined_call_operand.hbm [shape: f32[64,128], index: 15, kind: input, shape index: {}]
  %s16 = inlined_call_operand.hbm [shape: f32[128,256], index: 16, kind: input, shape index: {}]
  %s17 = inlined_call_operand.hbm [shape: f32[256,512], index: 17, kind: input, shape index: {}]
  %s18 = inlined_call_operand.hbm [shape: f32[3,16,16], index: 18, kind: input, shape index: {}]
  %s19 = inlined_call_operand.hbm [shape: f32[3,512,512], index: 19, kind: input, shape index: {}]
  %s20 = inlined_call_operand.hbm [shape: f32[1,512], index: 20, kind: input, shape index: {}]
  %s21 = inlined_call_operand.hbm [shape: f32[2,16,512], index: 21, kind: output, shape index: {}]
  %s22 = sld [smem:[#allocation0]]
  $region189: #{tpu_custom_call.1} parent=0
    _
  %s24 = ssub.s32 1, %s22
  %s25 = scalar_select 0, %s24, %s22
  $region1: #{tpu_custom_call.1} parent=0
    #allocation2 [shape = 'u8[16384]{0}', space=vmem, size = 0x4000, scoped, tag = 'input window, operand 0']
    #allocation3 [shape = 's32[2]{0}', space=sflag, size = 0x8, scoped, tag = 'scoped memory for tpu_custom_call.1']
    #allocation4 [shape = 's32[2]{0}', space=sflag, size = 0x8, scoped, tag = 'scoped memory for tpu_custom_call.1']
    #allocation5 [shape = 'u8[8192]{0}', space=vmem, size = 0x2000, scoped, tag = 'input window, operand 1']
    #allocation6 [shape = 's32[2]{0}', space=sflag, size = 0x8, scoped, tag = 'scoped memory for tpu_custom_call.1']
    #allocation7 [shape = 'u8[4096]{0}', space=vmem, size = 0x1000, scoped, tag = 'input window, operand 2']
    #allocation8 [shape = 'u8[2048]{0}', space=vmem, size = 0x800, scoped, tag = 'input window, operand 3']
    #allocation9 [shape = 's32[2]{0}', space=sflag, size = 0x8, scoped, tag = 'scoped memory for tpu_custom_call.1']
    #allocation10 [shape = 'u8[131072]{0}', space=vmem, size = 0x20000, scoped, tag = 'input window, operand 4, single buffered']
    #allocation11 [shape = 'u8[65536]{0}', space=vmem, size = 0x10000, scoped, tag = 'input window, operand 5, single buffered']
    #allocation12 [shape = 's32[1]{0}', space=sflag, size = 0x4, scoped, tag = 'scoped memory for tpu_custom_call.1']
    #allocation13 [shape = 'u8[32768]{0}', space=vmem, size = 0x8000, scoped, tag = 'input window, operand 6, single buffered']
    #allocation14 [shape = 'u8[32768]{0}', space=vmem, size = 0x8000, scoped, tag = 'input window, operand 7, single buffered']
    #allocation15 [shape = 's32[1]{0}', space=sflag, size = 0x4, scoped, tag = 'scoped memory for tpu_custom_call.1']
    #allocation16 [shape = 'u8[2048]{0}', space=vmem, size = 0x800, scoped, tag = 'input window, operand 8, single buffered']
    #allocation17 [shape = 'u8[1024]{0}', space=vmem, size = 0x400, scoped, tag = 'input window, operand 9, single buffered']
    #allocation18 [shape = 's32[1]{0}', space=sflag, size = 0x4, scoped, tag = 'scoped memory for tpu_custom_call.1']
    #allocation19 [shape = 'u8[512]{0}', space=vmem, size = 0x400, scoped, tag = 'input window, operand 10, single buffered']
    #allocation20 [shape = 'u8[512]{0}', space=vmem, size = 0x400, scoped, tag = 'input window, operand 11, single buffered']
    #allocation21 [shape = 's32[1]{0}', space=sflag, size = 0x4, scoped, tag = 'scoped memory for tpu_custom_call.1']
    #allocation22 [shape = 'u8[32768]{0}', space=vmem, size = 0x8000, scoped, tag = 'input window, operand 15, single buffered']
    #allocation23 [shape = 'u8[131072]{0}', space=vmem, size = 0x20000, scoped, tag = 'input window, operand 16, single buffered']
    #allocation24 [shape = 's32[1]{0}', space=sflag, size = 0x4, scoped, tag = 'scoped memory for tpu_custom_call.1']
    #allocation25 [shape = 'u8[524288]{0}', space=vmem, size = 0x80000, scoped, tag = 'input window, operand 17, single buffered']
    #allocation26 [shape = 'u8[24576]{0}', space=vmem, size = 0x6000, scoped, tag = 'input window, operand 18, single buffered']
    #allocation27 [shape = 's32[1]{0}', space=sflag, size = 0x4, scoped, tag = 'scoped memory for tpu_custom_call.1']
    #allocation28 [shape = 'u8[3145728]{0}', space=vmem, size = 0x300000, scoped, tag = 'input window, operand 19, single buffered']
    #allocation29 [shape = 'u8[2048]{0}', space=vmem, size = 0x800, scoped, tag = 'input window, operand 20, single buffered']
    #allocation30 [shape = 's32[1]{0}', space=sflag, size = 0x4, scoped, tag = 'scoped memory for tpu_custom_call.1']
    #allocation31 [shape = 'u8[65536]{0}', space=vmem, size = 0x10000, scoped, tag = 'output window, operand 0']
    %26 = vsyncpa [#allocation3], 0
    %s27 = scalar_lea.sflag [#allocation3], 1
    %28 = vsyncpa %s27, 0
    %29 = vsyncpa [#allocation6], 0
    %s30 = scalar_lea.sflag [#allocation6], 1
    %31 = vsyncpa %s30, 0
    %32 = vsyncpa [#allocation9], 0
    %s33 = scalar_lea.sflag [#allocation9], 1
    %34 = vsyncpa %s33, 0
    %35 = vsyncpa [#allocation12], 0
    %36 = vsyncpa [#allocation15], 0
    %37 = vsyncpa [#allocation18], 0
    %38 = vsyncpa [#allocation21], 0
    %39 = vsyncpa [#allocation24], 0
    %40 = vsyncpa [#allocation27], 0
    %41 = vsyncpa [#allocation30], 0
    %42 = vsyncpa [#allocation4], 0
    %s43 = scalar_lea.sflag [#allocation4], 1
    %44 = vsyncpa %s43, 0
    loop: start=0, step=1, limit=4
    $region2: #{tpu_custom_call.1} parent=1 // loop_pre_header
      _
    $region3: #{tpu_custom_call.1} parent=1 // loop_header
      %s46 = sphi 0, %s50
      %p47 = scmp.ge.s32.totalorder %s46, 4
      %s56 = sphi 0, %s58
      %s59 = sphi 0, %s56
      %s60 = sphi 0, %s59
      %s76 = sphi 0, %s60
      %s82 = sphi 0, %s84
      %s85 = sphi 0, %s82
      %s86 = sphi 0, %s85
      %s102 = sphi 0, %s86
      %s108 = sphi 0, %s110
      %s111 = sphi 0, %s108
      %s112 = sphi 0, %s111
      %s128 = sphi 0, %s112
      %s134 = sphi 0, %s136
      %s137 = sphi 0, %s134
      %s138 = sphi 0, %s137
      %s154 = sphi 0, %s138
      %s158 = sphi 0, %s158
      %s160 = sphi 0, %s158
      %s161 = sphi 0, %s160
      %s175 = sphi 0, %s161
      %s179 = sphi 0, %s179
      %s181 = sphi 0, %s179
      %s182 = sphi 0, %s181
      %s196 = sphi 0, %s182
      %s200 = sphi 0, %s200
      %s202 = sphi 0, %s200
      %s203 = sphi 0, %s202
      %s217 = sphi 0, %s203
      %s221 = sphi 0, %s221
      %s223 = sphi 0, %s221
      %s224 = sphi 0, %s223
      %s238 = sphi 0, %s224
      %s242 = sphi 0, %s242
      %s244 = sphi 0, %s242
      %s245 = sphi 0, %s244
      %s259 = sphi 0, %s245
      %s263 = sphi 0, %s263
      %s265 = sphi 0, %s263
      %s266 = sphi 0, %s265
      %s280 = sphi 0, %s266
      %s284 = sphi 0, %s284
      %s286 = sphi 0, %s284
      %s287 = sphi 0, %s286
      %s301 = sphi 0, %s287
      %s305 = sphi 0, %s305
      %s307 = sphi 0, %s305
      %s308 = sphi 0, %s307
      %s322 = sphi 0, %s308
      %s326 = sphi 0, %s326
      %s328 = sphi 0, %s326
      %s329 = sphi 0, %s328
      %s343 = sphi 0, %s329
      %s347 = sphi 0, %s347
      %s349 = sphi 0, %s347
      %s350 = sphi 0, %s349
      %s364 = sphi 0, %s350
      %s368 = sphi 0, %s368
      %s370 = sphi 0, %s368
      %s371 = sphi 0, %s370
      %s385 = sphi 0, %s371
      %s389 = sphi 0, %s389
      %s391 = sphi 0, %s389
      %s392 = sphi 0, %s391
      %s406 = sphi 0, %s392
      %s410 = sphi 0, %s410
      %s412 = sphi 0, %s410
      %s413 = sphi 0, %s412
      %s427 = sphi 0, %s413
      %s431 = sphi 0, %s431
      %s433 = sphi 0, %s431
      %s434 = sphi 0, %s433
      %s448 = sphi 0, %s434
      %s452 = sphi 0, %s452
      %s454 = sphi 0, %s452
      %s455 = sphi 0, %s454
      %s469 = sphi 0, %s455
      %s473 = sphi 0, %s473
      %s475 = sphi 0, %s473
      %s476 = sphi 0, %s475
      %s490 = sphi 0, %s476
      %s494 = sphi 0, %s494
      %s496 = sphi 0, %s494
      %s497 = sphi 0, %s496
      %s511 = sphi 0, %s497
      %s517 = sphi 0, %s519
      %s520 = sphi 0, %s517
      %s521 = sphi 0, %s520
      %s537 = sphi 0, %s521
    $region4: #{tpu_custom_call.1} parent=1 // loop_header_branch
      %49 = sbr.rel (%p47) target = $region8
    $region5: #{tpu_custom_call.1} parent=1 // loop_body
      %s51 = ssub.s32 %s46, 1
      %s52 = ssub.s32 %s46, 2
      %s53 = sadd.s32 %s46, 1
      %s54 = ssub.s32 %s46, %s53
      %p55 = scmp.eq.s32.totalorder %s54, 0
      %s57 = sadd.s32 %s56, 1
      %s58 = scalar_select %p55, %s56, %s57
      %p61 = pneg %p55
      %p62 = scmp.eq.s32.totalorder %s46, 1
      %p63 = por %p61, %p62
      %p64 = scmp.ne.s32.totalorder %s56, %s59
      %p65 = scmp.eq.s32.totalorder %s46, 0
      %p66 = por %p64, %p65
      %p67 = scmp.ne.s32.totalorder %s56, %s59
      %p68 = scmp.eq.s32.totalorder %s51, 1
      %p69 = por %p67, %p68
      %p70 = scmp.ne.s32.totalorder %s59, %s60
      %p71 = scmp.eq.s32.totalorder %s51, 0
      %p72 = por %p70, %p71
      %p73 = scmp.ne.s32.totalorder %s59, %s60
      %p74 = scmp.eq.s32.totalorder %s52, 1
      %p75 = por %p73, %p74
      %p77 = scmp.ne.s32.totalorder %s60, %s76
      %p78 = scmp.eq.s32.totalorder %s52, 0
      %p79 = por %p77, %p78
      %s80 = ssub.s32 %s46, %s53
      %p81 = scmp.eq.s32.totalorder %s80, 0
      %s83 = sadd.s32 %s82, 1
      %s84 = scalar_select %p81, %s82, %s83
      %p87 = pneg %p81
      %p88 = scmp.eq.s32.totalorder %s46, 1
      %p89 = por %p87, %p88
      %p90 = scmp.ne.s32.totalorder %s82, %s85
      %p91 = scmp.eq.s32.totalorder %s46, 0
      %p92 = por %p90, %p91
      %p93 = scmp.ne.s32.totalorder %s82, %s85
      %p94 = scmp.eq.s32.totalorder %s51, 1
      %p95 = por %p93, %p94
      %p96 = scmp.ne.s32.totalorder %s85, %s86
      %p97 = scmp.eq.s32.totalorder %s51, 0
      %p98 = por %p96, %p97
      %p99 = scmp.ne.s32.totalorder %s85, %s86
      %p100 = scmp.eq.s32.totalorder %s52, 1
      %p101 = por %p99, %p100
      %p103 = scmp.ne.s32.totalorder %s86, %s102
      %p104 = scmp.eq.s32.totalorder %s52, 0
      %p105 = por %p103, %p104
      %s106 = ssub.s32 %s46, %s53
      %p107 = scmp.eq.s32.totalorder %s106, 0
      %s109 = sadd.s32 %s108, 1
      %s110 = scalar_select %p107, %s108, %s109
      %p113 = pneg %p107
      %p114 = scmp.eq.s32.totalorder %s46, 1
      %p115 = por %p113, %p114
      %p116 = scmp.ne.s32.totalorder %s108, %s111
      %p117 = scmp.eq.s32.totalorder %s46, 0
      %p118 = por %p116, %p117
      %p119 = scmp.ne.s32.totalorder %s108, %s111
      %p120 = scmp.eq.s32.totalorder %s51, 1
      %p121 = por %p119, %p120
      %p122 = scmp.ne.s32.totalorder %s111, %s112
      %p123 = scmp.eq.s32.totalorder %s51, 0
      %p124 = por %p122, %p123
      %p125 = scmp.ne.s32.totalorder %s111, %s112
      %p126 = scmp.eq.s32.totalorder %s52, 1
      %p127 = por %p125, %p126
      %p129 = scmp.ne.s32.totalorder %s112, %s128
      %p130 = scmp.eq.s32.totalorder %s52, 0
      %p131 = por %p129, %p130
      %s132 = ssub.s32 %s46, %s53
      %p133 = scmp.eq.s32.totalorder %s132, 0
      %s135 = sadd.s32 %s134, 1
      %s136 = scalar_select %p133, %s134, %s135
      %p139 = pneg %p133
      %p140 = scmp.eq.s32.totalorder %s46, 1
      %p141 = por %p139, %p140
      %p142 = scmp.ne.s32.totalorder %s134, %s137
      %p143 = scmp.eq.s32.totalorder %s46, 0
      %p144 = por %p142, %p143
      %p145 = scmp.ne.s32.totalorder %s134, %s137
      %p146 = scmp.eq.s32.totalorder %s51, 1
      %p147 = por %p145, %p146
      %p148 = scmp.ne.s32.totalorder %s137, %s138
      %p149 = scmp.eq.s32.totalorder %s51, 0
      %p150 = por %p148, %p149
      %p151 = scmp.ne.s32.totalorder %s137, %s138
      %p152 = scmp.eq.s32.totalorder %s52, 1
      %p153 = por %p151, %p152
      %p155 = scmp.ne.s32.totalorder %s138, %s154
      %p156 = scmp.eq.s32.totalorder %s52, 0
      %p157 = por %p155, %p156
      %s159 = sadd.s32 %s158, 1
      %p162 = scmp.eq.s32.totalorder %s46, 1
      %p163 = scmp.ne.s32.totalorder %s158, %s160
      %p164 = scmp.eq.s32.totalorder %s46, 0
      %p165 = por %p163, %p164
      %p166 = scmp.ne.s32.totalorder %s158, %s160
      %p167 = scmp.eq.s32.totalorder %s51, 1
      %p168 = por %p166, %p167
      %p169 = scmp.ne.s32.totalorder %s160, %s161
      %p170 = scmp.eq.s32.totalorder %s51, 0
      %p171 = por %p169, %p170
      %p172 = scmp.ne.s32.totalorder %s160, %s161
      %p173 = scmp.eq.s32.totalorder %s52, 1
      %p174 = por %p172, %p173
      %p176 = scmp.ne.s32.totalorder %s161, %s175
      %p177 = scmp.eq.s32.totalorder %s52, 0
      %p178 = por %p176, %p177
      %s180 = sadd.s32 %s179, 1
      %p183 = scmp.eq.s32.totalorder %s46, 1
      %p184 = scmp.ne.s32.totalorder %s179, %s181
      %p185 = scmp.eq.s32.totalorder %s46, 0
      %p186 = por %p184, %p185
      %p187 = scmp.ne.s32.totalorder %s179, %s181
      %p188 = scmp.eq.s32.totalorder %s51, 1
      %p189 = por %p187, %p188
      %p190 = scmp.ne.s32.totalorder %s181, %s182
      %p191 = scmp.eq.s32.totalorder %s51, 0
      %p192 = por %p190, %p191
      %p193 = scmp.ne.s32.totalorder %s181, %s182
      %p194 = scmp.eq.s32.totalorder %s52, 1
      %p195 = por %p193, %p194
      %p197 = scmp.ne.s32.totalorder %s182, %s196
      %p198 = scmp.eq.s32.totalorder %s52, 0
      %p199 = por %p197, %p198
      %s201 = sadd.s32 %s200, 1
      %p204 = scmp.eq.s32.totalorder %s46, 1
      %p205 = scmp.ne.s32.totalorder %s200, %s202
      %p206 = scmp.eq.s32.totalorder %s46, 0
      %p207 = por %p205, %p206
      %p208 = scmp.ne.s32.totalorder %s200, %s202
      %p209 = scmp.eq.s32.totalorder %s51, 1
      %p210 = por %p208, %p209
      %p211 = scmp.ne.s32.totalorder %s202, %s203
      %p212 = scmp.eq.s32.totalorder %s51, 0
      %p213 = por %p211, %p212
      %p214 = scmp.ne.s32.totalorder %s202, %s203
      %p215 = scmp.eq.s32.totalorder %s52, 1
      %p216 = por %p214, %p215
      %p218 = scmp.ne.s32.totalorder %s203, %s217
      %p219 = scmp.eq.s32.totalorder %s52, 0
      %p220 = por %p218, %p219
      %s222 = sadd.s32 %s221, 1
      %p225 = scmp.eq.s32.totalorder %s46, 1
      %p226 = scmp.ne.s32.totalorder %s221, %s223
      %p227 = scmp.eq.s32.totalorder %s46, 0
      %p228 = por %p226, %p227
      %p229 = scmp.ne.s32.totalorder %s221, %s223
      %p230 = scmp.eq.s32.totalorder %s51, 1
      %p231 = por %p229, %p230
      %p232 = scmp.ne.s32.totalorder %s223, %s224
      %p233 = scmp.eq.s32.totalorder %s51, 0
      %p234 = por %p232, %p233
      %p235 = scmp.ne.s32.totalorder %s223, %s224
      %p236 = scmp.eq.s32.totalorder %s52, 1
      %p237 = por %p235, %p236
      %p239 = scmp.ne.s32.totalorder %s224, %s238
      %p240 = scmp.eq.s32.totalorder %s52, 0
      %p241 = por %p239, %p240
      %s243 = sadd.s32 %s242, 1
      %p246 = scmp.eq.s32.totalorder %s46, 1
      %p247 = scmp.ne.s32.totalorder %s242, %s244
      %p248 = scmp.eq.s32.totalorder %s46, 0
      %p249 = por %p247, %p248
      %p250 = scmp.ne.s32.totalorder %s242, %s244
      %p251 = scmp.eq.s32.totalorder %s51, 1
      %p252 = por %p250, %p251
      %p253 = scmp.ne.s32.totalorder %s244, %s245
      %p254 = scmp.eq.s32.totalorder %s51, 0
      %p255 = por %p253, %p254
      %p256 = scmp.ne.s32.totalorder %s244, %s245
      %p257 = scmp.eq.s32.totalorder %s52, 1
      %p258 = por %p256, %p257
      %p260 = scmp.ne.s32.totalorder %s245, %s259
      %p261 = scmp.eq.s32.totalorder %s52, 0
      %p262 = por %p260, %p261
      %s264 = sadd.s32 %s263, 1
      %p267 = scmp.eq.s32.totalorder %s46, 1
      %p268 = scmp.ne.s32.totalorder %s263, %s265
      %p269 = scmp.eq.s32.totalorder %s46, 0
      %p270 = por %p268, %p269
      %p271 = scmp.ne.s32.totalorder %s263, %s265
      %p272 = scmp.eq.s32.totalorder %s51, 1
      %p273 = por %p271, %p272
      %p274 = scmp.ne.s32.totalorder %s265, %s266
      %p275 = scmp.eq.s32.totalorder %s51, 0
      %p276 = por %p274, %p275
      %p277 = scmp.ne.s32.totalorder %s265, %s266
      %p278 = scmp.eq.s32.totalorder %s52, 1
      %p279 = por %p277, %p278
      %p281 = scmp.ne.s32.totalorder %s266, %s280
      %p282 = scmp.eq.s32.totalorder %s52, 0
      %p283 = por %p281, %p282
      %s285 = sadd.s32 %s284, 1
      %p288 = scmp.eq.s32.totalorder %s46, 1
      %p289 = scmp.ne.s32.totalorder %s284, %s286
      %p290 = scmp.eq.s32.totalorder %s46, 0
      %p291 = por %p289, %p290
      %p292 = scmp.ne.s32.totalorder %s284, %s286
      %p293 = scmp.eq.s32.totalorder %s51, 1
      %p294 = por %p292, %p293
      %p295 = scmp.ne.s32.totalorder %s286, %s287
      %p296 = scmp.eq.s32.totalorder %s51, 0
      %p297 = por %p295, %p296
      %p298 = scmp.ne.s32.totalorder %s286, %s287
      %p299 = scmp.eq.s32.totalorder %s52, 1
      %p300 = por %p298, %p299
      %p302 = scmp.ne.s32.totalorder %s287, %s301
      %p303 = scmp.eq.s32.totalorder %s52, 0
      %p304 = por %p302, %p303
      %s306 = sadd.s32 %s305, 1
      %p309 = scmp.eq.s32.totalorder %s46, 1
      %p310 = scmp.ne.s32.totalorder %s305, %s307
      %p311 = scmp.eq.s32.totalorder %s46, 0
      %p312 = por %p310, %p311
      %p313 = scmp.ne.s32.totalorder %s305, %s307
      %p314 = scmp.eq.s32.totalorder %s51, 1
      %p315 = por %p313, %p314
      %p316 = scmp.ne.s32.totalorder %s307, %s308
      %p317 = scmp.eq.s32.totalorder %s51, 0
      %p318 = por %p316, %p317
      %p319 = scmp.ne.s32.totalorder %s307, %s308
      %p320 = scmp.eq.s32.totalorder %s52, 1
      %p321 = por %p319, %p320
      %p323 = scmp.ne.s32.totalorder %s308, %s322
      %p324 = scmp.eq.s32.totalorder %s52, 0
      %p325 = por %p323, %p324
      %s327 = sadd.s32 %s326, 1
      %p330 = scmp.eq.s32.totalorder %s46, 1
      %p331 = scmp.ne.s32.totalorder %s326, %s328
      %p332 = scmp.eq.s32.totalorder %s46, 0
      %p333 = por %p331, %p332
      %p334 = scmp.ne.s32.totalorder %s326, %s328
      %p335 = scmp.eq.s32.totalorder %s51, 1
      %p336 = por %p334, %p335
      %p337 = scmp.ne.s32.totalorder %s328, %s329
      %p338 = scmp.eq.s32.totalorder %s51, 0
      %p339 = por %p337, %p338
      %p340 = scmp.ne.s32.totalorder %s328, %s329
      %p341 = scmp.eq.s32.totalorder %s52, 1
      %p342 = por %p340, %p341
      %p344 = scmp.ne.s32.totalorder %s329, %s343
      %p345 = scmp.eq.s32.totalorder %s52, 0
      %p346 = por %p344, %p345
      %s348 = sadd.s32 %s347, 1
      %p351 = scmp.eq.s32.totalorder %s46, 1
      %p352 = scmp.ne.s32.totalorder %s347, %s349
      %p353 = scmp.eq.s32.totalorder %s46, 0
      %p354 = por %p352, %p353
      %p355 = scmp.ne.s32.totalorder %s347, %s349
      %p356 = scmp.eq.s32.totalorder %s51, 1
      %p357 = por %p355, %p356
      %p358 = scmp.ne.s32.totalorder %s349, %s350
      %p359 = scmp.eq.s32.totalorder %s51, 0
      %p360 = por %p358, %p359
      %p361 = scmp.ne.s32.totalorder %s349, %s350
      %p362 = scmp.eq.s32.totalorder %s52, 1
      %p363 = por %p361, %p362
      %p365 = scmp.ne.s32.totalorder %s350, %s364
      %p366 = scmp.eq.s32.totalorder %s52, 0
      %p367 = por %p365, %p366
      %s369 = sadd.s32 %s368, 1
      %p372 = scmp.eq.s32.totalorder %s46, 1
      %p373 = scmp.ne.s32.totalorder %s368, %s370
      %p374 = scmp.eq.s32.totalorder %s46, 0
      %p375 = por %p373, %p374
      %p376 = scmp.ne.s32.totalorder %s368, %s370
      %p377 = scmp.eq.s32.totalorder %s51, 1
      %p378 = por %p376, %p377
      %p379 = scmp.ne.s32.totalorder %s370, %s371
      %p380 = scmp.eq.s32.totalorder %s51, 0
      %p381 = por %p379, %p380
      %p382 = scmp.ne.s32.totalorder %s370, %s371
      %p383 = scmp.eq.s32.totalorder %s52, 1
      %p384 = por %p382, %p383
      %p386 = scmp.ne.s32.totalorder %s371, %s385
      %p387 = scmp.eq.s32.totalorder %s52, 0
      %p388 = por %p386, %p387
      %s390 = sadd.s32 %s389, 1
      %p393 = scmp.eq.s32.totalorder %s46, 1
      %p394 = scmp.ne.s32.totalorder %s389, %s391
      %p395 = scmp.eq.s32.totalorder %s46, 0
      %p396 = por %p394, %p395
      %p397 = scmp.ne.s32.totalorder %s389, %s391
      %p398 = scmp.eq.s32.totalorder %s51, 1
      %p399 = por %p397, %p398
      %p400 = scmp.ne.s32.totalorder %s391, %s392
      %p401 = scmp.eq.s32.totalorder %s51, 0
      %p402 = por %p400, %p401
      %p403 = scmp.ne.s32.totalorder %s391, %s392
      %p404 = scmp.eq.s32.totalorder %s52, 1
      %p405 = por %p403, %p404
      %p407 = scmp.ne.s32.totalorder %s392, %s406
      %p408 = scmp.eq.s32.totalorder %s52, 0
      %p409 = por %p407, %p408
      %s411 = sadd.s32 %s410, 1
      %p414 = scmp.eq.s32.totalorder %s46, 1
      %p415 = scmp.ne.s32.totalorder %s410, %s412
      %p416 = scmp.eq.s32.totalorder %s46, 0
      %p417 = por %p415, %p416
      %p418 = scmp.ne.s32.totalorder %s410, %s412
      %p419 = scmp.eq.s32.totalorder %s51, 1
      %p420 = por %p418, %p419
      %p421 = scmp.ne.s32.totalorder %s412, %s413
      %p422 = scmp.eq.s32.totalorder %s51, 0
      %p423 = por %p421, %p422
      %p424 = scmp.ne.s32.totalorder %s412, %s413
      %p425 = scmp.eq.s32.totalorder %s52, 1
      %p426 = por %p424, %p425
      %p428 = scmp.ne.s32.totalorder %s413, %s427
      %p429 = scmp.eq.s32.totalorder %s52, 0
      %p430 = por %p428, %p429
      %s432 = sadd.s32 %s431, 1
      %p435 = scmp.eq.s32.totalorder %s46, 1
      %p436 = scmp.ne.s32.totalorder %s431, %s433
      %p437 = scmp.eq.s32.totalorder %s46, 0
      %p438 = por %p436, %p437
      %p439 = scmp.ne.s32.totalorder %s431, %s433
      %p440 = scmp.eq.s32.totalorder %s51, 1
      %p441 = por %p439, %p440
      %p442 = scmp.ne.s32.totalorder %s433, %s434
      %p443 = scmp.eq.s32.totalorder %s51, 0
      %p444 = por %p442, %p443
      %p445 = scmp.ne.s32.totalorder %s433, %s434
      %p446 = scmp.eq.s32.totalorder %s52, 1
      %p447 = por %p445, %p446
      %p449 = scmp.ne.s32.totalorder %s434, %s448
      %p450 = scmp.eq.s32.totalorder %s52, 0
      %p451 = por %p449, %p450
      %s453 = sadd.s32 %s452, 1
      %p456 = scmp.eq.s32.totalorder %s46, 1
      %p457 = scmp.ne.s32.totalorder %s452, %s454
      %p458 = scmp.eq.s32.totalorder %s46, 0
      %p459 = por %p457, %p458
      %p460 = scmp.ne.s32.totalorder %s452, %s454
      %p461 = scmp.eq.s32.totalorder %s51, 1
      %p462 = por %p460, %p461
      %p463 = scmp.ne.s32.totalorder %s454, %s455
      %p464 = scmp.eq.s32.totalorder %s51, 0
      %p465 = por %p463, %p464
      %p466 = scmp.ne.s32.totalorder %s454, %s455
      %p467 = scmp.eq.s32.totalorder %s52, 1
      %p468 = por %p466, %p467
      %p470 = scmp.ne.s32.totalorder %s455, %s469
      %p471 = scmp.eq.s32.totalorder %s52, 0
      %p472 = por %p470, %p471
      %s474 = sadd.s32 %s473, 1
      %p477 = scmp.eq.s32.totalorder %s46, 1
      %p478 = scmp.ne.s32.totalorder %s473, %s475
      %p479 = scmp.eq.s32.totalorder %s46, 0
      %p480 = por %p478, %p479
      %p481 = scmp.ne.s32.totalorder %s473, %s475
      %p482 = scmp.eq.s32.totalorder %s51, 1
      %p483 = por %p481, %p482
      %p484 = scmp.ne.s32.totalorder %s475, %s476
      %p485 = scmp.eq.s32.totalorder %s51, 0
      %p486 = por %p484, %p485
      %p487 = scmp.ne.s32.totalorder %s475, %s476
      %p488 = scmp.eq.s32.totalorder %s52, 1
      %p489 = por %p487, %p488
      %p491 = scmp.ne.s32.totalorder %s476, %s490
      %p492 = scmp.eq.s32.totalorder %s52, 0
      %p493 = por %p491, %p492
      %s495 = sadd.s32 %s494, 1
      %p498 = scmp.eq.s32.totalorder %s46, 1
      %p499 = scmp.ne.s32.totalorder %s494, %s496
      %p500 = scmp.eq.s32.totalorder %s46, 0
      %p501 = por %p499, %p500
      %p502 = scmp.ne.s32.totalorder %s494, %s496
      %p503 = scmp.eq.s32.totalorder %s51, 1
      %p504 = por %p502, %p503
      %p505 = scmp.ne.s32.totalorder %s496, %s497
      %p506 = scmp.eq.s32.totalorder %s51, 0
      %p507 = por %p505, %p506
      %p508 = scmp.ne.s32.totalorder %s496, %s497
      %p509 = scmp.eq.s32.totalorder %s52, 1
      %p510 = por %p508, %p509
      %p512 = scmp.ne.s32.totalorder %s497, %s511
      %p513 = scmp.eq.s32.totalorder %s52, 0
      %p514 = por %p512, %p513
      %s515 = ssub.s32 %s46, %s53
      %p516 = scmp.eq.s32.totalorder %s515, 0
      %s518 = sadd.s32 %s517, 1
      %s519 = scalar_select %p516, %s517, %s518
      %p522 = pneg %p516
      %p523 = scmp.eq.s32.totalorder %s46, 1
      %p524 = por %p522, %p523
      %p525 = scmp.ne.s32.totalorder %s517, %s520
      %p526 = scmp.eq.s32.totalorder %s46, 0
      %p527 = por %p525, %p526
      %p528 = scmp.ne.s32.totalorder %s517, %s520
      %p529 = scmp.eq.s32.totalorder %s51, 1
      %p530 = por %p528, %p529
      %p531 = scmp.ne.s32.totalorder %s520, %s521
      %p532 = scmp.eq.s32.totalorder %s51, 0
      %p533 = por %p531, %p532
      %p534 = scmp.ne.s32.totalorder %s520, %s521
      %p535 = scmp.eq.s32.totalorder %s52, 1
      %p536 = por %p534, %p535
      %p538 = scmp.ne.s32.totalorder %s521, %s537
      %p539 = scmp.eq.s32.totalorder %s52, 0
      %p540 = por %p538, %p539
      %p541 = scmp.le.s32.totalorder 1, %s46
      %p542 = scmp.lt.s32.totalorder %s46, 3
      %p543 = pnand %p541, %p542
      %p544 = pneg %p543
      // Predicated region
      $region9: #{tpu_custom_call.1} parent=5 // pred_check
        _
      $region10: #{tpu_custom_call.1} parent=5 // pred_check_branch
        %546 = sbr.rel (%p543) target = $region12
      $region11: #{tpu_custom_call.1} parent=5 // pred_region
        %s547 = ssub.s32 %s46, 1
        // Predicated region
        $region13: #{tpu_custom_call.1} parent=11 // pred_check
          %p548 = pneg %p171
        $region14: #{tpu_custom_call.1} parent=11 // pred_check_branch
          %550 = sbr.rel (%p548) target = $region16
        $region15: #{tpu_custom_call.1} parent=11 // pred_region
          %s552 = ssub.s32 4096, 4096
          %553 = vsyncadd [#allocation9], %s552
          %s554 = sshll.u32 [#allocation10], 4
          %s555 = int_to_ptr.vmem [resolvable:$true] %s554
          %560 = dma.hbm_to_vmem [thread:$0]  %s4, 4096, %s555, [#allocation9], 512, 512, 32
        $region16: #{tpu_custom_call.1} parent=11 // pred_fallthru
          _
        // Predicated region
        $region17: #{tpu_custom_call.1} parent=11 // pred_check
          %p561 = pneg %p192
        $region18: #{tpu_custom_call.1} parent=11 // pred_check_branch
          %563 = sbr.rel (%p561) target = $region20
        $region19: #{tpu_custom_call.1} parent=11 // pred_region
          %s565 = ssub.s32 2048, 2048
          %566 = vsyncadd [#allocation12], %s565
          %s567 = sshll.u32 [#allocation11], 4
          %s568 = int_to_ptr.vmem [resolvable:$true] %s567
          %573 = dma.hbm_to_vmem [thread:$0]  %s5, 2048, %s568, [#allocation12], 256, 256, 16
        $region20: #{tpu_custom_call.1} parent=11 // pred_fallthru
          _
        // Predicated region
        $region21: #{tpu_custom_call.1} parent=11 // pred_check
          %p574 = pneg %p213
        $region22: #{tpu_custom_call.1} parent=11 // pred_check_branch
          %576 = sbr.rel (%p574) target = $region24
        $region23: #{tpu_custom_call.1} parent=11 // pred_region
          %s578 = ssub.s32 1024, 1024
          %579 = vsyncadd [#allocation12], %s578
          %s580 = sshll.u32 [#allocation13], 4
          %s581 = int_to_ptr.vmem [resolvable:$true] %s580
          %586 = dma.hbm_to_vmem [thread:$0]  %s6, 1024, %s581, [#allocation12], 128, 128, 8
        $region24: #{tpu_custom_call.1} parent=11 // pred_fallthru
          _
        // Predicated region
        $region25: #{tpu_custom_call.1} parent=11 // pred_check
          %p587 = pneg %p234
        $region26: #{tpu_custom_call.1} parent=11 // pred_check_branch
          %589 = sbr.rel (%p587) target = $region28
        $region27: #{tpu_custom_call.1} parent=11 // pred_region
          %s591 = ssub.s32 1024, 1024
          %592 = vsyncadd [#allocation15], %s591
          %s593 = sshll.u32 [#allocation14], 4
          %s594 = int_to_ptr.vmem [resolvable:$true] %s593
          %599 = dma.hbm_to_vmem [thread:$0]  %s7, 1024, %s594, [#allocation15], 128, 128, 8
        $region28: #{tpu_custom_call.1} parent=11 // pred_fallthru
          _
        // Predicated region
        $region29: #{tpu_custom_call.1} parent=11 // pred_check
          %p600 = pneg %p255
        $region30: #{tpu_custom_call.1} parent=11 // pred_check_branch
          %602 = sbr.rel (%p600) target = $region32
        $region31: #{tpu_custom_call.1} parent=11 // pred_region
          %s604 = ssub.s32 64, 64
          %605 = vsyncadd [#allocation15], %s604
          %s607 = sshll.u32 [#allocation16], 4
          %s608 = int_to_ptr.vmem [resolvable:$true] %s607
          %610 = dma.hbm_to_vmem [thread:$0]  %s8, 64, %s608, [#allocation15]
        $region32: #{tpu_custom_call.1} parent=11 // pred_fallthru
          _
        // Predicated region
        $region33: #{tpu_custom_call.1} parent=11 // pred_check
          %p611 = pneg %p276
        $region34: #{tpu_custom_call.1} parent=11 // pred_check_branch
          %613 = sbr.rel (%p611) target = $region36
        $region35: #{tpu_custom_call.1} parent=11 // pred_region
          %s615 = ssub.s32 32, 32
          %616 = vsyncadd [#allocation18], %s615
          %s618 = sshll.u32 [#allocation17], 4
          %s619 = int_to_ptr.vmem [resolvable:$true] %s618
          %621 = dma.hbm_to_vmem [thread:$0]  %s9, 32, %s619, [#allocation18]
        $region36: #{tpu_custom_call.1} parent=11 // pred_fallthru
          _
        // Predicated region
        $region37: #{tpu_custom_call.1} parent=11 // pred_check
          %p622 = pneg %p297
        $region38: #{tpu_custom_call.1} parent=11 // pred_check_branch
          %624 = sbr.rel (%p622) target = $region40
        $region39: #{tpu_custom_call.1} parent=11 // pred_region
          %s626 = ssub.s32 16, 16
          %627 = vsyncadd [#allocation18], %s626
          %s629 = sshll.u32 [#allocation19], 4
          %s630 = int_to_ptr.vmem [resolvable:$true] %s629
          %632 = dma.hbm_to_vmem [thread:$0]  %s10, 16, %s630, [#allocation18]
        $region40: #{tpu_custom_call.1} parent=11 // pred_fallthru
          _
        // Predicated region
        $region41: #{tpu_custom_call.1} parent=11 // pred_check
          %p633 = pneg %p318
        $region42: #{tpu_custom_call.1} parent=11 // pred_check_branch
          %635 = sbr.rel (%p633) target = $region44
        $region43: #{tpu_custom_call.1} parent=11 // pred_region
          %s637 = ssub.s32 16, 16
          %638 = vsyncadd [#allocation21], %s637
          %s640 = sshll.u32 [#allocation20], 4
          %s641 = int_to_ptr.vmem [resolvable:$true] %s640
          %643 = dma.hbm_to_vmem [thread:$0]  %s11, 16, %s641, [#allocation21]
        $region44: #{tpu_custom_call.1} parent=11 // pred_fallthru
          _
        // Predicated region
        $region45: #{tpu_custom_call.1} parent=11 // pred_check
          %p644 = pneg %p339
        $region46: #{tpu_custom_call.1} parent=11 // pred_check_branch
          %646 = sbr.rel (%p644) target = $region48
        $region47: #{tpu_custom_call.1} parent=11 // pred_region
          _
        $region48: #{tpu_custom_call.1} parent=11 // pred_fallthru
          _
        // Predicated region
        $region49: #{tpu_custom_call.1} parent=11 // pred_check
          %p647 = pneg %p360
        $region50: #{tpu_custom_call.1} parent=11 // pred_check_branch
          %649 = sbr.rel (%p647) target = $region52
        $region51: #{tpu_custom_call.1} parent=11 // pred_region
          _
        $region52: #{tpu_custom_call.1} parent=11 // pred_fallthru
          _
        // Predicated region
        $region53: #{tpu_custom_call.1} parent=11 // pred_check
          %p650 = pneg %p381
        $region54: #{tpu_custom_call.1} parent=11 // pred_check_branch
          %652 = sbr.rel (%p650) target = $region56
        $region55: #{tpu_custom_call.1} parent=11 // pred_region
          _
        $region56: #{tpu_custom_call.1} parent=11 // pred_fallthru
          _
        // Predicated region
        $region57: #{tpu_custom_call.1} parent=11 // pred_check
          %p653 = pneg %p402
        $region58: #{tpu_custom_call.1} parent=11 // pred_check_branch
          %655 = sbr.rel (%p653) target = $region60
        $region59: #{tpu_custom_call.1} parent=11 // pred_region
          %s657 = ssub.s32 1024, 1024
          %658 = vsyncadd [#allocation21], %s657
          %s659 = sshll.u32 [#allocation22], 4
          %s660 = int_to_ptr.vmem [resolvable:$true] %s659
          %665 = dma.hbm_to_vmem [thread:$0]  %s15, 1024, %s660, [#allocation21], 128, 128, 8
        $region60: #{tpu_custom_call.1} parent=11 // pred_fallthru
          _
        // Predicated region
        $region61: #{tpu_custom_call.1} parent=11 // pred_check
          %p666 = pneg %p423
        $region62: #{tpu_custom_call.1} parent=11 // pred_check_branch
          %668 = sbr.rel (%p666) target = $region64
        $region63: #{tpu_custom_call.1} parent=11 // pred_region
          %s670 = ssub.s32 4096, 4096
          %671 = vsyncadd [#allocation24], %s670
          %s672 = sshll.u32 [#allocation23], 4
          %s673 = int_to_ptr.vmem [resolvable:$true] %s672
          %678 = dma.hbm_to_vmem [thread:$0]  %s16, 4096, %s673, [#allocation24], 256, 256, 16
        $region64: #{tpu_custom_call.1} parent=11 // pred_fallthru
          _
        // Predicated region
        $region65: #{tpu_custom_call.1} parent=11 // pred_check
          %p679 = pneg %p444
        $region66: #{tpu_custom_call.1} parent=11 // pred_check_branch
          %681 = sbr.rel (%p679) target = $region68
        $region67: #{tpu_custom_call.1} parent=11 // pred_region
          %s683 = ssub.s32 16384, 16384
          %684 = vsyncadd [#allocation24], %s683
          %s685 = sshll.u32 [#allocation25], 4
          %s686 = int_to_ptr.vmem [resolvable:$true] %s685
          %691 = dma.hbm_to_vmem [thread:$0]  %s17, 16384, %s686, [#allocation24], 512, 512, 32
        $region68: #{tpu_custom_call.1} parent=11 // pred_fallthru
          _
        // Predicated region
        $region69: #{tpu_custom_call.1} parent=11 // pred_check
          %p692 = pneg %p465
        $region70: #{tpu_custom_call.1} parent=11 // pred_check_branch
          %694 = sbr.rel (%p692) target = $region72
        $region71: #{tpu_custom_call.1} parent=11 // pred_region
          %s696 = ssub.s32 768, 768
          %697 = vsyncadd [#allocation27], %s696
          %s698 = sshll.u32 [#allocation26], 4
          %s699 = int_to_ptr.vmem [resolvable:$true] %s698
          %704 = dma.hbm_to_vmem [thread:$0]  %s18, 768, %s699, [#allocation27], 128, 128, 8
        $region72: #{tpu_custom_call.1} parent=11 // pred_fallthru
          _
        // Predicated region
        $region73: #{tpu_custom_call.1} parent=11 // pred_check
          %p705 = pneg %p486
        $region74: #{tpu_custom_call.1} parent=11 // pred_check_branch
          %707 = sbr.rel (%p705) target = $region76
        $region75: #{tpu_custom_call.1} parent=11 // pred_region
          %s709 = ssub.s32 98304, 98304
          %710 = vsyncadd [#allocation27], %s709
          %s711 = sshll.u32 [#allocation28], 4
          %s712 = int_to_ptr.vmem [resolvable:$true] %s711
          %717 = dma.hbm_to_vmem [thread:$0]  %s19, 98304, %s712, [#allocation27], 512, 512, 32
        $region76: #{tpu_custom_call.1} parent=11 // pred_fallthru
          _
        // Predicated region
        $region77: #{tpu_custom_call.1} parent=11 // pred_check
          %p718 = pneg %p507
        $region78: #{tpu_custom_call.1} parent=11 // pred_check_branch
          %720 = sbr.rel (%p718) target = $region80
        $region79: #{tpu_custom_call.1} parent=11 // pred_region
          %s722 = ssub.s32 64, 64
          %723 = vsyncadd [#allocation30], %s722
          %s725 = sshll.u32 [#allocation29], 4
          %s726 = int_to_ptr.vmem [resolvable:$true] %s725
          %728 = dma.hbm_to_vmem [thread:$0]  %s20, 64, %s726, [#allocation30]
        $region80: #{tpu_custom_call.1} parent=11 // pred_fallthru
          _
      $region12: #{tpu_custom_call.1} parent=5 // pred_fallthru
        _
      %p729 = scmp.lt.s32.totalorder %s46, 2
      // Predicated region
      $region81: #{tpu_custom_call.1} parent=5 // pred_check
        %p730 = pneg %p729
      $region82: #{tpu_custom_call.1} parent=5 // pred_check_branch
        %732 = sbr.rel (%p730) target = $region84
      $region83: #{tpu_custom_call.1} parent=5 // pred_region
        // Predicated region
        $region85: #{tpu_custom_call.1} parent=83 // pred_check
          %p733 = pneg %p66
        $region86: #{tpu_custom_call.1} parent=83 // pred_check_branch
          %735 = sbr.rel (%p733) target = $region88
        $region87: #{tpu_custom_call.1} parent=83 // pred_region
          %s736 = sand.u32 %s56, 1
          %s737 = scalar_lea.sflag [#allocation3], %s736
          %s738 = sand.u32 %s56, 1
          %s739 = smul.addr %s738, 16
          %s740 = scalar_lea.vmem [#allocation2], %s739
          %s742 = ssub.s32 256, 256
          %743 = vsyncadd %s737, %s742
          %s744 = smul.addr %s46, 2
          %s745 = smul.addr %s744, 128
          %s746 = scalar_lea.hbm %s0, %s745
          %s747 = sshll.u32 %s740, 4
          %s748 = int_to_ptr.vmem [resolvable:$true] %s747
          %753 = dma.hbm_to_vmem [thread:$0]  %s746, 256, %s748, %s737, 128, 128, 8
        $region88: #{tpu_custom_call.1} parent=83 // pred_fallthru
          _
        // Predicated region
        $region89: #{tpu_custom_call.1} parent=83 // pred_check
          %p754 = pneg %p92
        $region90: #{tpu_custom_call.1} parent=83 // pred_check_branch
          %756 = sbr.rel (%p754) target = $region92
        $region91: #{tpu_custom_call.1} parent=83 // pred_region
          %s757 = sand.u32 %s46, 1
          %s758 = scalar_lea.sflag [#allocation6], %s757
          %s759 = sand.u32 %s82, 1
          %s760 = smul.addr %s759, 8
          %s761 = scalar_lea.vmem [#allocation5], %s760
          %s763 = ssub.s32 128, 128
          %764 = vsyncadd %s758, %s763
          %s765 = smul.addr %s46, 128
          %s766 = scalar_lea.hbm %s1, %s765
          %s768 = sshll.u32 %s761, 4
          %s769 = int_to_ptr.vmem [resolvable:$true] %s768
          %771 = dma.hbm_to_vmem [thread:$0]  %s766, 128, %s769, %s758
        $region92: #{tpu_custom_call.1} parent=83 // pred_fallthru
          _
        // Predicated region
        $region93: #{tpu_custom_call.1} parent=83 // pred_check
          %p772 = pneg %p118
        $region94: #{tpu_custom_call.1} parent=83 // pred_check_branch
          %774 = sbr.rel (%p772) target = $region96
        $region95: #{tpu_custom_call.1} parent=83 // pred_region
          %s775 = sand.u32 %s46, 1
          %s776 = scalar_lea.sflag [#allocation6], %s775
          %s777 = sand.u32 %s108, 1
          %s778 = smul.addr %s777, 4
          %s779 = scalar_lea.vmem [#allocation7], %s778
          %s781 = ssub.s32 64, 64
          %782 = vsyncadd %s776, %s781
          %s783 = smul.addr %s46, 64
          %s784 = scalar_lea.hbm %s2, %s783
          %s786 = sshll.u32 %s779, 4
          %s787 = int_to_ptr.vmem [resolvable:$true] %s786
          %789 = dma.hbm_to_vmem [thread:$0]  %s784, 64, %s787, %s776
        $region96: #{tpu_custom_call.1} parent=83 // pred_fallthru
          _
        // Predicated region
        $region97: #{tpu_custom_call.1} parent=83 // pred_check
          %p790 = pneg %p144
        $region98: #{tpu_custom_call.1} parent=83 // pred_check_branch
          %792 = sbr.rel (%p790) target = $region100
        $region99: #{tpu_custom_call.1} parent=83 // pred_region
          %s793 = sand.u32 %s46, 1
          %s794 = scalar_lea.sflag [#allocation9], %s793
          %s795 = sand.u32 %s134, 1
          %s796 = smul.addr %s795, 2
          %s797 = scalar_lea.vmem [#allocation8], %s796
          %s799 = ssub.s32 32, 32
          %800 = vsyncadd %s794, %s799
          %s801 = smul.addr %s46, 32
          %s802 = scalar_lea.hbm %s3, %s801
          %s804 = sshll.u32 %s797, 4
          %s805 = int_to_ptr.vmem [resolvable:$true] %s804
          %807 = dma.hbm_to_vmem [thread:$0]  %s802, 32, %s805, %s794
        $region100: #{tpu_custom_call.1} parent=83 // pred_fallthru
          _
      $region84: #{tpu_custom_call.1} parent=5 // pred_fallthru
        _
      %p808 = scmp.le.s32.totalorder 1, %s46
      %p809 = scmp.lt.s32.totalorder %s46, 3
      %p810 = pnand %p808, %p809
      %p811 = pneg %p810
      // Predicated region
      $region101: #{tpu_custom_call.1} parent=5 // pred_check
        _
      $region102: #{tpu_custom_call.1} parent=5 // pred_check_branch
        %813 = sbr.rel (%p810) target = $region104
      $region103: #{tpu_custom_call.1} parent=5 // pred_region
        %s814 = ssub.s32 %s46, 1
        %s815 = sand.u32 %s59, 1
        %s816 = scalar_lea.sflag [#allocation3], %s815
        %s817 = sand.u32 %s59, 1
        %s818 = smul.addr %s817, 16
        %s819 = scalar_lea.vmem [#allocation2], %s818
        // Predicated region
        $region105: #{tpu_custom_call.1} parent=103 // pred_check
          %p820 = pneg %p72
        $region106: #{tpu_custom_call.1} parent=103 // pred_check_branch
          %822 = sbr.rel (%p820) target = $region108
        $region107: #{tpu_custom_call.1} parent=103 // pred_region
          %823 = dma.done %s816, 256
        $region108: #{tpu_custom_call.1} parent=103 // pred_fallthru
          _
        %s824 = sand.u32 %s51, 1
        %s825 = scalar_lea.sflag [#allocation6], %s824
        %s826 = sand.u32 %s85, 1
        %s827 = smul.addr %s826, 8
        %s828 = scalar_lea.vmem [#allocation5], %s827
        // Predicated region
        $region109: #{tpu_custom_call.1} parent=103 // pred_check
          %p829 = pneg %p98
        $region110: #{tpu_custom_call.1} parent=103 // pred_check_branch
          %831 = sbr.rel (%p829) target = $region112
        $region111: #{tpu_custom_call.1} parent=103 // pred_region
          %832 = dma.done %s825, 128
        $region112: #{tpu_custom_call.1} parent=103 // pred_fallthru
          _
        %s833 = sand.u32 %s51, 1
        %s834 = scalar_lea.sflag [#allocation6], %s833
        %s835 = sand.u32 %s111, 1
        %s836 = smul.addr %s835, 4
        %s837 = scalar_lea.vmem [#allocation7], %s836
        // Predicated region
        $region113: #{tpu_custom_call.1} parent=103 // pred_check
          %p838 = pneg %p124
        $region114: #{tpu_custom_call.1} parent=103 // pred_check_branch
          %840 = sbr.rel (%p838) target = $region116
        $region115: #{tpu_custom_call.1} parent=103 // pred_region
          %841 = dma.done %s834, 64
        $region116: #{tpu_custom_call.1} parent=103 // pred_fallthru
          _
        %s842 = sand.u32 %s51, 1
        %s843 = scalar_lea.sflag [#allocation9], %s842
        %s844 = sand.u32 %s137, 1
        %s845 = smul.addr %s844, 2
        %s846 = scalar_lea.vmem [#allocation8], %s845
        // Predicated region
        $region117: #{tpu_custom_call.1} parent=103 // pred_check
          %p847 = pneg %p150
        $region118: #{tpu_custom_call.1} parent=103 // pred_check_branch
          %849 = sbr.rel (%p847) target = $region120
        $region119: #{tpu_custom_call.1} parent=103 // pred_region
          %850 = dma.done %s843, 32
        $region120: #{tpu_custom_call.1} parent=103 // pred_fallthru
          _
        // Predicated region
        $region121: #{tpu_custom_call.1} parent=103 // pred_check
          %p851 = pneg %p171
        $region122: #{tpu_custom_call.1} parent=103 // pred_check_branch
          %853 = sbr.rel (%p851) target = $region124
        $region123: #{tpu_custom_call.1} parent=103 // pred_region
          %854 = dma.done [#allocation9], 4096
        $region124: #{tpu_custom_call.1} parent=103 // pred_fallthru
          _
        // Predicated region
        $region125: #{tpu_custom_call.1} parent=103 // pred_check
          %p855 = pneg %p192
        $region126: #{tpu_custom_call.1} parent=103 // pred_check_branch
          %857 = sbr.rel (%p855) target = $region128
        $region127: #{tpu_custom_call.1} parent=103 // pred_region
          %858 = dma.done [#allocation12], 2048
        $region128: #{tpu_custom_call.1} parent=103 // pred_fallthru
          _
        // Predicated region
        $region129: #{tpu_custom_call.1} parent=103 // pred_check
          %p859 = pneg %p213
        $region130: #{tpu_custom_call.1} parent=103 // pred_check_branch
          %861 = sbr.rel (%p859) target = $region132
        $region131: #{tpu_custom_call.1} parent=103 // pred_region
          %862 = dma.done [#allocation12], 1024
        $region132: #{tpu_custom_call.1} parent=103 // pred_fallthru
          _
        // Predicated region
        $region133: #{tpu_custom_call.1} parent=103 // pred_check
          %p863 = pneg %p234
        $region134: #{tpu_custom_call.1} parent=103 // pred_check_branch
          %865 = sbr.rel (%p863) target = $region136
        $region135: #{tpu_custom_call.1} parent=103 // pred_region
          %866 = dma.done [#allocation15], 1024
        $region136: #{tpu_custom_call.1} parent=103 // pred_fallthru
          _
        // Predicated region
        $region137: #{tpu_custom_call.1} parent=103 // pred_check
          %p867 = pneg %p255
        $region138: #{tpu_custom_call.1} parent=103 // pred_check_branch
          %869 = sbr.rel (%p867) target = $region140
        $region139: #{tpu_custom_call.1} parent=103 // pred_region
          %870 = dma.done [#allocation15], 64
        $region140: #{tpu_custom_call.1} parent=103 // pred_fallthru
          _
        // Predicated region
        $region141: #{tpu_custom_call.1} parent=103 // pred_check
          %p871 = pneg %p276
        $region142: #{tpu_custom_call.1} parent=103 // pred_check_branch
          %873 = sbr.rel (%p871) target = $region144
        $region143: #{tpu_custom_call.1} parent=103 // pred_region
          %874 = dma.done [#allocation18], 32
        $region144: #{tpu_custom_call.1} parent=103 // pred_fallthru
          _
        // Predicated region
        $region145: #{tpu_custom_call.1} parent=103 // pred_check
          %p875 = pneg %p297
        $region146: #{tpu_custom_call.1} parent=103 // pred_check_branch
          %877 = sbr.rel (%p875) target = $region148
        $region147: #{tpu_custom_call.1} parent=103 // pred_region
          %878 = dma.done [#allocation18], 16
        $region148: #{tpu_custom_call.1} parent=103 // pred_fallthru
          _
        // Predicated region
        $region149: #{tpu_custom_call.1} parent=103 // pred_check
          %p879 = pneg %p318
        $region150: #{tpu_custom_call.1} parent=103 // pred_check_branch
          %881 = sbr.rel (%p879) target = $region152
        $region151: #{tpu_custom_call.1} parent=103 // pred_region
          %882 = dma.done [#allocation21], 16
        $region152: #{tpu_custom_call.1} parent=103 // pred_fallthru
          _
        // Predicated region
        $region153: #{tpu_custom_call.1} parent=103 // pred_check
          %p883 = pneg %p402
        $region154: #{tpu_custom_call.1} parent=103 // pred_check_branch
          %885 = sbr.rel (%p883) target = $region156
        $region155: #{tpu_custom_call.1} parent=103 // pred_region
          %886 = dma.done [#allocation21], 1024
        $region156: #{tpu_custom_call.1} parent=103 // pred_fallthru
          _
        // Predicated region
        $region157: #{tpu_custom_call.1} parent=103 // pred_check
          %p887 = pneg %p423
        $region158: #{tpu_custom_call.1} parent=103 // pred_check_branch
          %889 = sbr.rel (%p887) target = $region160
        $region159: #{tpu_custom_call.1} parent=103 // pred_region
          %890 = dma.done [#allocation24], 4096
        $region160: #{tpu_custom_call.1} parent=103 // pred_fallthru
          _
        // Predicated region
        $region161: #{tpu_custom_call.1} parent=103 // pred_check
          %p891 = pneg %p444
        $region162: #{tpu_custom_call.1} parent=103 // pred_check_branch
          %893 = sbr.rel (%p891) target = $region164
        $region163: #{tpu_custom_call.1} parent=103 // pred_region
          %894 = dma.done [#allocation24], 16384
        $region164: #{tpu_custom_call.1} parent=103 // pred_fallthru
          _
        // Predicated region
        $region165: #{tpu_custom_call.1} parent=103 // pred_check
          %p895 = pneg %p465
        $region166: #{tpu_custom_call.1} parent=103 // pred_check_branch
          %897 = sbr.rel (%p895) target = $region168
        $region167: #{tpu_custom_call.1} parent=103 // pred_region
          %898 = dma.done [#allocation27], 768
        $region168: #{tpu_custom_call.1} parent=103 // pred_fallthru
          _
        // Predicated region
        $region169: #{tpu_custom_call.1} parent=103 // pred_check
          %p899 = pneg %p486
        $region170: #{tpu_custom_call.1} parent=103 // pred_check_branch
          %901 = sbr.rel (%p899) target = $region172
        $region171: #{tpu_custom_call.1} parent=103 // pred_region
          %902 = dma.done [#allocation27], 98304
        $region172: #{tpu_custom_call.1} parent=103 // pred_fallthru
          _
        // Predicated region
        $region173: #{tpu_custom_call.1} parent=103 // pred_check
          %p903 = pneg %p507
        $region174: #{tpu_custom_call.1} parent=103 // pred_check_branch
          %905 = sbr.rel (%p903) target = $region176
        $region175: #{tpu_custom_call.1} parent=103 // pred_region
          %906 = dma.done [#allocation30], 64
        $region176: #{tpu_custom_call.1} parent=103 // pred_fallthru
          _
        %s907 = sand.u32 %s59, 1
        %s908 = scalar_lea.sflag [#allocation3], %s907
        %s909 = sand.u32 %s59, 1
        %s910 = smul.addr %s909, 16
        %s911 = scalar_lea.vmem [#allocation2], %s910
        %p912 = pneg %p72
        %p913 = pneg %p69
        %s914 = sand.u32 %s51, 1
        %s915 = scalar_lea.sflag [#allocation6], %s914
        %s916 = sand.u32 %s85, 1
        %s917 = smul.addr %s916, 8
        %s918 = scalar_lea.vmem [#allocation5], %s917
        %p919 = pneg %p98
        %p920 = pneg %p95
        %s921 = sand.u32 %s51, 1
        %s922 = scalar_lea.sflag [#allocation6], %s921
        %s923 = sand.u32 %s111, 1
        %s924 = smul.addr %s923, 4
        %s925 = scalar_lea.vmem [#allocation7], %s924
        %p926 = pneg %p124
        %p927 = pneg %p121
        %s928 = sand.u32 %s51, 1
        %s929 = scalar_lea.sflag [#allocation9], %s928
        %s930 = sand.u32 %s137, 1
        %s931 = smul.addr %s930, 2
        %s932 = scalar_lea.vmem [#allocation8], %s931
        %p933 = pneg %p150
        %p934 = pneg %p147
        %p935 = pneg %p171
        %p936 = pneg %p168
        %p937 = pneg %p192
        %p938 = pneg %p189
        %p939 = pneg %p213
        %p940 = pneg %p210
        %p941 = pneg %p234
        %p942 = pneg %p231
        %p943 = pneg %p255
        %p944 = pneg %p252
        %p945 = pneg %p276
        %p946 = pneg %p273
        %p947 = pneg %p297
        %p948 = pneg %p294
        %p949 = pneg %p318
        %p950 = pneg %p315
        %p951 = pneg %p339
        %p952 = pneg %p336
        %p953 = pneg %p360
        %p954 = pneg %p357
        %p955 = pneg %p381
        %p956 = pneg %p378
        %p957 = pneg %p402
        %p958 = pneg %p399
        %p959 = pneg %p423
        %p960 = pneg %p420
        %p961 = pneg %p444
        %p962 = pneg %p441
        %p963 = pneg %p465
        %p964 = pneg %p462
        %p965 = pneg %p486
        %p966 = pneg %p483
        %p967 = pneg %p507
        %p968 = pneg %p504
        %p969 = pneg %p533
        %p970 = pneg %p530
        %s971 = sand.u32 %s520, 1
        %s972 = scalar_lea.sflag [#allocation4], %s971
        %s973 = sand.u32 %s520, 1
        %s974 = smul.addr %s973, 64
        %s975 = scalar_lea.vmem [#allocation31], %s974
        %v976 = vld [vmem:[%s846] sm:$0x3]
        %v977 = vld [vmem:[#allocation14] sm:$0xff]
        %v978 = vld [vmem:[#allocation14 + $0x8] sm:$0xff]
        %v979 = vld [vmem:[#allocation14 + $0x10] sm:$0xff]
        %v980 = vld [vmem:[#allocation14 + $0x18] sm:$0xff]
        %v981 = vld [vmem:[#allocation14 + $0x20] sm:$0xff]
        %v982 = vld [vmem:[#allocation14 + $0x28] sm:$0xff]
        %v983 = vld [vmem:[#allocation14 + $0x30] sm:$0xff]
        %v984 = vld [vmem:[#allocation14 + $0x38] sm:$0xff]
        %v985 = vld [vmem:[#allocation20] sm:$0x1]
        %v987 = vlaneseq
        %v988 = vshrl.u32 %v987, 7
        %v989 = vsub.s32 0, %v988
        %v990 = vrot.slane %v985, %v989
        %vm992 = vcmask 523264
        %v994 = vsel %vm992, %v976, 0
        %996 = vmatprep.subr.mxu0 0.0
        %997 = vmatpush1.msra.mxu0 %v977
        %998 = vmatprep.subr.mxu0 0.0
        %999 = vmatpush1.msra.mxu0 %v978
        %1000 = vmatprep.subr.mxu0 0.0
        %1001 = vmatpush1.msra.mxu0 %v979
        %1002 = vmatprep.subr.mxu0 0.0
        %1003 = vmatpush1.msra.mxu0 %v980
        %1004 = vmatprep.subr.mxu0 0.0
        %1005 = vmatpush1.msra.mxu0 %v981
        %1006 = vmatprep.subr.mxu0 0.0
        %1007 = vmatpush1.msra.mxu0 %v982
        %1008 = vmatprep.subr.mxu0 0.0
        %1009 = vmatpush1.msra.mxu0 %v983
        %1010 = vmatprep.subr.mxu0 0.0
        %1011 = vmatpush1.msra.mxu0 %v984
        %1012 = vmatprep.subr.mxu0 0.0
        %1013 = vmatpush1.msra.mxu0 0.0
        %1014 = vmatprep.subr.mxu0 0.0
        %1015 = vmatpush1.msra.mxu0 0.0
        %1016 = vmatprep.subr.mxu0 0.0
        %1017 = vmatpush1.msra.mxu0 0.0
        %1018 = vmatprep.subr.mxu0 0.0
        %1019 = vmatpush1.msra.mxu0 0.0
        %1020 = vmatprep.subr.mxu0 0.0
        %1021 = vmatpush1.msra.mxu0 0.0
        %1022 = vmatprep.subr.mxu0 0.0
        %1023 = vmatpush1.msra.mxu0 0.0
        %1024 = vmatprep.subr.mxu0 0.0
        %1025 = vmatpush1.msra.mxu0 0.0
        %1026 = vmatprep.subr.mxu0 0.0
        %1027 = vmatpush1.msra.mxu0 0.0
        %1028 = vmatprep.subr.mxu0 0.0
        %1029 = vmatpush1.msra.mxu0 0.0
        %1030 = vmatprep.subr.mxu0 0.0
        %1031 = vmatpush1.msra.mxu0 0.0
        %1032 = vmatprep.subr.mxu0 0.0
        %1033 = vmatpush1.msra.mxu0 0.0
        %1034 = vmatprep.subr.mxu0 0.0
        %1035 = vmatpush1.msra.mxu0 0.0
        %1036 = vmatprep.subr.mxu0 0.0
        %1037 = vmatpush1.msra.mxu0 0.0
        %1038 = vmatprep.subr.mxu0 0.0
        %1039 = vmatpush1.msra.mxu0 0.0
        %1040 = vmatprep.subr.mxu0 0.0
        %1041 = vmatpush1.msra.mxu0 0.0
        %1042 = vmatprep.subr.mxu0 0.0
        %1043 = vmatpush1.msra.mxu0 0.0
        %1044 = vmatprep.subr.mxu0 0.0
        %1045 = vmatpush1.msra.mxu0 0.0
        %1046 = vmatprep.subr.mxu0 0.0
        %1047 = vmatpush1.msra.mxu0 0.0
        %1048 = vmatprep.subr.mxu0 0.0
        %1049 = vmatpush1.msra.mxu0 0.0
        %1050 = vmatprep.subr.mxu0 0.0
        %1051 = vmatpush1.msra.mxu0 0.0
        %1052 = vmatprep.subr.mxu0 0.0
        %1053 = vmatpush1.msra.mxu0 0.0
        %1054 = vmatprep.subr.mxu0 0.0
        %1055 = vmatpush1.msra.mxu0 0.0
        %1056 = vmatprep.subr.mxu0 0.0
        %1057 = vmatpush1.msra.mxu0 0.0
        %1058 = vmatprep.subr.mxu0 0.0
        %1059 = vmatpush1.msra.mxu0 0.0
        %1060 = vmatprep.mubr.f32.mxu0 0.0
        %1061 = vmatmul.mubr.f32.gmra.mrb[0].mxu0 %v994
        %v1062 = vpop.f32.mrb[0].mxu0
        %v1063 = vadd.f32 %v990, %v1062
        %v1064 = vpop.f32.mrb[0].mxu0
        %1065 = vdwg.mxu0
        %v1066 = vld [vmem:[%s12] sm:$0xf]
        %v1067 = vld [vmem:[#allocation22] sm:$0xff]
        %v1068 = vld [vmem:[#allocation22 + $0x8] sm:$0xff]
        %v1069 = vld [vmem:[#allocation22 + $0x10] sm:$0xff]
        %v1070 = vld [vmem:[#allocation22 + $0x18] sm:$0xff]
        %v1071 = vld [vmem:[#allocation22 + $0x20] sm:$0xff]
        %v1072 = vld [vmem:[#allocation22 + $0x28] sm:$0xff]
        %v1073 = vld [vmem:[#allocation22 + $0x30] sm:$0xff]
        %v1074 = vld [vmem:[#allocation22 + $0x38] sm:$0xff]
        %v1076 = vsel %vm992, %v1063, 0
        %1078 = vmatprep.subr.mxu0 0.0
        %1079 = vmatpush1.msra.mxu0 %v1067
        %1080 = vmatprep.subr.mxu0 0.0
        %1081 = vmatpush1.msra.mxu0 %v1068
        %1082 = vmatprep.subr.mxu0 0.0
        %1083 = vmatpush1.msra.mxu0 %v1069
        %1084 = vmatprep.subr.mxu0 0.0
        %1085 = vmatpush1.msra.mxu0 %v1070
        %1086 = vmatprep.subr.mxu0 0.0
        %1087 = vmatpush1.msra.mxu0 %v1071
        %1088 = vmatprep.subr.mxu0 0.0
        %1089 = vmatpush1.msra.mxu0 %v1072
        %1090 = vmatprep.subr.mxu0 0.0
        %1091 = vmatpush1.msra.mxu0 %v1073
        %1092 = vmatprep.subr.mxu0 0.0
        %1093 = vmatpush1.msra.mxu0 %v1074
        %1094 = vmatprep.subr.mxu0 0.0
        %1095 = vmatpush1.msra.mxu0 0.0
        %1096 = vmatprep.subr.mxu0 0.0
        %1097 = vmatpush1.msra.mxu0 0.0
        %1098 = vmatprep.subr.mxu0 0.0
        %1099 = vmatpush1.msra.mxu0 0.0
        %1100 = vmatprep.subr.mxu0 0.0
        %1101 = vmatpush1.msra.mxu0 0.0
        %1102 = vmatprep.subr.mxu0 0.0
        %1103 = vmatpush1.msra.mxu0 0.0
        %1104 = vmatprep.subr.mxu0 0.0
        %1105 = vmatpush1.msra.mxu0 0.0
        %1106 = vmatprep.subr.mxu0 0.0
        %1107 = vmatpush1.msra.mxu0 0.0
        %1108 = vmatprep.subr.mxu0 0.0
        %1109 = vmatpush1.msra.mxu0 0.0
        %1110 = vmatprep.subr.mxu0 0.0
        %1111 = vmatpush1.msra.mxu0 0.0
        %1112 = vmatprep.subr.mxu0 0.0
        %1113 = vmatpush1.msra.mxu0 0.0
        %1114 = vmatprep.subr.mxu0 0.0
        %1115 = vmatpush1.msra.mxu0 0.0
        %1116 = vmatprep.subr.mxu0 0.0
        %1117 = vmatpush1.msra.mxu0 0.0
        %1118 = vmatprep.subr.mxu0 0.0
        %1119 = vmatpush1.msra.mxu0 0.0
        %1120 = vmatprep.subr.mxu0 0.0
        %1121 = vmatpush1.msra.mxu0 0.0
        %1122 = vmatprep.subr.mxu0 0.0
        %1123 = vmatpush1.msra.mxu0 0.0
        %1124 = vmatprep.subr.mxu0 0.0
        %1125 = vmatpush1.msra.mxu0 0.0
        %1126 = vmatprep.subr.mxu0 0.0
        %1127 = vmatpush1.msra.mxu0 0.0
        %1128 = vmatprep.subr.mxu0 0.0
        %1129 = vmatpush1.msra.mxu0 0.0
        %1130 = vmatprep.subr.mxu0 0.0
        %1131 = vmatpush1.msra.mxu0 0.0
        %1132 = vmatprep.subr.mxu0 0.0
        %1133 = vmatpush1.msra.mxu0 0.0
        %1134 = vmatprep.subr.mxu0 0.0
        %1135 = vmatpush1.msra.mxu0 0.0
        %1136 = vmatprep.subr.mxu0 0.0
        %1137 = vmatpush1.msra.mxu0 0.0
        %1138 = vmatprep.subr.mxu0 0.0
        %1139 = vmatpush1.msra.mxu0 0.0
        %1140 = vmatprep.subr.mxu0 0.0
        %1141 = vmatpush1.msra.mxu0 0.0
        %1142 = vmatprep.mubr.f32.mxu0 0.0
        %1143 = vmatmul.mubr.f32.gmra.mrb[0].mxu0 %v1076
        %v1144 = vpop.f32.mrb[0].mxu0
        %v1145 = vadd.f32 0.0, %v1144
        %v1146 = vpop.f32.mrb[0].mxu0
        %1147 = vdwg.mxu0
        %v1148 = vld [vmem:[%s837] sm:$0xf]
        %v1149 = vld [vmem:[#allocation13] sm:$0xff]
        %v1150 = vld [vmem:[#allocation13 + $0x8] sm:$0xff]
        %v1151 = vld [vmem:[#allocation13 + $0x10] sm:$0xff]
        %v1152 = vld [vmem:[#allocation13 + $0x18] sm:$0xff]
        %v1153 = vld [vmem:[#allocation13 + $0x20] sm:$0xff]
        %v1154 = vld [vmem:[#allocation13 + $0x28] sm:$0xff]
        %v1155 = vld [vmem:[#allocation13 + $0x30] sm:$0xff]
        %v1156 = vld [vmem:[#allocation13 + $0x38] sm:$0xff]
        %v1158 = vsel %vm992, %v1148, 0
        %1160 = vmatprep.subr.mxu0 0.0
        %1161 = vmatpush1.msra.mxu0 %v1149
        %1162 = vmatprep.subr.mxu0 0.0
        %1163 = vmatpush1.msra.mxu0 %v1150
        %1164 = vmatprep.subr.mxu0 0.0
        %1165 = vmatpush1.msra.mxu0 %v1151
        %1166 = vmatprep.subr.mxu0 0.0
        %1167 = vmatpush1.msra.mxu0 %v1152
        %1168 = vmatprep.subr.mxu0 0.0
        %1169 = vmatpush1.msra.mxu0 %v1153
        %1170 = vmatprep.subr.mxu0 0.0
        %1171 = vmatpush1.msra.mxu0 %v1154
        %1172 = vmatprep.subr.mxu0 0.0
        %1173 = vmatpush1.msra.mxu0 %v1155
        %1174 = vmatprep.subr.mxu0 0.0
        %1175 = vmatpush1.msra.mxu0 %v1156
        %1176 = vmatprep.subr.mxu0 0.0
        %1177 = vmatpush1.msra.mxu0 0.0
        %1178 = vmatprep.subr.mxu0 0.0
        %1179 = vmatpush1.msra.mxu0 0.0
        %1180 = vmatprep.subr.mxu0 0.0
        %1181 = vmatpush1.msra.mxu0 0.0
        %1182 = vmatprep.subr.mxu0 0.0
        %1183 = vmatpush1.msra.mxu0 0.0
        %1184 = vmatprep.subr.mxu0 0.0
        %1185 = vmatpush1.msra.mxu0 0.0
        %1186 = vmatprep.subr.mxu0 0.0
        %1187 = vmatpush1.msra.mxu0 0.0
        %1188 = vmatprep.subr.mxu0 0.0
        %1189 = vmatpush1.msra.mxu0 0.0
        %1190 = vmatprep.subr.mxu0 0.0
        %1191 = vmatpush1.msra.mxu0 0.0
        %1192 = vmatprep.subr.mxu0 0.0
        %1193 = vmatpush1.msra.mxu0 0.0
        %1194 = vmatprep.subr.mxu0 0.0
        %1195 = vmatpush1.msra.mxu0 0.0
        %1196 = vmatprep.subr.mxu0 0.0
        %1197 = vmatpush1.msra.mxu0 0.0
        %1198 = vmatprep.subr.mxu0 0.0
        %1199 = vmatpush1.msra.mxu0 0.0
        %1200 = vmatprep.subr.mxu0 0.0
        %1201 = vmatpush1.msra.mxu0 0.0
        %1202 = vmatprep.subr.mxu0 0.0
        %1203 = vmatpush1.msra.mxu0 0.0
        %1204 = vmatprep.subr.mxu0 0.0
        %1205 = vmatpush1.msra.mxu0 0.0
        %1206 = vmatprep.subr.mxu0 0.0
        %1207 = vmatpush1.msra.mxu0 0.0
        %1208 = vmatprep.subr.mxu0 0.0
        %1209 = vmatpush1.msra.mxu0 0.0
        %1210 = vmatprep.subr.mxu0 0.0
        %1211 = vmatpush1.msra.mxu0 0.0
        %1212 = vmatprep.subr.mxu0 0.0
        %1213 = vmatpush1.msra.mxu0 0.0
        %1214 = vmatprep.subr.mxu0 0.0
        %1215 = vmatpush1.msra.mxu0 0.0
        %1216 = vmatprep.subr.mxu0 0.0
        %1217 = vmatpush1.msra.mxu0 0.0
        %1218 = vmatprep.subr.mxu0 0.0
        %1219 = vmatpush1.msra.mxu0 0.0
        %1220 = vmatprep.subr.mxu0 0.0
        %1221 = vmatpush1.msra.mxu0 0.0
        %1222 = vmatprep.subr.mxu0 0.0
        %1223 = vmatpush1.msra.mxu0 0.0
        %1224 = vmatprep.mubr.f32.mxu0 0.0
        %1225 = vmatmul.mubr.f32.gmra.mrb[0].mxu0 %v1158
        %v1226 = vpop.f32.mrb[0].mxu0
        %v1227 = vadd.f32 0.0, %v1226
        %v1228 = vpop.f32.mrb[0].mxu0
        %1229 = vdwg.mxu0
        %vm1230 = vcmask 15360
        %v1232 = vsel %vm1230, %v1066, 0
        %vm1234 = vcmask 1041408
        %v1236 = vsel %vm1234, %v1145, 0
        %1238 = vmatprep.subr.mxu0 0.0
        %1239 = vmatpush1.msra.mxu0 %v1236
        %1240 = vmatprep.subr.mxu0 0.0
        %1241 = vmatpush1.msra.mxu0 0.0
        %1242 = vmatprep.subr.mxu0 0.0
        %1243 = vmatpush1.msra.mxu0 0.0
        %1244 = vmatprep.subr.mxu0 0.0
        %1245 = vmatpush1.msra.mxu0 0.0
        %1246 = vmatprep.subr.mxu0 0.0
        %1247 = vmatpush1.msra.mxu0 0.0
        %1248 = vmatprep.subr.mxu0 0.0
        %1249 = vmatpush1.msra.mxu0 0.0
        %1250 = vmatprep.subr.mxu0 0.0
        %1251 = vmatpush1.msra.mxu0 0.0
        %1252 = vmatprep.subr.mxu0 0.0
        %1253 = vmatpush1.msra.mxu0 0.0
        %1254 = vmatprep.subr.mxu0 0.0
        %1255 = vmatpush1.msra.mxu0 0.0
        %1256 = vmatprep.subr.mxu0 0.0
        %1257 = vmatpush1.msra.mxu0 0.0
        %1258 = vmatprep.subr.mxu0 0.0
        %1259 = vmatpush1.msra.mxu0 0.0
        %1260 = vmatprep.subr.mxu0 0.0
        %1261 = vmatpush1.msra.mxu0 0.0
        %1262 = vmatprep.subr.mxu0 0.0
        %1263 = vmatpush1.msra.mxu0 0.0
        %1264 = vmatprep.subr.mxu0 0.0
        %1265 = vmatpush1.msra.mxu0 0.0
        %1266 = vmatprep.subr.mxu0 0.0
        %1267 = vmatpush1.msra.mxu0 0.0
        %1268 = vmatprep.subr.mxu0 0.0
        %1269 = vmatpush1.msra.mxu0 0.0
        %1270 = vmatprep.subr.mxu0 0.0
        %1271 = vmatpush1.msra.mxu0 0.0
        %1272 = vmatprep.subr.mxu0 0.0
        %1273 = vmatpush1.msra.mxu0 0.0
        %1274 = vmatprep.subr.mxu0 0.0
        %1275 = vmatpush1.msra.mxu0 0.0
        %1276 = vmatprep.subr.mxu0 0.0
        %1277 = vmatpush1.msra.mxu0 0.0
        %1278 = vmatprep.subr.mxu0 0.0
        %1279 = vmatpush1.msra.mxu0 0.0
        %1280 = vmatprep.subr.mxu0 0.0
        %1281 = vmatpush1.msra.mxu0 0.0
        %1282 = vmatprep.subr.mxu0 0.0
        %1283 = vmatpush1.msra.mxu0 0.0
        %1284 = vmatprep.subr.mxu0 0.0
        %1285 = vmatpush1.msra.mxu0 0.0
        %1286 = vmatprep.subr.mxu0 0.0
        %1287 = vmatpush1.msra.mxu0 0.0
        %1288 = vmatprep.subr.mxu0 0.0
        %1289 = vmatpush1.msra.mxu0 0.0
        %1290 = vmatprep.subr.mxu0 0.0
        %1291 = vmatpush1.msra.mxu0 0.0
        %1292 = vmatprep.subr.mxu0 0.0
        %1293 = vmatpush1.msra.mxu0 0.0
        %1294 = vmatprep.subr.mxu0 0.0
        %1295 = vmatpush1.msra.mxu0 0.0
        %1296 = vmatprep.subr.mxu0 0.0
        %1297 = vmatpush1.msra.mxu0 0.0
        %1298 = vmatprep.subr.mxu0 0.0
        %1299 = vmatpush1.msra.mxu0 0.0
        %1300 = vmatprep.subr.mxu0 0.0
        %1301 = vmatpush1.msra.mxu0 0.0
        %1302 = vmatprep.mubr.f32.mxu0 0.0
        %1303 = vmatmul.mubr.f32.gmra.mrb[0].mxu0 %v1232
        %v1304 = vpop.f32.mrb[0].mxu0
        %v1305 = vadd.f32 %v1227, %v1304
        %v1306 = vpop.f32.mrb[0].mxu0
        %1307 = vdwg.mxu0
        %v1308 = vld [vmem:[#allocation19] sm:$0x1]
        %v1310 = vlaneseq
        %v1311 = vshrl.u32 %v1310, 7
        %v1312 = vsub.s32 0, %v1311
        %v1313 = vrot.slane %v1308, %v1312
        %v1315 = vadd.f32 %v1305, %v1313
        %v1316 = vld [vmem:[%s13] sm:$0xff]
        %v1317 = vld [vmem:[#allocation23] sm:$0xff]
        %v1318 = vld [vmem:[#allocation23 + $0x8] sm:$0xff]
        %v1319 = vld [vmem:[#allocation23 + $0x10] sm:$0xff]
        %v1320 = vld [vmem:[#allocation23 + $0x18] sm:$0xff]
        %v1321 = vld [vmem:[#allocation23 + $0x20] sm:$0xff]
        %v1322 = vld [vmem:[#allocation23 + $0x28] sm:$0xff]
        %v1323 = vld [vmem:[#allocation23 + $0x30] sm:$0xff]
        %v1324 = vld [vmem:[#allocation23 + $0x38] sm:$0xff]
        %v1325 = vld [vmem:[#allocation23 + $0x40] sm:$0xff]
        %v1326 = vld [vmem:[#allocation23 + $0x48] sm:$0xff]
        %v1327 = vld [vmem:[#allocation23 + $0x50] sm:$0xff]
        %v1328 = vld [vmem:[#allocation23 + $0x58] sm:$0xff]
        %v1329 = vld [vmem:[#allocation23 + $0x60] sm:$0xff]
        %v1330 = vld [vmem:[#allocation23 + $0x68] sm:$0xff]
        %v1331 = vld [vmem:[#allocation23 + $0x70] sm:$0xff]
        %v1332 = vld [vmem:[#allocation23 + $0x78] sm:$0xff]
        %v1333 = vld [vmem:[#allocation23 + $0x80] sm:$0xff]
        %v1334 = vld [vmem:[#allocation23 + $0x88] sm:$0xff]
        %v1335 = vld [vmem:[#allocation23 + $0x90] sm:$0xff]
        %v1336 = vld [vmem:[#allocation23 + $0x98] sm:$0xff]
        %v1337 = vld [vmem:[#allocation23 + $0xa0] sm:$0xff]
        %v1338 = vld [vmem:[#allocation23 + $0xa8] sm:$0xff]
        %v1339 = vld [vmem:[#allocation23 + $0xb0] sm:$0xff]
        %v1340 = vld [vmem:[#allocation23 + $0xb8] sm:$0xff]
        %v1341 = vld [vmem:[#allocation23 + $0xc0] sm:$0xff]
        %v1342 = vld [vmem:[#allocation23 + $0xc8] sm:$0xff]
        %v1343 = vld [vmem:[#allocation23 + $0xd0] sm:$0xff]
        %v1344 = vld [vmem:[#allocation23 + $0xd8] sm:$0xff]
        %v1345 = vld [vmem:[#allocation23 + $0xe0] sm:$0xff]
        %v1346 = vld [vmem:[#allocation23 + $0xe8] sm:$0xff]
        %v1347 = vld [vmem:[#allocation23 + $0xf0] sm:$0xff]
        %v1348 = vld [vmem:[#allocation23 + $0xf8] sm:$0xff]
        %1349 = vmatprep.subr.mxu0 %v1318
        %1350 = vmatpush1.msra.mxu0 %v1317
        %1351 = vmatprep.subr.mxu0 %v1320
        %1352 = vmatpush1.msra.mxu0 %v1319
        %1353 = vmatprep.subr.mxu0 %v1322
        %1354 = vmatpush1.msra.mxu0 %v1321
        %1355 = vmatprep.subr.mxu0 %v1324
        %1356 = vmatpush1.msra.mxu0 %v1323
        %1357 = vmatprep.subr.mxu0 %v1326
        %1358 = vmatpush1.msra.mxu0 %v1325
        %1359 = vmatprep.subr.mxu0 %v1328
        %1360 = vmatpush1.msra.mxu0 %v1327
        %1361 = vmatprep.subr.mxu0 %v1330
        %1362 = vmatpush1.msra.mxu0 %v1329
        %1363 = vmatprep.subr.mxu0 %v1332
        %1364 = vmatpush1.msra.mxu0 %v1331
        %1365 = vmatprep.subr.mxu0 %v1334
        %1366 = vmatpush1.msra.mxu0 %v1333
        %1367 = vmatprep.subr.mxu0 %v1336
        %1368 = vmatpush1.msra.mxu0 %v1335
        %1369 = vmatprep.subr.mxu0 %v1338
        %1370 = vmatpush1.msra.mxu0 %v1337
        %1371 = vmatprep.subr.mxu0 %v1340
        %1372 = vmatpush1.msra.mxu0 %v1339
        %1373 = vmatprep.subr.mxu0 %v1342
        %1374 = vmatpush1.msra.mxu0 %v1341
        %1375 = vmatprep.subr.mxu0 %v1344
        %1376 = vmatpush1.msra.mxu0 %v1343
        %1377 = vmatprep.subr.mxu0 %v1346
        %1378 = vmatpush1.msra.mxu0 %v1345
        %1379 = vmatprep.subr.mxu0 %v1348
        %1380 = vmatpush1.msra.mxu0 %v1347
        %1381 = vmatprep.subr.mxu0 0.0
        %1382 = vmatpush1.msra.mxu0 0.0
        %1383 = vmatprep.subr.mxu0 0.0
        %1384 = vmatpush1.msra.mxu0 0.0
        %1385 = vmatprep.subr.mxu0 0.0
        %1386 = vmatpush1.msra.mxu0 0.0
        %1387 = vmatprep.subr.mxu0 0.0
        %1388 = vmatpush1.msra.mxu0 0.0
        %1389 = vmatprep.subr.mxu0 0.0
        %1390 = vmatpush1.msra.mxu0 0.0
        %1391 = vmatprep.subr.mxu0 0.0
        %1392 = vmatpush1.msra.mxu0 0.0
        %1393 = vmatprep.subr.mxu0 0.0
        %1394 = vmatpush1.msra.mxu0 0.0
        %1395 = vmatprep.subr.mxu0 0.0
        %1396 = vmatpush1.msra.mxu0 0.0
        %1397 = vmatprep.subr.mxu0 0.0
        %1398 = vmatpush1.msra.mxu0 0.0
        %1399 = vmatprep.subr.mxu0 0.0
        %1400 = vmatpush1.msra.mxu0 0.0
        %1401 = vmatprep.subr.mxu0 0.0
        %1402 = vmatpush1.msra.mxu0 0.0
        %1403 = vmatprep.subr.mxu0 0.0
        %1404 = vmatpush1.msra.mxu0 0.0
        %1405 = vmatprep.subr.mxu0 0.0
        %1406 = vmatpush1.msra.mxu0 0.0
        %1407 = vmatprep.subr.mxu0 0.0
        %1408 = vmatpush1.msra.mxu0 0.0
        %1409 = vmatprep.subr.mxu0 0.0
        %1410 = vmatpush1.msra.mxu0 0.0
        %1411 = vmatprep.subr.mxu0 0.0
        %1412 = vmatpush1.msra.mxu0 0.0
        %1413 = vmatprep.mubr.f32.mxu0 0.0
        %1414 = vmatmul.mubr.f32.gmra.mrb[0].mxu0 %v1315
        %v1415 = vpop.f32.mrb[0].mxu0
        %v1416 = vadd.f32 0.0, %v1415
        %v1417 = vpop.f32.mrb[0].mxu0
        %v1418 = vadd.f32 0.0, %v1417
        %1419 = vdwg.mxu0
        %v1420 = vld [vmem:[%s828] sm:$0xff]
        %v1421 = vld [vmem:[#allocation11] sm:$0xff]
        %v1422 = vld [vmem:[#allocation11 + $0x8] sm:$0xff]
        %v1423 = vld [vmem:[#allocation11 + $0x10] sm:$0xff]
        %v1424 = vld [vmem:[#allocation11 + $0x18] sm:$0xff]
        %v1425 = vld [vmem:[#allocation11 + $0x20] sm:$0xff]
        %v1426 = vld [vmem:[#allocation11 + $0x28] sm:$0xff]
        %v1427 = vld [vmem:[#allocation11 + $0x30] sm:$0xff]
        %v1428 = vld [vmem:[#allocation11 + $0x38] sm:$0xff]
        %v1429 = vld [vmem:[#allocation11 + $0x40] sm:$0xff]
        %v1430 = vld [vmem:[#allocation11 + $0x48] sm:$0xff]
        %v1431 = vld [vmem:[#allocation11 + $0x50] sm:$0xff]
        %v1432 = vld [vmem:[#allocation11 + $0x58] sm:$0xff]
        %v1433 = vld [vmem:[#allocation11 + $0x60] sm:$0xff]
        %v1434 = vld [vmem:[#allocation11 + $0x68] sm:$0xff]
        %v1435 = vld [vmem:[#allocation11 + $0x70] sm:$0xff]
        %v1436 = vld [vmem:[#allocation11 + $0x78] sm:$0xff]
        %v1438 = vsel %vm992, %v1420, 0
        %1440 = vmatprep.subr.mxu0 %v1422
        %1441 = vmatpush1.msra.mxu0 %v1421
        %1442 = vmatprep.subr.mxu0 %v1424
        %1443 = vmatpush1.msra.mxu0 %v1423
        %1444 = vmatprep.subr.mxu0 %v1426
        %1445 = vmatpush1.msra.mxu0 %v1425
        %1446 = vmatprep.subr.mxu0 %v1428
        %1447 = vmatpush1.msra.mxu0 %v1427
        %1448 = vmatprep.subr.mxu0 %v1430
        %1449 = vmatpush1.msra.mxu0 %v1429
        %1450 = vmatprep.subr.mxu0 %v1432
        %1451 = vmatpush1.msra.mxu0 %v1431
        %1452 = vmatprep.subr.mxu0 %v1434
        %1453 = vmatpush1.msra.mxu0 %v1433
        %1454 = vmatprep.subr.mxu0 %v1436
        %1455 = vmatpush1.msra.mxu0 %v1435
        %1456 = vmatprep.subr.mxu0 0.0
        %1457 = vmatpush1.msra.mxu0 0.0
        %1458 = vmatprep.subr.mxu0 0.0
        %1459 = vmatpush1.msra.mxu0 0.0
        %1460 = vmatprep.subr.mxu0 0.0
        %1461 = vmatpush1.msra.mxu0 0.0
        %1462 = vmatprep.subr.mxu0 0.0
        %1463 = vmatpush1.msra.mxu0 0.0
        %1464 = vmatprep.subr.mxu0 0.0
        %1465 = vmatpush1.msra.mxu0 0.0
        %1466 = vmatprep.subr.mxu0 0.0
        %1467 = vmatpush1.msra.mxu0 0.0
        %1468 = vmatprep.subr.mxu0 0.0
        %1469 = vmatpush1.msra.mxu0 0.0
        %1470 = vmatprep.subr.mxu0 0.0
        %1471 = vmatpush1.msra.mxu0 0.0
        %1472 = vmatprep.subr.mxu0 0.0
        %1473 = vmatpush1.msra.mxu0 0.0
        %1474 = vmatprep.subr.mxu0 0.0
        %1475 = vmatpush1.msra.mxu0 0.0
        %1476 = vmatprep.subr.mxu0 0.0
        %1477 = vmatpush1.msra.mxu0 0.0
        %1478 = vmatprep.subr.mxu0 0.0
        %1479 = vmatpush1.msra.mxu0 0.0
        %1480 = vmatprep.subr.mxu0 0.0
        %1481 = vmatpush1.msra.mxu0 0.0
        %1482 = vmatprep.subr.mxu0 0.0
        %1483 = vmatpush1.msra.mxu0 0.0
        %1484 = vmatprep.subr.mxu0 0.0
        %1485 = vmatpush1.msra.mxu0 0.0
        %1486 = vmatprep.subr.mxu0 0.0
        %1487 = vmatpush1.msra.mxu0 0.0
        %1488 = vmatprep.subr.mxu0 0.0
        %1489 = vmatpush1.msra.mxu0 0.0
        %1490 = vmatprep.subr.mxu0 0.0
        %1491 = vmatpush1.msra.mxu0 0.0
        %1492 = vmatprep.subr.mxu0 0.0
        %1493 = vmatpush1.msra.mxu0 0.0
        %1494 = vmatprep.subr.mxu0 0.0
        %1495 = vmatpush1.msra.mxu0 0.0
        %1496 = vmatprep.subr.mxu0 0.0
        %1497 = vmatpush1.msra.mxu0 0.0
        %1498 = vmatprep.subr.mxu0 0.0
        %1499 = vmatpush1.msra.mxu0 0.0
        %1500 = vmatprep.subr.mxu0 0.0
        %1501 = vmatpush1.msra.mxu0 0.0
        %1502 = vmatprep.subr.mxu0 0.0
        %1503 = vmatpush1.msra.mxu0 0.0
        %1504 = vmatprep.mubr.f32.mxu0 0.0
        %1505 = vmatmul.mubr.f32.gmra.mrb[0].mxu0 %v1438
        %v1506 = vpop.f32.mrb[0].mxu0
        %v1507 = vadd.f32 0.0, %v1506
        %v1508 = vpop.f32.mrb[0].mxu0
        %v1509 = vadd.f32 0.0, %v1508
        %1510 = vdwg.mxu0
        %vm1511 = vcmask 31744
        %v1513 = vsel %vm1511, %v1316, 0
        %vm1515 = vcmask 1043456
        %v1517 = vsel %vm1515, %v1416, 0
        %v1520 = vsel %vm1515, %v1418, 0
        %1522 = vmatprep.subr.mxu0 %v1520
        %1523 = vmatpush1.msra.mxu0 %v1517
        %1524 = vmatprep.subr.mxu0 0.0
        %1525 = vmatpush1.msra.mxu0 0.0
        %1526 = vmatprep.subr.mxu0 0.0
        %1527 = vmatpush1.msra.mxu0 0.0
        %1528 = vmatprep.subr.mxu0 0.0
        %1529 = vmatpush1.msra.mxu0 0.0
        %1530 = vmatprep.subr.mxu0 0.0
        %1531 = vmatpush1.msra.mxu0 0.0
        %1532 = vmatprep.subr.mxu0 0.0
        %1533 = vmatpush1.msra.mxu0 0.0
        %1534 = vmatprep.subr.mxu0 0.0
        %1535 = vmatpush1.msra.mxu0 0.0
        %1536 = vmatprep.subr.mxu0 0.0
        %1537 = vmatpush1.msra.mxu0 0.0
        %1538 = vmatprep.subr.mxu0 0.0
        %1539 = vmatpush1.msra.mxu0 0.0
        %1540 = vmatprep.subr.mxu0 0.0
        %1541 = vmatpush1.msra.mxu0 0.0
        %1542 = vmatprep.subr.mxu0 0.0
        %1543 = vmatpush1.msra.mxu0 0.0
        %1544 = vmatprep.subr.mxu0 0.0
        %1545 = vmatpush1.msra.mxu0 0.0
        %1546 = vmatprep.subr.mxu0 0.0
        %1547 = vmatpush1.msra.mxu0 0.0
        %1548 = vmatprep.subr.mxu0 0.0
        %1549 = vmatpush1.msra.mxu0 0.0
        %1550 = vmatprep.subr.mxu0 0.0
        %1551 = vmatpush1.msra.mxu0 0.0
        %1552 = vmatprep.subr.mxu0 0.0
        %1553 = vmatpush1.msra.mxu0 0.0
        %1554 = vmatprep.subr.mxu0 0.0
        %1555 = vmatpush1.msra.mxu0 0.0
        %1556 = vmatprep.subr.mxu0 0.0
        %1557 = vmatpush1.msra.mxu0 0.0
        %1558 = vmatprep.subr.mxu0 0.0
        %1559 = vmatpush1.msra.mxu0 0.0
        %1560 = vmatprep.subr.mxu0 0.0
        %1561 = vmatpush1.msra.mxu0 0.0
        %1562 = vmatprep.subr.mxu0 0.0
        %1563 = vmatpush1.msra.mxu0 0.0
        %1564 = vmatprep.subr.mxu0 0.0
        %1565 = vmatpush1.msra.mxu0 0.0
        %1566 = vmatprep.subr.mxu0 0.0
        %1567 = vmatpush1.msra.mxu0 0.0
        %1568 = vmatprep.subr.mxu0 0.0
        %1569 = vmatpush1.msra.mxu0 0.0
        %1570 = vmatprep.subr.mxu0 0.0
        %1571 = vmatpush1.msra.mxu0 0.0
        %1572 = vmatprep.subr.mxu0 0.0
        %1573 = vmatpush1.msra.mxu0 0.0
        %1574 = vmatprep.subr.mxu0 0.0
        %1575 = vmatpush1.msra.mxu0 0.0
        %1576 = vmatprep.subr.mxu0 0.0
        %1577 = vmatpush1.msra.mxu0 0.0
        %1578 = vmatprep.subr.mxu0 0.0
        %1579 = vmatpush1.msra.mxu0 0.0
        %1580 = vmatprep.subr.mxu0 0.0
        %1581 = vmatpush1.msra.mxu0 0.0
        %1582 = vmatprep.subr.mxu0 0.0
        %1583 = vmatpush1.msra.mxu0 0.0
        %1584 = vmatprep.subr.mxu0 0.0
        %1585 = vmatpush1.msra.mxu0 0.0
        %1586 = vmatprep.mubr.f32.mxu0 0.0
        %1587 = vmatmul.mubr.f32.gmra.mrb[0].mxu0 %v1513
        %v1588 = vpop.f32.mrb[0].mxu0
        %v1589 = vadd.f32 %v1507, %v1588
        %v1590 = vpop.f32.mrb[0].mxu0
        %v1591 = vadd.f32 %v1509, %v1590
        %1592 = vdwg.mxu0
        %v1593 = vld [vmem:[#allocation17] sm:$0x3]
        %v1595 = vlaneseq
        %v1596 = vshrl.u32 %v1595, 7
        %v1597 = vsub.s32 0, %v1596
        %v1598 = vrot.slane %v1593, %v1597
        %v1599 = vlaneseq
        %v1600 = vshrl.u32 %v1599, 7
        %v1601 = vsub.s32 1, %v1600
        %v1602 = vrot.slane %v1593, %v1601
        %v1605 = vadd.f32 %v1589, %v1598
        %v1606 = vadd.f32 %v1591, %v1602
        %v1607 = vld [vmem:[%s14] sm:$0xff]
        %v1608 = vld [vmem:[%s14 + $0x8] sm:$0xff]
        %v1609 = vld [vmem:[#allocation25] sm:$0xff]
        %v1610 = vld [vmem:[#allocation25 + $0x8] sm:$0xff]
        %v1611 = vld [vmem:[#allocation25 + $0x10] sm:$0xff]
        %v1612 = vld [vmem:[#allocation25 + $0x18] sm:$0xff]
        %v1613 = vld [vmem:[#allocation25 + $0x20] sm:$0xff]
        %v1614 = vld [vmem:[#allocation25 + $0x28] sm:$0xff]
        %v1615 = vld [vmem:[#allocation25 + $0x30] sm:$0xff]
        %v1616 = vld [vmem:[#allocation25 + $0x38] sm:$0xff]
        %v1617 = vld [vmem:[#allocation25 + $0x40] sm:$0xff]
        %v1618 = vld [vmem:[#allocation25 + $0x48] sm:$0xff]
        %v1619 = vld [vmem:[#allocation25 + $0x50] sm:$0xff]
        %v1620 = vld [vmem:[#allocation25 + $0x58] sm:$0xff]
        %v1621 = vld [vmem:[#allocation25 + $0x60] sm:$0xff]
        %v1622 = vld [vmem:[#allocation25 + $0x68] sm:$0xff]
        %v1623 = vld [vmem:[#allocation25 + $0x70] sm:$0xff]
        %v1624 = vld [vmem:[#allocation25 + $0x78] sm:$0xff]
        %v1625 = vld [vmem:[#allocation25 + $0x80] sm:$0xff]
        %v1626 = vld [vmem:[#allocation25 + $0x88] sm:$0xff]
        %v1627 = vld [vmem:[#allocation25 + $0x90] sm:$0xff]
        %v1628 = vld [vmem:[#allocation25 + $0x98] sm:$0xff]
        %v1629 = vld [vmem:[#allocation25 + $0xa0] sm:$0xff]
        %v1630 = vld [vmem:[#allocation25 + $0xa8] sm:$0xff]
        %v1631 = vld [vmem:[#allocation25 + $0xb0] sm:$0xff]
        %v1632 = vld [vmem:[#allocation25 + $0xb8] sm:$0xff]
        %v1633 = vld [vmem:[#allocation25 + $0xc0] sm:$0xff]
        %v1634 = vld [vmem:[#allocation25 + $0xc8] sm:$0xff]
        %v1635 = vld [vmem:[#allocation25 + $0xd0] sm:$0xff]
        %v1636 = vld [vmem:[#allocation25 + $0xd8] sm:$0xff]
        %v1637 = vld [vmem:[#allocation25 + $0xe0] sm:$0xff]
        %v1638 = vld [vmem:[#allocation25 + $0xe8] sm:$0xff]
        %v1639 = vld [vmem:[#allocation25 + $0xf0] sm:$0xff]
        %v1640 = vld [vmem:[#allocation25 + $0xf8] sm:$0xff]
        %v1641 = vld [vmem:[#allocation25 + $0x100] sm:$0xff]
        %v1642 = vld [vmem:[#allocation25 + $0x108] sm:$0xff]
        %v1643 = vld [vmem:[#allocation25 + $0x110] sm:$0xff]
        %v1644 = vld [vmem:[#allocation25 + $0x118] sm:$0xff]
        %v1645 = vld [vmem:[#allocation25 + $0x120] sm:$0xff]
        %v1646 = vld [vmem:[#allocation25 + $0x128] sm:$0xff]
        %v1647 = vld [vmem:[#allocation25 + $0x130] sm:$0xff]
        %v1648 = vld [vmem:[#allocation25 + $0x138] sm:$0xff]
        %v1649 = vld [vmem:[#allocation25 + $0x140] sm:$0xff]
        %v1650 = vld [vmem:[#allocation25 + $0x148] sm:$0xff]
        %v1651 = vld [vmem:[#allocation25 + $0x150] sm:$0xff]
        %v1652 = vld [vmem:[#allocation25 + $0x158] sm:$0xff]
        %v1653 = vld [vmem:[#allocation25 + $0x160] sm:$0xff]
        %v1654 = vld [vmem:[#allocation25 + $0x168] sm:$0xff]
        %v1655 = vld [vmem:[#allocation25 + $0x170] sm:$0xff]
        %v1656 = vld [vmem:[#allocation25 + $0x178] sm:$0xff]
        %v1657 = vld [vmem:[#allocation25 + $0x180] sm:$0xff]
        %v1658 = vld [vmem:[#allocation25 + $0x188] sm:$0xff]
        %v1659 = vld [vmem:[#allocation25 + $0x190] sm:$0xff]
        %v1660 = vld [vmem:[#allocation25 + $0x198] sm:$0xff]
        %v1661 = vld [vmem:[#allocation25 + $0x1a0] sm:$0xff]
        %v1662 = vld [vmem:[#allocation25 + $0x1a8] sm:$0xff]
        %v1663 = vld [vmem:[#allocation25 + $0x1b0] sm:$0xff]
        %v1664 = vld [vmem:[#allocation25 + $0x1b8] sm:$0xff]
        %v1665 = vld [vmem:[#allocation25 + $0x1c0] sm:$0xff]
        %v1666 = vld [vmem:[#allocation25 + $0x1c8] sm:$0xff]
        %v1667 = vld [vmem:[#allocation25 + $0x1d0] sm:$0xff]
        %v1668 = vld [vmem:[#allocation25 + $0x1d8] sm:$0xff]
        %v1669 = vld [vmem:[#allocation25 + $0x1e0] sm:$0xff]
        %v1670 = vld [vmem:[#allocation25 + $0x1e8] sm:$0xff]
        %v1671 = vld [vmem:[#allocation25 + $0x1f0] sm:$0xff]
        %v1672 = vld [vmem:[#allocation25 + $0x1f8] sm:$0xff]
        %v1673 = vld [vmem:[#allocation25 + $0x200] sm:$0xff]
        %v1674 = vld [vmem:[#allocation25 + $0x208] sm:$0xff]
        %v1675 = vld [vmem:[#allocation25 + $0x210] sm:$0xff]
        %v1676 = vld [vmem:[#allocation25 + $0x218] sm:$0xff]
        %v1677 = vld [vmem:[#allocation25 + $0x220] sm:$0xff]
        %v1678 = vld [vmem:[#allocation25 + $0x228] sm:$0xff]
        %v1679 = vld [vmem:[#allocation25 + $0x230] sm:$0xff]
        %v1680 = vld [vmem:[#allocation25 + $0x238] sm:$0xff]
        %v1681 = vld [vmem:[#allocation25 + $0x240] sm:$0xff]
        %v1682 = vld [vmem:[#allocation25 + $0x248] sm:$0xff]
        %v1683 = vld [vmem:[#allocation25 + $0x250] sm:$0xff]
        %v1684 = vld [vmem:[#allocation25 + $0x258] sm:$0xff]
        %v1685 = vld [vmem:[#allocation25 + $0x260] sm:$0xff]
        %v1686 = vld [vmem:[#allocation25 + $0x268] sm:$0xff]
        %v1687 = vld [vmem:[#allocation25 + $0x270] sm:$0xff]
        %v1688 = vld [vmem:[#allocation25 + $0x278] sm:$0xff]
        %v1689 = vld [vmem:[#allocation25 + $0x280] sm:$0xff]
        %v1690 = vld [vmem:[#allocation25 + $0x288] sm:$0xff]
        %v1691 = vld [vmem:[#allocation25 + $0x290] sm:$0xff]
        %v1692 = vld [vmem:[#allocation25 + $0x298] sm:$0xff]
        %v1693 = vld [vmem:[#allocation25 + $0x2a0] sm:$0xff]
        %v1694 = vld [vmem:[#allocation25 + $0x2a8] sm:$0xff]
        %v1695 = vld [vmem:[#allocation25 + $0x2b0] sm:$0xff]
        %v1696 = vld [vmem:[#allocation25 + $0x2b8] sm:$0xff]
        %v1697 = vld [vmem:[#allocation25 + $0x2c0] sm:$0xff]
        %v1698 = vld [vmem:[#allocation25 + $0x2c8] sm:$0xff]
        %v1699 = vld [vmem:[#allocation25 + $0x2d0] sm:$0xff]
        %v1700 = vld [vmem:[#allocation25 + $0x2d8] sm:$0xff]
        %v1701 = vld [vmem:[#allocation25 + $0x2e0] sm:$0xff]
        %v1702 = vld [vmem:[#allocation25 + $0x2e8] sm:$0xff]
        %v1703 = vld [vmem:[#allocation25 + $0x2f0] sm:$0xff]
        %v1704 = vld [vmem:[#allocation25 + $0x2f8] sm:$0xff]
        %v1705 = vld [vmem:[#allocation25 + $0x300] sm:$0xff]
        %v1706 = vld [vmem:[#allocation25 + $0x308] sm:$0xff]
        %v1707 = vld [vmem:[#allocation25 + $0x310] sm:$0xff]
        %v1708 = vld [vmem:[#allocation25 + $0x318] sm:$0xff]
        %v1709 = vld [vmem:[#allocation25 + $0x320] sm:$0xff]
        %v1710 = vld [vmem:[#allocation25 + $0x328] sm:$0xff]
        %v1711 = vld [vmem:[#allocation25 + $0x330] sm:$0xff]
        %v1712 = vld [vmem:[#allocation25 + $0x338] sm:$0xff]
        %v1713 = vld [vmem:[#allocation25 + $0x340] sm:$0xff]
        %v1714 = vld [vmem:[#allocation25 + $0x348] sm:$0xff]
        %v1715 = vld [vmem:[#allocation25 + $0x350] sm:$0xff]
        %v1716 = vld [vmem:[#allocation25 + $0x358] sm:$0xff]
        %v1717 = vld [vmem:[#allocation25 + $0x360] sm:$0xff]
        %v1718 = vld [vmem:[#allocation25 + $0x368] sm:$0xff]
        %v1719 = vld [vmem:[#allocation25 + $0x370] sm:$0xff]
        %v1720 = vld [vmem:[#allocation25 + $0x378] sm:$0xff]
        %v1721 = vld [vmem:[#allocation25 + $0x380] sm:$0xff]
        %v1722 = vld [vmem:[#allocation25 + $0x388] sm:$0xff]
        %v1723 = vld [vmem:[#allocation25 + $0x390] sm:$0xff]
        %v1724 = vld [vmem:[#allocation25 + $0x398] sm:$0xff]
        %v1725 = vld [vmem:[#allocation25 + $0x3a0] sm:$0xff]
        %v1726 = vld [vmem:[#allocation25 + $0x3a8] sm:$0xff]
        %v1727 = vld [vmem:[#allocation25 + $0x3b0] sm:$0xff]
        %v1728 = vld [vmem:[#allocation25 + $0x3b8] sm:$0xff]
        %v1729 = vld [vmem:[#allocation25 + $0x3c0] sm:$0xff]
        %v1730 = vld [vmem:[#allocation25 + $0x3c8] sm:$0xff]
        %v1731 = vld [vmem:[#allocation25 + $0x3d0] sm:$0xff]
        %v1732 = vld [vmem:[#allocation25 + $0x3d8] sm:$0xff]
        %v1733 = vld [vmem:[#allocation25 + $0x3e0] sm:$0xff]
        %v1734 = vld [vmem:[#allocation25 + $0x3e8] sm:$0xff]
        %v1735 = vld [vmem:[#allocation25 + $0x3f0] sm:$0xff]
        %v1736 = vld [vmem:[#allocation25 + $0x3f8] sm:$0xff]
        %1737 = vmatprep.subr.mxu0 %v1610
        %1738 = vmatpush1.msra.mxu0 %v1609
        %1739 = vmatprep.subr.mxu0 %v1614
        %1740 = vmatpush1.msra.mxu0 %v1613
        %1741 = vmatprep.subr.mxu0 %v1618
        %1742 = vmatpush1.msra.mxu0 %v1617
        %1743 = vmatprep.subr.mxu0 %v1622
        %1744 = vmatpush1.msra.mxu0 %v1621
        %1745 = vmatprep.subr.mxu0 %v1626
        %1746 = vmatpush1.msra.mxu0 %v1625
        %1747 = vmatprep.subr.mxu0 %v1630
        %1748 = vmatpush1.msra.mxu0 %v1629
        %1749 = vmatprep.subr.mxu0 %v1634
        %1750 = vmatpush1.msra.mxu0 %v1633
        %1751 = vmatprep.subr.mxu0 %v1638
        %1752 = vmatpush1.msra.mxu0 %v1637
        %1753 = vmatprep.subr.mxu0 %v1642
        %1754 = vmatpush1.msra.mxu0 %v1641
        %1755 = vmatprep.subr.mxu0 %v1646
        %1756 = vmatpush1.msra.mxu0 %v1645
        %1757 = vmatprep.subr.mxu0 %v1650
        %1758 = vmatpush1.msra.mxu0 %v1649
        %1759 = vmatprep.subr.mxu0 %v1654
        %1760 = vmatpush1.msra.mxu0 %v1653
        %1761 = vmatprep.subr.mxu0 %v1658
        %1762 = vmatpush1.msra.mxu0 %v1657
        %1763 = vmatprep.subr.mxu0 %v1662
        %1764 = vmatpush1.msra.mxu0 %v1661
        %1765 = vmatprep.subr.mxu0 %v1666
        %1766 = vmatpush1.msra.mxu0 %v1665
        %1767 = vmatprep.subr.mxu0 %v1670
        %1768 = vmatpush1.msra.mxu0 %v1669
        %1769 = vmatprep.subr.mxu0 %v1674
        %1770 = vmatpush1.msra.mxu0 %v1673
        %1771 = vmatprep.subr.mxu0 %v1678
        %1772 = vmatpush1.msra.mxu0 %v1677
        %1773 = vmatprep.subr.mxu0 %v1682
        %1774 = vmatpush1.msra.mxu0 %v1681
        %1775 = vmatprep.subr.mxu0 %v1686
        %1776 = vmatpush1.msra.mxu0 %v1685
        %1777 = vmatprep.subr.mxu0 %v1690
        %1778 = vmatpush1.msra.mxu0 %v1689
        %1779 = vmatprep.subr.mxu0 %v1694
        %1780 = vmatpush1.msra.mxu0 %v1693
        %1781 = vmatprep.subr.mxu0 %v1698
        %1782 = vmatpush1.msra.mxu0 %v1697
        %1783 = vmatprep.subr.mxu0 %v1702
        %1784 = vmatpush1.msra.mxu0 %v1701
        %1785 = vmatprep.subr.mxu0 %v1706
        %1786 = vmatpush1.msra.mxu0 %v1705
        %1787 = vmatprep.subr.mxu0 %v1710
        %1788 = vmatpush1.msra.mxu0 %v1709
        %1789 = vmatprep.subr.mxu0 %v1714
        %1790 = vmatpush1.msra.mxu0 %v1713
        %1791 = vmatprep.subr.mxu0 %v1718
        %1792 = vmatpush1.msra.mxu0 %v1717
        %1793 = vmatprep.subr.mxu0 %v1722
        %1794 = vmatpush1.msra.mxu0 %v1721
        %1795 = vmatprep.subr.mxu0 %v1726
        %1796 = vmatpush1.msra.mxu0 %v1725
        %1797 = vmatprep.subr.mxu0 %v1730
        %1798 = vmatpush1.msra.mxu0 %v1729
        %1799 = vmatprep.subr.mxu0 %v1734
        %1800 = vmatpush1.msra.mxu0 %v1733
        %1801 = vmatprep.mubr.f32.mxu0 %v1606
        %1802 = vmatmul.mubr.f32.gmra.mrb[0].mxu0 %v1605
        %v1803 = vpop.f32.mrb[0].mxu0
        %v1804 = vadd.f32 0.0, %v1803
        %v1805 = vpop.f32.mrb[0].mxu0
        %v1806 = vadd.f32 0.0, %v1805
        %1807 = vdwg.mxu0
        %1808 = vmatprep.subr.mxu0 %v1612
        %1809 = vmatpush1.msra.mxu0 %v1611
        %1810 = vmatprep.subr.mxu0 %v1616
        %1811 = vmatpush1.msra.mxu0 %v1615
        %1812 = vmatprep.subr.mxu0 %v1620
        %1813 = vmatpush1.msra.mxu0 %v1619
        %1814 = vmatprep.subr.mxu0 %v1624
        %1815 = vmatpush1.msra.mxu0 %v1623
        %1816 = vmatprep.subr.mxu0 %v1628
        %1817 = vmatpush1.msra.mxu0 %v1627
        %1818 = vmatprep.subr.mxu0 %v1632
        %1819 = vmatpush1.msra.mxu0 %v1631
        %1820 = vmatprep.subr.mxu0 %v1636
        %1821 = vmatpush1.msra.mxu0 %v1635
        %1822 = vmatprep.subr.mxu0 %v1640
        %1823 = vmatpush1.msra.mxu0 %v1639
        %1824 = vmatprep.subr.mxu0 %v1644
        %1825 = vmatpush1.msra.mxu0 %v1643
        %1826 = vmatprep.subr.mxu0 %v1648
        %1827 = vmatpush1.msra.mxu0 %v1647
        %1828 = vmatprep.subr.mxu0 %v1652
        %1829 = vmatpush1.msra.mxu0 %v1651
        %1830 = vmatprep.subr.mxu0 %v1656
        %1831 = vmatpush1.msra.mxu0 %v1655
        %1832 = vmatprep.subr.mxu0 %v1660
        %1833 = vmatpush1.msra.mxu0 %v1659
        %1834 = vmatprep.subr.mxu0 %v1664
        %1835 = vmatpush1.msra.mxu0 %v1663
        %1836 = vmatprep.subr.mxu0 %v1668
        %1837 = vmatpush1.msra.mxu0 %v1667
        %1838 = vmatprep.subr.mxu0 %v1672
        %1839 = vmatpush1.msra.mxu0 %v1671
        %1840 = vmatprep.subr.mxu0 %v1676
        %1841 = vmatpush1.msra.mxu0 %v1675
        %1842 = vmatprep.subr.mxu0 %v1680
        %1843 = vmatpush1.msra.mxu0 %v1679
        %1844 = vmatprep.subr.mxu0 %v1684
        %1845 = vmatpush1.msra.mxu0 %v1683
        %1846 = vmatprep.subr.mxu0 %v1688
        %1847 = vmatpush1.msra.mxu0 %v1687
        %1848 = vmatprep.subr.mxu0 %v1692
        %1849 = vmatpush1.msra.mxu0 %v1691
        %1850 = vmatprep.subr.mxu0 %v1696
        %1851 = vmatpush1.msra.mxu0 %v1695
        %1852 = vmatprep.subr.mxu0 %v1700
        %1853 = vmatpush1.msra.mxu0 %v1699
        %1854 = vmatprep.subr.mxu0 %v1704
        %1855 = vmatpush1.msra.mxu0 %v1703
        %1856 = vmatprep.subr.mxu0 %v1708
        %1857 = vmatpush1.msra.mxu0 %v1707
        %1858 = vmatprep.subr.mxu0 %v1712
        %1859 = vmatpush1.msra.mxu0 %v1711
        %1860 = vmatprep.subr.mxu0 %v1716
        %1861 = vmatpush1.msra.mxu0 %v1715
        %1862 = vmatprep.subr.mxu0 %v1720
        %1863 = vmatpush1.msra.mxu0 %v1719
        %1864 = vmatprep.subr.mxu0 %v1724
        %1865 = vmatpush1.msra.mxu0 %v1723
        %1866 = vmatprep.subr.mxu0 %v1728
        %1867 = vmatpush1.msra.mxu0 %v1727
        %1868 = vmatprep.subr.mxu0 %v1732
        %1869 = vmatpush1.msra.mxu0 %v1731
        %1870 = vmatprep.subr.mxu0 %v1736
        %1871 = vmatpush1.msra.mxu0 %v1735
        %1872 = vmatprep.mubr.f32.mxu0 %v1606
        %1873 = vmatmul.mubr.f32.gmra.mrb[0].mxu0 %v1605
        %v1874 = vpop.f32.mrb[0].mxu0
        %v1875 = vadd.f32 0.0, %v1874
        %v1876 = vpop.f32.mrb[0].mxu0
        %v1877 = vadd.f32 0.0, %v1876
        %1878 = vdwg.mxu0
        %v1879 = vld [vmem:[%s819] sm:$0xff]
        %v1880 = vld [vmem:[%s819 + $0x8] sm:$0xff]
        %v1881 = vld [vmem:[#allocation10] sm:$0xff]
        %v1882 = vld [vmem:[#allocation10 + $0x8] sm:$0xff]
        %v1883 = vld [vmem:[#allocation10 + $0x10] sm:$0xff]
        %v1884 = vld [vmem:[#allocation10 + $0x18] sm:$0xff]
        %v1885 = vld [vmem:[#allocation10 + $0x20] sm:$0xff]
        %v1886 = vld [vmem:[#allocation10 + $0x28] sm:$0xff]
        %v1887 = vld [vmem:[#allocation10 + $0x30] sm:$0xff]
        %v1888 = vld [vmem:[#allocation10 + $0x38] sm:$0xff]
        %v1889 = vld [vmem:[#allocation10 + $0x40] sm:$0xff]
        %v1890 = vld [vmem:[#allocation10 + $0x48] sm:$0xff]
        %v1891 = vld [vmem:[#allocation10 + $0x50] sm:$0xff]
        %v1892 = vld [vmem:[#allocation10 + $0x58] sm:$0xff]
        %v1893 = vld [vmem:[#allocation10 + $0x60] sm:$0xff]
        %v1894 = vld [vmem:[#allocation10 + $0x68] sm:$0xff]
        %v1895 = vld [vmem:[#allocation10 + $0x70] sm:$0xff]
        %v1896 = vld [vmem:[#allocation10 + $0x78] sm:$0xff]
        %v1897 = vld [vmem:[#allocation10 + $0x80] sm:$0xff]
        %v1898 = vld [vmem:[#allocation10 + $0x88] sm:$0xff]
        %v1899 = vld [vmem:[#allocation10 + $0x90] sm:$0xff]
        %v1900 = vld [vmem:[#allocation10 + $0x98] sm:$0xff]
        %v1901 = vld [vmem:[#allocation10 + $0xa0] sm:$0xff]
        %v1902 = vld [vmem:[#allocation10 + $0xa8] sm:$0xff]
        %v1903 = vld [vmem:[#allocation10 + $0xb0] sm:$0xff]
        %v1904 = vld [vmem:[#allocation10 + $0xb8] sm:$0xff]
        %v1905 = vld [vmem:[#allocation10 + $0xc0] sm:$0xff]
        %v1906 = vld [vmem:[#allocation10 + $0xc8] sm:$0xff]
        %v1907 = vld [vmem:[#allocation10 + $0xd0] sm:$0xff]
        %v1908 = vld [vmem:[#allocation10 + $0xd8] sm:$0xff]
        %v1909 = vld [vmem:[#allocation10 + $0xe0] sm:$0xff]
        %v1910 = vld [vmem:[#allocation10 + $0xe8] sm:$0xff]
        %v1911 = vld [vmem:[#allocation10 + $0xf0] sm:$0xff]
        %v1912 = vld [vmem:[#allocation10 + $0xf8] sm:$0xff]
        %v1914 = vsel %vm992, %v1879, 0
        %v1917 = vsel %vm992, %v1880, 0
        %1919 = vmatprep.subr.mxu0 %v1882
        %1920 = vmatpush1.msra.mxu0 %v1881
        %1921 = vmatprep.subr.mxu0 %v1886
        %1922 = vmatpush1.msra.mxu0 %v1885
        %1923 = vmatprep.subr.mxu0 %v1890
        %1924 = vmatpush1.msra.mxu0 %v1889
        %1925 = vmatprep.subr.mxu0 %v1894
        %1926 = vmatpush1.msra.mxu0 %v1893
        %1927 = vmatprep.subr.mxu0 %v1898
        %1928 = vmatpush1.msra.mxu0 %v1897
        %1929 = vmatprep.subr.mxu0 %v1902
        %1930 = vmatpush1.msra.mxu0 %v1901
        %1931 = vmatprep.subr.mxu0 %v1906
        %1932 = vmatpush1.msra.mxu0 %v1905
        %1933 = vmatprep.subr.mxu0 %v1910
        %1934 = vmatpush1.msra.mxu0 %v1909
        %1935 = vmatprep.subr.mxu0 0.0
        %1936 = vmatpush1.msra.mxu0 0.0
        %1937 = vmatprep.subr.mxu0 0.0
        %1938 = vmatpush1.msra.mxu0 0.0
        %1939 = vmatprep.subr.mxu0 0.0
        %1940 = vmatpush1.msra.mxu0 0.0
        %1941 = vmatprep.subr.mxu0 0.0
        %1942 = vmatpush1.msra.mxu0 0.0
        %1943 = vmatprep.subr.mxu0 0.0
        %1944 = vmatpush1.msra.mxu0 0.0
        %1945 = vmatprep.subr.mxu0 0.0
        %1946 = vmatpush1.msra.mxu0 0.0
        %1947 = vmatprep.subr.mxu0 0.0
        %1948 = vmatpush1.msra.mxu0 0.0
        %1949 = vmatprep.subr.mxu0 0.0
        %1950 = vmatpush1.msra.mxu0 0.0
        %1951 = vmatprep.subr.mxu0 0.0
        %1952 = vmatpush1.msra.mxu0 0.0
        %1953 = vmatprep.subr.mxu0 0.0
        %1954 = vmatpush1.msra.mxu0 0.0
        %1955 = vmatprep.subr.mxu0 0.0
        %1956 = vmatpush1.msra.mxu0 0.0
        %1957 = vmatprep.subr.mxu0 0.0
        %1958 = vmatpush1.msra.mxu0 0.0
        %1959 = vmatprep.subr.mxu0 0.0
        %1960 = vmatpush1.msra.mxu0 0.0
        %1961 = vmatprep.subr.mxu0 0.0
        %1962 = vmatpush1.msra.mxu0 0.0
        %1963 = vmatprep.subr.mxu0 0.0
        %1964 = vmatpush1.msra.mxu0 0.0
        %1965 = vmatprep.subr.mxu0 0.0
        %1966 = vmatpush1.msra.mxu0 0.0
        %1967 = vmatprep.subr.mxu0 0.0
        %1968 = vmatpush1.msra.mxu0 0.0
        %1969 = vmatprep.subr.mxu0 0.0
        %1970 = vmatpush1.msra.mxu0 0.0
        %1971 = vmatprep.subr.mxu0 0.0
        %1972 = vmatpush1.msra.mxu0 0.0
        %1973 = vmatprep.subr.mxu0 0.0
        %1974 = vmatpush1.msra.mxu0 0.0
        %1975 = vmatprep.subr.mxu0 0.0
        %1976 = vmatpush1.msra.mxu0 0.0
        %1977 = vmatprep.subr.mxu0 0.0
        %1978 = vmatpush1.msra.mxu0 0.0
        %1979 = vmatprep.subr.mxu0 0.0
        %1980 = vmatpush1.msra.mxu0 0.0
        %1981 = vmatprep.subr.mxu0 0.0
        %1982 = vmatpush1.msra.mxu0 0.0
        %1983 = vmatprep.mubr.f32.mxu0 0.0
        %1984 = vmatmul.mubr.f32.gmra.mrb[0].mxu0 %v1914
        %v1985 = vpop.f32.mrb[0].mxu0
        %v1986 = vadd.f32 0.0, %v1985
        %v1987 = vpop.f32.mrb[0].mxu0
        %v1988 = vadd.f32 0.0, %v1987
        %1989 = vmatprep.mubr.f32.mxu0 0.0
        %1990 = vmatmul.mubr.f32.gmra.mrb[0].mxu0 %v1917
        %v1991 = vpop.f32.mrb[0].mxu0
        %v1992 = vadd.f32 0.0, %v1991
        %v1993 = vpop.f32.mrb[0].mxu0
        %v1994 = vadd.f32 0.0, %v1993
        %1995 = vdwg.mxu0
        %1996 = vmatprep.subr.mxu0 %v1884
        %1997 = vmatpush1.msra.mxu0 %v1883
        %1998 = vmatprep.subr.mxu0 %v1888
        %1999 = vmatpush1.msra.mxu0 %v1887
        %2000 = vmatprep.subr.mxu0 %v1892
        %2001 = vmatpush1.msra.mxu0 %v1891
        %2002 = vmatprep.subr.mxu0 %v1896
        %2003 = vmatpush1.msra.mxu0 %v1895
        %2004 = vmatprep.subr.mxu0 %v1900
        %2005 = vmatpush1.msra.mxu0 %v1899
        %2006 = vmatprep.subr.mxu0 %v1904
        %2007 = vmatpush1.msra.mxu0 %v1903
        %2008 = vmatprep.subr.mxu0 %v1908
        %2009 = vmatpush1.msra.mxu0 %v1907
        %2010 = vmatprep.subr.mxu0 %v1912
        %2011 = vmatpush1.msra.mxu0 %v1911
        %2012 = vmatprep.subr.mxu0 0.0
        %2013 = vmatpush1.msra.mxu0 0.0
        %2014 = vmatprep.subr.mxu0 0.0
        %2015 = vmatpush1.msra.mxu0 0.0
        %2016 = vmatprep.subr.mxu0 0.0
        %2017 = vmatpush1.msra.mxu0 0.0
        %2018 = vmatprep.subr.mxu0 0.0
        %2019 = vmatpush1.msra.mxu0 0.0
        %2020 = vmatprep.subr.mxu0 0.0
        %2021 = vmatpush1.msra.mxu0 0.0
        %2022 = vmatprep.subr.mxu0 0.0
        %2023 = vmatpush1.msra.mxu0 0.0
        %2024 = vmatprep.subr.mxu0 0.0
        %2025 = vmatpush1.msra.mxu0 0.0
        %2026 = vmatprep.subr.mxu0 0.0
        %2027 = vmatpush1.msra.mxu0 0.0
        %2028 = vmatprep.subr.mxu0 0.0
        %2029 = vmatpush1.msra.mxu0 0.0
        %2030 = vmatprep.subr.mxu0 0.0
        %2031 = vmatpush1.msra.mxu0 0.0
        %2032 = vmatprep.subr.mxu0 0.0
        %2033 = vmatpush1.msra.mxu0 0.0
        %2034 = vmatprep.subr.mxu0 0.0
        %2035 = vmatpush1.msra.mxu0 0.0
        %2036 = vmatprep.subr.mxu0 0.0
        %2037 = vmatpush1.msra.mxu0 0.0
        %2038 = vmatprep.subr.mxu0 0.0
        %2039 = vmatpush1.msra.mxu0 0.0
        %2040 = vmatprep.subr.mxu0 0.0
        %2041 = vmatpush1.msra.mxu0 0.0
        %2042 = vmatprep.subr.mxu0 0.0
        %2043 = vmatpush1.msra.mxu0 0.0
        %2044 = vmatprep.subr.mxu0 0.0
        %2045 = vmatpush1.msra.mxu0 0.0
        %2046 = vmatprep.subr.mxu0 0.0
        %2047 = vmatpush1.msra.mxu0 0.0
        %2048 = vmatprep.subr.mxu0 0.0
        %2049 = vmatpush1.msra.mxu0 0.0
        %2050 = vmatprep.subr.mxu0 0.0
        %2051 = vmatpush1.msra.mxu0 0.0
        %2052 = vmatprep.subr.mxu0 0.0
        %2053 = vmatpush1.msra.mxu0 0.0
        %2054 = vmatprep.subr.mxu0 0.0
        %2055 = vmatpush1.msra.mxu0 0.0
        %2056 = vmatprep.subr.mxu0 0.0
        %2057 = vmatpush1.msra.mxu0 0.0
        %2058 = vmatprep.subr.mxu0 0.0
        %2059 = vmatpush1.msra.mxu0 0.0
        %2060 = vmatprep.mubr.f32.mxu0 0.0
        %2061 = vmatmul.mubr.f32.gmra.mrb[0].mxu0 %v1914
        %v2062 = vpop.f32.mrb[0].mxu0
        %v2063 = vadd.f32 0.0, %v2062
        %v2064 = vpop.f32.mrb[0].mxu0
        %v2065 = vadd.f32 0.0, %v2064
        %2066 = vmatprep.mubr.f32.mxu0 0.0
        %2067 = vmatmul.mubr.f32.gmra.mrb[0].mxu0 %v1917
        %v2068 = vpop.f32.mrb[0].mxu0
        %v2069 = vadd.f32 0.0, %v2068
        %v2070 = vpop.f32.mrb[0].mxu0
        %v2071 = vadd.f32 0.0, %v2070
        %2072 = vdwg.mxu0
        %vm2073 = vcmask 64512
        %v2075 = vsel %vm2073, %v1607, 0
        %v2078 = vsel %vm2073, %v1608, 0
        %2080 = vmatprep.subr.mxu0 %v1806
        %2081 = vmatpush1.msra.mxu0 %v1804
        %2082 = vmatprep.subr.mxu0 0.0
        %2083 = vmatpush1.msra.mxu0 0.0
        %2084 = vmatprep.subr.mxu0 0.0
        %2085 = vmatpush1.msra.mxu0 0.0
        %2086 = vmatprep.subr.mxu0 0.0
        %2087 = vmatpush1.msra.mxu0 0.0
        %2088 = vmatprep.subr.mxu0 0.0
        %2089 = vmatpush1.msra.mxu0 0.0
        %2090 = vmatprep.subr.mxu0 0.0
        %2091 = vmatpush1.msra.mxu0 0.0
        %2092 = vmatprep.subr.mxu0 0.0
        %2093 = vmatpush1.msra.mxu0 0.0
        %2094 = vmatprep.subr.mxu0 0.0
        %2095 = vmatpush1.msra.mxu0 0.0
        %2096 = vmatprep.subr.mxu0 0.0
        %2097 = vmatpush1.msra.mxu0 0.0
        %2098 = vmatprep.subr.mxu0 0.0
        %2099 = vmatpush1.msra.mxu0 0.0
        %2100 = vmatprep.subr.mxu0 0.0
        %2101 = vmatpush1.msra.mxu0 0.0
        %2102 = vmatprep.subr.mxu0 0.0
        %2103 = vmatpush1.msra.mxu0 0.0
        %2104 = vmatprep.subr.mxu0 0.0
        %2105 = vmatpush1.msra.mxu0 0.0
        %2106 = vmatprep.subr.mxu0 0.0
        %2107 = vmatpush1.msra.mxu0 0.0
        %2108 = vmatprep.subr.mxu0 0.0
        %2109 = vmatpush1.msra.mxu0 0.0
        %2110 = vmatprep.subr.mxu0 0.0
        %2111 = vmatpush1.msra.mxu0 0.0
        %2112 = vmatprep.subr.mxu0 0.0
        %2113 = vmatpush1.msra.mxu0 0.0
        %2114 = vmatprep.subr.mxu0 0.0
        %2115 = vmatpush1.msra.mxu0 0.0
        %2116 = vmatprep.subr.mxu0 0.0
        %2117 = vmatpush1.msra.mxu0 0.0
        %2118 = vmatprep.subr.mxu0 0.0
        %2119 = vmatpush1.msra.mxu0 0.0
        %2120 = vmatprep.subr.mxu0 0.0
        %2121 = vmatpush1.msra.mxu0 0.0
        %2122 = vmatprep.subr.mxu0 0.0
        %2123 = vmatpush1.msra.mxu0 0.0
        %2124 = vmatprep.subr.mxu0 0.0
        %2125 = vmatpush1.msra.mxu0 0.0
        %2126 = vmatprep.subr.mxu0 0.0
        %2127 = vmatpush1.msra.mxu0 0.0
        %2128 = vmatprep.subr.mxu0 0.0
        %2129 = vmatpush1.msra.mxu0 0.0
        %2130 = vmatprep.subr.mxu0 0.0
        %2131 = vmatpush1.msra.mxu0 0.0
        %2132 = vmatprep.subr.mxu0 0.0
        %2133 = vmatpush1.msra.mxu0 0.0
        %2134 = vmatprep.subr.mxu0 0.0
        %2135 = vmatpush1.msra.mxu0 0.0
        %2136 = vmatprep.subr.mxu0 0.0
        %2137 = vmatpush1.msra.mxu0 0.0
        %2138 = vmatprep.subr.mxu0 0.0
        %2139 = vmatpush1.msra.mxu0 0.0
        %2140 = vmatprep.subr.mxu0 0.0
        %2141 = vmatpush1.msra.mxu0 0.0
        %2142 = vmatprep.subr.mxu0 0.0
        %2143 = vmatpush1.msra.mxu0 0.0
        %2144 = vmatprep.mubr.f32.mxu0 0.0
        %2145 = vmatmul.mubr.f32.gmra.mrb[0].mxu0 %v2075
        %v2146 = vpop.f32.mrb[0].mxu0
        %v2147 = vadd.f32 %v1986, %v2146
        %v2148 = vpop.f32.mrb[0].mxu0
        %v2149 = vadd.f32 %v1988, %v2148
        %2150 = vmatprep.mubr.f32.mxu0 0.0
        %2151 = vmatmul.mubr.f32.gmra.mrb[0].mxu0 %v2078
        %v2152 = vpop.f32.mrb[0].mxu0
        %v2153 = vadd.f32 %v1992, %v2152
        %v2154 = vpop.f32.mrb[0].mxu0
        %v2155 = vadd.f32 %v1994, %v2154
        %2156 = vdwg.mxu0
        %2157 = vmatprep.subr.mxu0 %v1877
        %2158 = vmatpush1.msra.mxu0 %v1875
        %2159 = vmatprep.subr.mxu0 0.0
        %2160 = vmatpush1.msra.mxu0 0.0
        %2161 = vmatprep.subr.mxu0 0.0
        %2162 = vmatpush1.msra.mxu0 0.0
        %2163 = vmatprep.subr.mxu0 0.0
        %2164 = vmatpush1.msra.mxu0 0.0
        %2165 = vmatprep.subr.mxu0 0.0
        %2166 = vmatpush1.msra.mxu0 0.0
        %2167 = vmatprep.subr.mxu0 0.0
        %2168 = vmatpush1.msra.mxu0 0.0
        %2169 = vmatprep.subr.mxu0 0.0
        %2170 = vmatpush1.msra.mxu0 0.0
        %2171 = vmatprep.subr.mxu0 0.0
        %2172 = vmatpush1.msra.mxu0 0.0
        %2173 = vmatprep.subr.mxu0 0.0
        %2174 = vmatpush1.msra.mxu0 0.0
        %2175 = vmatprep.subr.mxu0 0.0
        %2176 = vmatpush1.msra.mxu0 0.0
        %2177 = vmatprep.subr.mxu0 0.0
        %2178 = vmatpush1.msra.mxu0 0.0
        %2179 = vmatprep.subr.mxu0 0.0
        %2180 = vmatpush1.msra.mxu0 0.0
        %2181 = vmatprep.subr.mxu0 0.0
        %2182 = vmatpush1.msra.mxu0 0.0
        %2183 = vmatprep.subr.mxu0 0.0
        %2184 = vmatpush1.msra.mxu0 0.0
        %2185 = vmatprep.subr.mxu0 0.0
        %2186 = vmatpush1.msra.mxu0 0.0
        %2187 = vmatprep.subr.mxu0 0.0
        %2188 = vmatpush1.msra.mxu0 0.0
        %2189 = vmatprep.subr.mxu0 0.0
        %2190 = vmatpush1.msra.mxu0 0.0
        %2191 = vmatprep.subr.mxu0 0.0
        %2192 = vmatpush1.msra.mxu0 0.0
        %2193 = vmatprep.subr.mxu0 0.0
        %2194 = vmatpush1.msra.mxu0 0.0
        %2195 = vmatprep.subr.mxu0 0.0
        %2196 = vmatpush1.msra.mxu0 0.0
        %2197 = vmatprep.subr.mxu0 0.0
        %2198 = vmatpush1.msra.mxu0 0.0
        %2199 = vmatprep.subr.mxu0 0.0
        %2200 = vmatpush1.msra.mxu0 0.0
        %2201 = vmatprep.subr.mxu0 0.0
        %2202 = vmatpush1.msra.mxu0 0.0
        %2203 = vmatprep.subr.mxu0 0.0
        %2204 = vmatpush1.msra.mxu0 0.0
        %2205 = vmatprep.subr.mxu0 0.0
        %2206 = vmatpush1.msra.mxu0 0.0
        %2207 = vmatprep.subr.mxu0 0.0
        %2208 = vmatpush1.msra.mxu0 0.0
        %2209 = vmatprep.subr.mxu0 0.0
        %2210 = vmatpush1.msra.mxu0 0.0
        %2211 = vmatprep.subr.mxu0 0.0
        %2212 = vmatpush1.msra.mxu0 0.0
        %2213 = vmatprep.subr.mxu0 0.0
        %2214 = vmatpush1.msra.mxu0 0.0
        %2215 = vmatprep.subr.mxu0 0.0
        %2216 = vmatpush1.msra.mxu0 0.0
        %2217 = vmatprep.subr.mxu0 0.0
        %2218 = vmatpush1.msra.mxu0 0.0
        %2219 = vmatprep.subr.mxu0 0.0
        %2220 = vmatpush1.msra.mxu0 0.0
        %2221 = vmatprep.mubr.f32.mxu0 0.0
        %2222 = vmatmul.mubr.f32.gmra.mrb[0].mxu0 %v2075
        %v2223 = vpop.f32.mrb[0].mxu0
        %v2224 = vadd.f32 %v2063, %v2223
        %v2225 = vpop.f32.mrb[0].mxu0
        %v2226 = vadd.f32 %v2065, %v2225
        %2227 = vmatprep.mubr.f32.mxu0 0.0
        %2228 = vmatmul.mubr.f32.gmra.mrb[0].mxu0 %v2078
        %v2229 = vpop.f32.mrb[0].mxu0
        %v2230 = vadd.f32 %v2069, %v2229
        %v2231 = vpop.f32.mrb[0].mxu0
        %v2232 = vadd.f32 %v2071, %v2231
        %2233 = vdwg.mxu0
        %v2234 = vld [vmem:[#allocation16] sm:$0xf]
        %v2236 = vlaneseq
        %v2237 = vshrl.u32 %v2236, 7
        %v2238 = vsub.s32 0, %v2237
        %v2239 = vrot.slane %v2234, %v2238
        %v2240 = vlaneseq
        %v2241 = vshrl.u32 %v2240, 7
        %v2242 = vsub.s32 1, %v2241
        %v2243 = vrot.slane %v2234, %v2242
        %v2244 = vlaneseq
        %v2245 = vshrl.u32 %v2244, 7
        %v2246 = vsub.s32 2, %v2245
        %v2247 = vrot.slane %v2234, %v2246
        %v2248 = vlaneseq
        %v2249 = vshrl.u32 %v2248, 7
        %v2250 = vsub.s32 3, %v2249
        %v2251 = vrot.slane %v2234, %v2250
        %v2256 = vadd.f32 %v2147, %v2239
        %v2257 = vadd.f32 %v2149, %v2243
        %v2258 = vadd.f32 %v2224, %v2247
        %v2259 = vadd.f32 %v2226, %v2251
        %v2260 = vadd.f32 %v2153, %v2239
        %v2261 = vadd.f32 %v2155, %v2243
        %v2262 = vadd.f32 %v2230, %v2247
        %v2263 = vadd.f32 %v2232, %v2251
        %v2264 = vld [vmem:[#allocation29] sm:$0xf]
        %v2266 = vlaneseq
        %v2267 = vshrl.u32 %v2266, 7
        %v2268 = vsub.s32 0, %v2267
        %v2269 = vrot.slane %v2264, %v2268
        %v2270 = vlaneseq
        %v2271 = vshrl.u32 %v2270, 7
        %v2272 = vsub.s32 1, %v2271
        %v2273 = vrot.slane %v2264, %v2272
        %v2274 = vlaneseq
        %v2275 = vshrl.u32 %v2274, 7
        %v2276 = vsub.s32 2, %v2275
        %v2277 = vrot.slane %v2264, %v2276
        %v2278 = vlaneseq
        %v2279 = vshrl.u32 %v2278, 7
        %v2280 = vsub.s32 3, %v2279
        %v2281 = vrot.slane %v2264, %v2280
        %v2286 = vld [vmem:[#allocation26] sm:$0xff]
        %v2287 = vld [vmem:[#allocation26 + $0x8] sm:$0xff]
        %v2288 = vld [vmem:[#allocation28] sm:$0xff]
        %v2289 = vld [vmem:[#allocation28 + $0x8] sm:$0xff]
        %v2290 = vld [vmem:[#allocation28 + $0x10] sm:$0xff]
        %v2291 = vld [vmem:[#allocation28 + $0x18] sm:$0xff]
        %v2292 = vld [vmem:[#allocation28 + $0x20] sm:$0xff]
        %v2293 = vld [vmem:[#allocation28 + $0x28] sm:$0xff]
        %v2294 = vld [vmem:[#allocation28 + $0x30] sm:$0xff]
        %v2295 = vld [vmem:[#allocation28 + $0x38] sm:$0xff]
        %v2296 = vld [vmem:[#allocation28 + $0x40] sm:$0xff]
        %v2297 = vld [vmem:[#allocation28 + $0x48] sm:$0xff]
        %v2298 = vld [vmem:[#allocation28 + $0x50] sm:$0xff]
        %v2299 = vld [vmem:[#allocation28 + $0x58] sm:$0xff]
        %v2300 = vld [vmem:[#allocation28 + $0x60] sm:$0xff]
        %v2301 = vld [vmem:[#allocation28 + $0x68] sm:$0xff]
        %v2302 = vld [vmem:[#allocation28 + $0x70] sm:$0xff]
        %v2303 = vld [vmem:[#allocation28 + $0x78] sm:$0xff]
        %v2304 = vld [vmem:[#allocation28 + $0x80] sm:$0xff]
        %v2305 = vld [vmem:[#allocation28 + $0x88] sm:$0xff]
        %v2306 = vld [vmem:[#allocation28 + $0x90] sm:$0xff]
        %v2307 = vld [vmem:[#allocation28 + $0x98] sm:$0xff]
        %v2308 = vld [vmem:[#allocation28 + $0xa0] sm:$0xff]
        %v2309 = vld [vmem:[#allocation28 + $0xa8] sm:$0xff]
        %v2310 = vld [vmem:[#allocation28 + $0xb0] sm:$0xff]
        %v2311 = vld [vmem:[#allocation28 + $0xb8] sm:$0xff]
        %v2312 = vld [vmem:[#allocation28 + $0xc0] sm:$0xff]
        %v2313 = vld [vmem:[#allocation28 + $0xc8] sm:$0xff]
        %v2314 = vld [vmem:[#allocation28 + $0xd0] sm:$0xff]
        %v2315 = vld [vmem:[#allocation28 + $0xd8] sm:$0xff]
        %v2316 = vld [vmem:[#allocation28 + $0xe0] sm:$0xff]
        %v2317 = vld [vmem:[#allocation28 + $0xe8] sm:$0xff]
        %v2318 = vld [vmem:[#allocation28 + $0xf0] sm:$0xff]
        %v2319 = vld [vmem:[#allocation28 + $0xf8] sm:$0xff]
        %v2320 = vld [vmem:[#allocation28 + $0x100] sm:$0xff]
        %v2321 = vld [vmem:[#allocation28 + $0x108] sm:$0xff]
        %v2322 = vld [vmem:[#allocation28 + $0x110] sm:$0xff]
        %v2323 = vld [vmem:[#allocation28 + $0x118] sm:$0xff]
        %v2324 = vld [vmem:[#allocation28 + $0x120] sm:$0xff]
        %v2325 = vld [vmem:[#allocation28 + $0x128] sm:$0xff]
        %v2326 = vld [vmem:[#allocation28 + $0x130] sm:$0xff]
        %v2327 = vld [vmem:[#allocation28 + $0x138] sm:$0xff]
        %v2328 = vld [vmem:[#allocation28 + $0x140] sm:$0xff]
        %v2329 = vld [vmem:[#allocation28 + $0x148] sm:$0xff]
        %v2330 = vld [vmem:[#allocation28 + $0x150] sm:$0xff]
        %v2331 = vld [vmem:[#allocation28 + $0x158] sm:$0xff]
        %v2332 = vld [vmem:[#allocation28 + $0x160] sm:$0xff]
        %v2333 = vld [vmem:[#allocation28 + $0x168] sm:$0xff]
        %v2334 = vld [vmem:[#allocation28 + $0x170] sm:$0xff]
        %v2335 = vld [vmem:[#allocation28 + $0x178] sm:$0xff]
        %v2336 = vld [vmem:[#allocation28 + $0x180] sm:$0xff]
        %v2337 = vld [vmem:[#allocation28 + $0x188] sm:$0xff]
        %v2338 = vld [vmem:[#allocation28 + $0x190] sm:$0xff]
        %v2339 = vld [vmem:[#allocation28 + $0x198] sm:$0xff]
        %v2340 = vld [vmem:[#allocation28 + $0x1a0] sm:$0xff]
        %v2341 = vld [vmem:[#allocation28 + $0x1a8] sm:$0xff]
        %v2342 = vld [vmem:[#allocation28 + $0x1b0] sm:$0xff]
        %v2343 = vld [vmem:[#allocation28 + $0x1b8] sm:$0xff]
        %v2344 = vld [vmem:[#allocation28 + $0x1c0] sm:$0xff]
        %v2345 = vld [vmem:[#allocation28 + $0x1c8] sm:$0xff]
        %v2346 = vld [vmem:[#allocation28 + $0x1d0] sm:$0xff]
        %v2347 = vld [vmem:[#allocation28 + $0x1d8] sm:$0xff]
        %v2348 = vld [vmem:[#allocation28 + $0x1e0] sm:$0xff]
        %v2349 = vld [vmem:[#allocation28 + $0x1e8] sm:$0xff]
        %v2350 = vld [vmem:[#allocation28 + $0x1f0] sm:$0xff]
        %v2351 = vld [vmem:[#allocation28 + $0x1f8] sm:$0xff]
        %v2352 = vld [vmem:[#allocation28 + $0x200] sm:$0xff]
        %v2353 = vld [vmem:[#allocation28 + $0x208] sm:$0xff]
        %v2354 = vld [vmem:[#allocation28 + $0x210] sm:$0xff]
        %v2355 = vld [vmem:[#allocation28 + $0x218] sm:$0xff]
        %v2356 = vld [vmem:[#allocation28 + $0x220] sm:$0xff]
        %v2357 = vld [vmem:[#allocation28 + $0x228] sm:$0xff]
        %v2358 = vld [vmem:[#allocation28 + $0x230] sm:$0xff]
        %v2359 = vld [vmem:[#allocation28 + $0x238] sm:$0xff]
        %v2360 = vld [vmem:[#allocation28 + $0x240] sm:$0xff]
        %v2361 = vld [vmem:[#allocation28 + $0x248] sm:$0xff]
        %v2362 = vld [vmem:[#allocation28 + $0x250] sm:$0xff]
        %v2363 = vld [vmem:[#allocation28 + $0x258] sm:$0xff]
        %v2364 = vld [vmem:[#allocation28 + $0x260] sm:$0xff]
        %v2365 = vld [vmem:[#allocation28 + $0x268] sm:$0xff]
        %v2366 = vld [vmem:[#allocation28 + $0x270] sm:$0xff]
        %v2367 = vld [vmem:[#allocation28 + $0x278] sm:$0xff]
        %v2368 = vld [vmem:[#allocation28 + $0x280] sm:$0xff]
        %v2369 = vld [vmem:[#allocation28 + $0x288] sm:$0xff]
        %v2370 = vld [vmem:[#allocation28 + $0x290] sm:$0xff]
        %v2371 = vld [vmem:[#allocation28 + $0x298] sm:$0xff]
        %v2372 = vld [vmem:[#allocation28 + $0x2a0] sm:$0xff]
        %v2373 = vld [vmem:[#allocation28 + $0x2a8] sm:$0xff]
        %v2374 = vld [vmem:[#allocation28 + $0x2b0] sm:$0xff]
        %v2375 = vld [vmem:[#allocation28 + $0x2b8] sm:$0xff]
        %v2376 = vld [vmem:[#allocation28 + $0x2c0] sm:$0xff]
        %v2377 = vld [vmem:[#allocation28 + $0x2c8] sm:$0xff]
        %v2378 = vld [vmem:[#allocation28 + $0x2d0] sm:$0xff]
        %v2379 = vld [vmem:[#allocation28 + $0x2d8] sm:$0xff]
        %v2380 = vld [vmem:[#allocation28 + $0x2e0] sm:$0xff]
        %v2381 = vld [vmem:[#allocation28 + $0x2e8] sm:$0xff]
        %v2382 = vld [vmem:[#allocation28 + $0x2f0] sm:$0xff]
        %v2383 = vld [vmem:[#allocation28 + $0x2f8] sm:$0xff]
        %v2384 = vld [vmem:[#allocation28 + $0x300] sm:$0xff]
        %v2385 = vld [vmem:[#allocation28 + $0x308] sm:$0xff]
        %v2386 = vld [vmem:[#allocation28 + $0x310] sm:$0xff]
        %v2387 = vld [vmem:[#allocation28 + $0x318] sm:$0xff]
        %v2388 = vld [vmem:[#allocation28 + $0x320] sm:$0xff]
        %v2389 = vld [vmem:[#allocation28 + $0x328] sm:$0xff]
        %v2390 = vld [vmem:[#allocation28 + $0x330] sm:$0xff]
        %v2391 = vld [vmem:[#allocation28 + $0x338] sm:$0xff]
        %v2392 = vld [vmem:[#allocation28 + $0x340] sm:$0xff]
        %v2393 = vld [vmem:[#allocation28 + $0x348] sm:$0xff]
        %v2394 = vld [vmem:[#allocation28 + $0x350] sm:$0xff]
        %v2395 = vld [vmem:[#allocation28 + $0x358] sm:$0xff]
        %v2396 = vld [vmem:[#allocation28 + $0x360] sm:$0xff]
        %v2397 = vld [vmem:[#allocation28 + $0x368] sm:$0xff]
        %v2398 = vld [vmem:[#allocation28 + $0x370] sm:$0xff]
        %v2399 = vld [vmem:[#allocation28 + $0x378] sm:$0xff]
        %v2400 = vld [vmem:[#allocation28 + $0x380] sm:$0xff]
        %v2401 = vld [vmem:[#allocation28 + $0x388] sm:$0xff]
        %v2402 = vld [vmem:[#allocation28 + $0x390] sm:$0xff]
        %v2403 = vld [vmem:[#allocation28 + $0x398] sm:$0xff]
        %v2404 = vld [vmem:[#allocation28 + $0x3a0] sm:$0xff]
        %v2405 = vld [vmem:[#allocation28 + $0x3a8] sm:$0xff]
        %v2406 = vld [vmem:[#allocation28 + $0x3b0] sm:$0xff]
        %v2407 = vld [vmem:[#allocation28 + $0x3b8] sm:$0xff]
        %v2408 = vld [vmem:[#allocation28 + $0x3c0] sm:$0xff]
        %v2409 = vld [vmem:[#allocation28 + $0x3c8] sm:$0xff]
        %v2410 = vld [vmem:[#allocation28 + $0x3d0] sm:$0xff]
        %v2411 = vld [vmem:[#allocation28 + $0x3d8] sm:$0xff]
        %v2412 = vld [vmem:[#allocation28 + $0x3e0] sm:$0xff]
        %v2413 = vld [vmem:[#allocation28 + $0x3e8] sm:$0xff]
        %v2414 = vld [vmem:[#allocation28 + $0x3f0] sm:$0xff]
        %v2415 = vld [vmem:[#allocation28 + $0x3f8] sm:$0xff]
        %v2416 = vld [vmem:[#allocation28 + $0x400] sm:$0xff]
        %v2417 = vld [vmem:[#allocation28 + $0x408] sm:$0xff]
        %v2418 = vld [vmem:[#allocation28 + $0x410] sm:$0xff]
        %v2419 = vld [vmem:[#allocation28 + $0x418] sm:$0xff]
        %v2420 = vld [vmem:[#allocation28 + $0x420] sm:$0xff]
        %v2421 = vld [vmem:[#allocation28 + $0x428] sm:$0xff]
        %v2422 = vld [vmem:[#allocation28 + $0x430] sm:$0xff]
        %v2423 = vld [vmem:[#allocation28 + $0x438] sm:$0xff]
        %v2424 = vld [vmem:[#allocation28 + $0x440] sm:$0xff]
        %v2425 = vld [vmem:[#allocation28 + $0x448] sm:$0xff]
        %v2426 = vld [vmem:[#allocation28 + $0x450] sm:$0xff]
        %v2427 = vld [vmem:[#allocation28 + $0x458] sm:$0xff]
        %v2428 = vld [vmem:[#allocation28 + $0x460] sm:$0xff]
        %v2429 = vld [vmem:[#allocation28 + $0x468] sm:$0xff]
        %v2430 = vld [vmem:[#allocation28 + $0x470] sm:$0xff]
        %v2431 = vld [vmem:[#allocation28 + $0x478] sm:$0xff]
        %v2432 = vld [vmem:[#allocation28 + $0x480] sm:$0xff]
        %v2433 = vld [vmem:[#allocation28 + $0x488] sm:$0xff]
        %v2434 = vld [vmem:[#allocation28 + $0x490] sm:$0xff]
        %v2435 = vld [vmem:[#allocation28 + $0x498] sm:$0xff]
        %v2436 = vld [vmem:[#allocation28 + $0x4a0] sm:$0xff]
        %v2437 = vld [vmem:[#allocation28 + $0x4a8] sm:$0xff]
        %v2438 = vld [vmem:[#allocation28 + $0x4b0] sm:$0xff]
        %v2439 = vld [vmem:[#allocation28 + $0x4b8] sm:$0xff]
        %v2440 = vld [vmem:[#allocation28 + $0x4c0] sm:$0xff]
        %v2441 = vld [vmem:[#allocation28 + $0x4c8] sm:$0xff]
        %v2442 = vld [vmem:[#allocation28 + $0x4d0] sm:$0xff]
        %v2443 = vld [vmem:[#allocation28 + $0x4d8] sm:$0xff]
        %v2444 = vld [vmem:[#allocation28 + $0x4e0] sm:$0xff]
        %v2445 = vld [vmem:[#allocation28 + $0x4e8] sm:$0xff]
        %v2446 = vld [vmem:[#allocation28 + $0x4f0] sm:$0xff]
        %v2447 = vld [vmem:[#allocation28 + $0x4f8] sm:$0xff]
        %v2448 = vld [vmem:[#allocation28 + $0x500] sm:$0xff]
        %v2449 = vld [vmem:[#allocation28 + $0x508] sm:$0xff]
        %v2450 = vld [vmem:[#allocation28 + $0x510] sm:$0xff]
        %v2451 = vld [vmem:[#allocation28 + $0x518] sm:$0xff]
        %v2452 = vld [vmem:[#allocation28 + $0x520] sm:$0xff]
        %v2453 = vld [vmem:[#allocation28 + $0x528] sm:$0xff]
        %v2454 = vld [vmem:[#allocation28 + $0x530] sm:$0xff]
        %v2455 = vld [vmem:[#allocation28 + $0x538] sm:$0xff]
        %v2456 = vld [vmem:[#allocation28 + $0x540] sm:$0xff]
        %v2457 = vld [vmem:[#allocation28 + $0x548] sm:$0xff]
        %v2458 = vld [vmem:[#allocation28 + $0x550] sm:$0xff]
        %v2459 = vld [vmem:[#allocation28 + $0x558] sm:$0xff]
        %v2460 = vld [vmem:[#allocation28 + $0x560] sm:$0xff]
        %v2461 = vld [vmem:[#allocation28 + $0x568] sm:$0xff]
        %v2462 = vld [vmem:[#allocation28 + $0x570] sm:$0xff]
        %v2463 = vld [vmem:[#allocation28 + $0x578] sm:$0xff]
        %v2464 = vld [vmem:[#allocation28 + $0x580] sm:$0xff]
        %v2465 = vld [vmem:[#allocation28 + $0x588] sm:$0xff]
        %v2466 = vld [vmem:[#allocation28 + $0x590] sm:$0xff]
        %v2467 = vld [vmem:[#allocation28 + $0x598] sm:$0xff]
        %v2468 = vld [vmem:[#allocation28 + $0x5a0] sm:$0xff]
        %v2469 = vld [vmem:[#allocation28 + $0x5a8] sm:$0xff]
        %v2470 = vld [vmem:[#allocation28 + $0x5b0] sm:$0xff]
        %v2471 = vld [vmem:[#allocation28 + $0x5b8] sm:$0xff]
        %v2472 = vld [vmem:[#allocation28 + $0x5c0] sm:$0xff]
        %v2473 = vld [vmem:[#allocation28 + $0x5c8] sm:$0xff]
        %v2474 = vld [vmem:[#allocation28 + $0x5d0] sm:$0xff]
        %v2475 = vld [vmem:[#allocation28 + $0x5d8] sm:$0xff]
        %v2476 = vld [vmem:[#allocation28 + $0x5e0] sm:$0xff]
        %v2477 = vld [vmem:[#allocation28 + $0x5e8] sm:$0xff]
        %v2478 = vld [vmem:[#allocation28 + $0x5f0] sm:$0xff]
        %v2479 = vld [vmem:[#allocation28 + $0x5f8] sm:$0xff]
        %v2480 = vld [vmem:[#allocation28 + $0x600] sm:$0xff]
        %v2481 = vld [vmem:[#allocation28 + $0x608] sm:$0xff]
        %v2482 = vld [vmem:[#allocation28 + $0x610] sm:$0xff]
        %v2483 = vld [vmem:[#allocation28 + $0x618] sm:$0xff]
        %v2484 = vld [vmem:[#allocation28 + $0x620] sm:$0xff]
        %v2485 = vld [vmem:[#allocation28 + $0x628] sm:$0xff]
        %v2486 = vld [vmem:[#allocation28 + $0x630] sm:$0xff]
        %v2487 = vld [vmem:[#allocation28 + $0x638] sm:$0xff]
        %v2488 = vld [vmem:[#allocation28 + $0x640] sm:$0xff]
        %v2489 = vld [vmem:[#allocation28 + $0x648] sm:$0xff]
        %v2490 = vld [vmem:[#allocation28 + $0x650] sm:$0xff]
        %v2491 = vld [vmem:[#allocation28 + $0x658] sm:$0xff]
        %v2492 = vld [vmem:[#allocation28 + $0x660] sm:$0xff]
        %v2493 = vld [vmem:[#allocation28 + $0x668] sm:$0xff]
        %v2494 = vld [vmem:[#allocation28 + $0x670] sm:$0xff]
        %v2495 = vld [vmem:[#allocation28 + $0x678] sm:$0xff]
        %v2496 = vld [vmem:[#allocation28 + $0x680] sm:$0xff]
        %v2497 = vld [vmem:[#allocation28 + $0x688] sm:$0xff]
        %v2498 = vld [vmem:[#allocation28 + $0x690] sm:$0xff]
        %v2499 = vld [vmem:[#allocation28 + $0x698] sm:$0xff]
        %v2500 = vld [vmem:[#allocation28 + $0x6a0] sm:$0xff]
        %v2501 = vld [vmem:[#allocation28 + $0x6a8] sm:$0xff]
        %v2502 = vld [vmem:[#allocation28 + $0x6b0] sm:$0xff]
        %v2503 = vld [vmem:[#allocation28 + $0x6b8] sm:$0xff]
        %v2504 = vld [vmem:[#allocation28 + $0x6c0] sm:$0xff]
        %v2505 = vld [vmem:[#allocation28 + $0x6c8] sm:$0xff]
        %v2506 = vld [vmem:[#allocation28 + $0x6d0] sm:$0xff]
        %v2507 = vld [vmem:[#allocation28 + $0x6d8] sm:$0xff]
        %v2508 = vld [vmem:[#allocation28 + $0x6e0] sm:$0xff]
        %v2509 = vld [vmem:[#allocation28 + $0x6e8] sm:$0xff]
        %v2510 = vld [vmem:[#allocation28 + $0x6f0] sm:$0xff]
        %v2511 = vld [vmem:[#allocation28 + $0x6f8] sm:$0xff]
        %v2512 = vld [vmem:[#allocation28 + $0x700] sm:$0xff]
        %v2513 = vld [vmem:[#allocation28 + $0x708] sm:$0xff]
        %v2514 = vld [vmem:[#allocation28 + $0x710] sm:$0xff]
        %v2515 = vld [vmem:[#allocation28 + $0x718] sm:$0xff]
        %v2516 = vld [vmem:[#allocation28 + $0x720] sm:$0xff]
        %v2517 = vld [vmem:[#allocation28 + $0x728] sm:$0xff]
        %v2518 = vld [vmem:[#allocation28 + $0x730] sm:$0xff]
        %v2519 = vld [vmem:[#allocation28 + $0x738] sm:$0xff]
        %v2520 = vld [vmem:[#allocation28 + $0x740] sm:$0xff]
        %v2521 = vld [vmem:[#allocation28 + $0x748] sm:$0xff]
        %v2522 = vld [vmem:[#allocation28 + $0x750] sm:$0xff]
        %v2523 = vld [vmem:[#allocation28 + $0x758] sm:$0xff]
        %v2524 = vld [vmem:[#allocation28 + $0x760] sm:$0xff]
        %v2525 = vld [vmem:[#allocation28 + $0x768] sm:$0xff]
        %v2526 = vld [vmem:[#allocation28 + $0x770] sm:$0xff]
        %v2527 = vld [vmem:[#allocation28 + $0x778] sm:$0xff]
        %v2528 = vld [vmem:[#allocation28 + $0x780] sm:$0xff]
        %v2529 = vld [vmem:[#allocation28 + $0x788] sm:$0xff]
        %v2530 = vld [vmem:[#allocation28 + $0x790] sm:$0xff]
        %v2531 = vld [vmem:[#allocation28 + $0x798] sm:$0xff]
        %v2532 = vld [vmem:[#allocation28 + $0x7a0] sm:$0xff]
        %v2533 = vld [vmem:[#allocation28 + $0x7a8] sm:$0xff]
        %v2534 = vld [vmem:[#allocation28 + $0x7b0] sm:$0xff]
        %v2535 = vld [vmem:[#allocation28 + $0x7b8] sm:$0xff]
        %v2536 = vld [vmem:[#allocation28 + $0x7c0] sm:$0xff]
        %v2537 = vld [vmem:[#allocation28 + $0x7c8] sm:$0xff]
        %v2538 = vld [vmem:[#allocation28 + $0x7d0] sm:$0xff]
        %v2539 = vld [vmem:[#allocation28 + $0x7d8] sm:$0xff]
        %v2540 = vld [vmem:[#allocation28 + $0x7e0] sm:$0xff]
        %v2541 = vld [vmem:[#allocation28 + $0x7e8] sm:$0xff]
        %v2542 = vld [vmem:[#allocation28 + $0x7f0] sm:$0xff]
        %v2543 = vld [vmem:[#allocation28 + $0x7f8] sm:$0xff]
        %2544 = vmatprep.subr.mxu0 %v2289
        %2545 = vmatpush1.msra.mxu0 %v2288
        %2546 = vmatprep.subr.mxu0 %v2293
        %2547 = vmatpush1.msra.mxu0 %v2292
        %2548 = vmatprep.subr.mxu0 %v2297
        %2549 = vmatpush1.msra.mxu0 %v2296
        %2550 = vmatprep.subr.mxu0 %v2301
        %2551 = vmatpush1.msra.mxu0 %v2300
        %2552 = vmatprep.subr.mxu0 %v2305
        %2553 = vmatpush1.msra.mxu0 %v2304
        %2554 = vmatprep.subr.mxu0 %v2309
        %2555 = vmatpush1.msra.mxu0 %v2308
        %2556 = vmatprep.subr.mxu0 %v2313
        %2557 = vmatpush1.msra.mxu0 %v2312
        %2558 = vmatprep.subr.mxu0 %v2317
        %2559 = vmatpush1.msra.mxu0 %v2316
        %2560 = vmatprep.subr.mxu0 %v2321
        %2561 = vmatpush1.msra.mxu0 %v2320
        %2562 = vmatprep.subr.mxu0 %v2325
        %2563 = vmatpush1.msra.mxu0 %v2324
        %2564 = vmatprep.subr.mxu0 %v2329
        %2565 = vmatpush1.msra.mxu0 %v2328
        %2566 = vmatprep.subr.mxu0 %v2333
        %2567 = vmatpush1.msra.mxu0 %v2332
        %2568 = vmatprep.subr.mxu0 %v2337
        %2569 = vmatpush1.msra.mxu0 %v2336
        %2570 = vmatprep.subr.mxu0 %v2341
        %2571 = vmatpush1.msra.mxu0 %v2340
        %2572 = vmatprep.subr.mxu0 %v2345
        %2573 = vmatpush1.msra.mxu0 %v2344
        %2574 = vmatprep.subr.mxu0 %v2349
        %2575 = vmatpush1.msra.mxu0 %v2348
        %2576 = vmatprep.subr.mxu0 %v2353
        %2577 = vmatpush1.msra.mxu0 %v2352
        %2578 = vmatprep.subr.mxu0 %v2357
        %2579 = vmatpush1.msra.mxu0 %v2356
        %2580 = vmatprep.subr.mxu0 %v2361
        %2581 = vmatpush1.msra.mxu0 %v2360
        %2582 = vmatprep.subr.mxu0 %v2365
        %2583 = vmatpush1.msra.mxu0 %v2364
        %2584 = vmatprep.subr.mxu0 %v2369
        %2585 = vmatpush1.msra.mxu0 %v2368
        %2586 = vmatprep.subr.mxu0 %v2373
        %2587 = vmatpush1.msra.mxu0 %v2372
        %2588 = vmatprep.subr.mxu0 %v2377
        %2589 = vmatpush1.msra.mxu0 %v2376
        %2590 = vmatprep.subr.mxu0 %v2381
        %2591 = vmatpush1.msra.mxu0 %v2380
        %2592 = vmatprep.subr.mxu0 %v2385
        %2593 = vmatpush1.msra.mxu0 %v2384
        %2594 = vmatprep.subr.mxu0 %v2389
        %2595 = vmatpush1.msra.mxu0 %v2388
        %2596 = vmatprep.subr.mxu0 %v2393
        %2597 = vmatpush1.msra.mxu0 %v2392
        %2598 = vmatprep.subr.mxu0 %v2397
        %2599 = vmatpush1.msra.mxu0 %v2396
        %2600 = vmatprep.subr.mxu0 %v2401
        %2601 = vmatpush1.msra.mxu0 %v2400
        %2602 = vmatprep.subr.mxu0 %v2405
        %2603 = vmatpush1.msra.mxu0 %v2404
        %2604 = vmatprep.subr.mxu0 %v2409
        %2605 = vmatpush1.msra.mxu0 %v2408
        %2606 = vmatprep.subr.mxu0 %v2413
        %2607 = vmatpush1.msra.mxu0 %v2412
        %2608 = vmatprep.mubr.f32.mxu0 %v2257
        %2609 = vmatmul.mubr.f32.gmra.mrb[0].mxu0 %v2256
        %v2610 = vpop.f32.mrb[0].mxu0
        %v2611 = vadd.f32 0.0, %v2610
        %v2612 = vpop.f32.mrb[0].mxu0
        %v2613 = vadd.f32 0.0, %v2612
        %2614 = vmatprep.mubr.f32.mxu0 %v2261
        %2615 = vmatmul.mubr.f32.gmra.mrb[0].mxu0 %v2260
        %v2616 = vpop.f32.mrb[0].mxu0
        %v2617 = vadd.f32 0.0, %v2616
        %v2618 = vpop.f32.mrb[0].mxu0
        %v2619 = vadd.f32 0.0, %v2618
        %2620 = vdwg.mxu0
        %2621 = vmatprep.subr.mxu0 %v2417
        %2622 = vmatpush1.msra.mxu0 %v2416
        %2623 = vmatprep.subr.mxu0 %v2421
        %2624 = vmatpush1.msra.mxu0 %v2420
        %2625 = vmatprep.subr.mxu0 %v2425
        %2626 = vmatpush1.msra.mxu0 %v2424
        %2627 = vmatprep.subr.mxu0 %v2429
        %2628 = vmatpush1.msra.mxu0 %v2428
        %2629 = vmatprep.subr.mxu0 %v2433
        %2630 = vmatpush1.msra.mxu0 %v2432
        %2631 = vmatprep.subr.mxu0 %v2437
        %2632 = vmatpush1.msra.mxu0 %v2436
        %2633 = vmatprep.subr.mxu0 %v2441
        %2634 = vmatpush1.msra.mxu0 %v2440
        %2635 = vmatprep.subr.mxu0 %v2445
        %2636 = vmatpush1.msra.mxu0 %v2444
        %2637 = vmatprep.subr.mxu0 %v2449
        %2638 = vmatpush1.msra.mxu0 %v2448
        %2639 = vmatprep.subr.mxu0 %v2453
        %2640 = vmatpush1.msra.mxu0 %v2452
        %2641 = vmatprep.subr.mxu0 %v2457
        %2642 = vmatpush1.msra.mxu0 %v2456
        %2643 = vmatprep.subr.mxu0 %v2461
        %2644 = vmatpush1.msra.mxu0 %v2460
        %2645 = vmatprep.subr.mxu0 %v2465
        %2646 = vmatpush1.msra.mxu0 %v2464
        %2647 = vmatprep.subr.mxu0 %v2469
        %2648 = vmatpush1.msra.mxu0 %v2468
        %2649 = vmatprep.subr.mxu0 %v2473
        %2650 = vmatpush1.msra.mxu0 %v2472
        %2651 = vmatprep.subr.mxu0 %v2477
        %2652 = vmatpush1.msra.mxu0 %v2476
        %2653 = vmatprep.subr.mxu0 %v2481
        %2654 = vmatpush1.msra.mxu0 %v2480
        %2655 = vmatprep.subr.mxu0 %v2485
        %2656 = vmatpush1.msra.mxu0 %v2484
        %2657 = vmatprep.subr.mxu0 %v2489
        %2658 = vmatpush1.msra.mxu0 %v2488
        %2659 = vmatprep.subr.mxu0 %v2493
        %2660 = vmatpush1.msra.mxu0 %v2492
        %2661 = vmatprep.subr.mxu0 %v2497
        %2662 = vmatpush1.msra.mxu0 %v2496
        %2663 = vmatprep.subr.mxu0 %v2501
        %2664 = vmatpush1.msra.mxu0 %v2500
        %2665 = vmatprep.subr.mxu0 %v2505
        %2666 = vmatpush1.msra.mxu0 %v2504
        %2667 = vmatprep.subr.mxu0 %v2509
        %2668 = vmatpush1.msra.mxu0 %v2508
        %2669 = vmatprep.subr.mxu0 %v2513
        %2670 = vmatpush1.msra.mxu0 %v2512
        %2671 = vmatprep.subr.mxu0 %v2517
        %2672 = vmatpush1.msra.mxu0 %v2516
        %2673 = vmatprep.subr.mxu0 %v2521
        %2674 = vmatpush1.msra.mxu0 %v2520
        %2675 = vmatprep.subr.mxu0 %v2525
        %2676 = vmatpush1.msra.mxu0 %v2524
        %2677 = vmatprep.subr.mxu0 %v2529
        %2678 = vmatpush1.msra.mxu0 %v2528
        %2679 = vmatprep.subr.mxu0 %v2533
        %2680 = vmatpush1.msra.mxu0 %v2532
        %2681 = vmatprep.subr.mxu0 %v2537
        %2682 = vmatpush1.msra.mxu0 %v2536
        %2683 = vmatprep.subr.mxu0 %v2541
        %2684 = vmatpush1.msra.mxu0 %v2540
        %2685 = vmatprep.mubr.f32.mxu0 %v2259
        %2686 = vmatmul.mubr.f32.gmra.mrb[0].mxu0 %v2258
        %v2687 = vpop.f32.mrb[0].mxu0
        %v2688 = vadd.f32 %v2611, %v2687
        %v2689 = vpop.f32.mrb[0].mxu0
        %v2690 = vadd.f32 %v2613, %v2689
        %2691 = vmatprep.mubr.f32.mxu0 %v2263
        %2692 = vmatmul.mubr.f32.gmra.mrb[0].mxu0 %v2262
        %v2693 = vpop.f32.mrb[0].mxu0
        %v2694 = vadd.f32 %v2617, %v2693
        %v2695 = vpop.f32.mrb[0].mxu0
        %v2696 = vadd.f32 %v2619, %v2695
        %2697 = vdwg.mxu0
        %2698 = vmatprep.subr.mxu0 %v2291
        %2699 = vmatpush1.msra.mxu0 %v2290
        %2700 = vmatprep.subr.mxu0 %v2295
        %2701 = vmatpush1.msra.mxu0 %v2294
        %2702 = vmatprep.subr.mxu0 %v2299
        %2703 = vmatpush1.msra.mxu0 %v2298
        %2704 = vmatprep.subr.mxu0 %v2303
        %2705 = vmatpush1.msra.mxu0 %v2302
        %2706 = vmatprep.subr.mxu0 %v2307
        %2707 = vmatpush1.msra.mxu0 %v2306
        %2708 = vmatprep.subr.mxu0 %v2311
        %2709 = vmatpush1.msra.mxu0 %v2310
        %2710 = vmatprep.subr.mxu0 %v2315
        %2711 = vmatpush1.msra.mxu0 %v2314
        %2712 = vmatprep.subr.mxu0 %v2319
        %2713 = vmatpush1.msra.mxu0 %v2318
        %2714 = vmatprep.subr.mxu0 %v2323
        %2715 = vmatpush1.msra.mxu0 %v2322
        %2716 = vmatprep.subr.mxu0 %v2327
        %2717 = vmatpush1.msra.mxu0 %v2326
        %2718 = vmatprep.subr.mxu0 %v2331
        %2719 = vmatpush1.msra.mxu0 %v2330
        %2720 = vmatprep.subr.mxu0 %v2335
        %2721 = vmatpush1.msra.mxu0 %v2334
        %2722 = vmatprep.subr.mxu0 %v2339
        %2723 = vmatpush1.msra.mxu0 %v2338
        %2724 = vmatprep.subr.mxu0 %v2343
        %2725 = vmatpush1.msra.mxu0 %v2342
        %2726 = vmatprep.subr.mxu0 %v2347
        %2727 = vmatpush1.msra.mxu0 %v2346
        %2728 = vmatprep.subr.mxu0 %v2351
        %2729 = vmatpush1.msra.mxu0 %v2350
        %2730 = vmatprep.subr.mxu0 %v2355
        %2731 = vmatpush1.msra.mxu0 %v2354
        %2732 = vmatprep.subr.mxu0 %v2359
        %2733 = vmatpush1.msra.mxu0 %v2358
        %2734 = vmatprep.subr.mxu0 %v2363
        %2735 = vmatpush1.msra.mxu0 %v2362
        %2736 = vmatprep.subr.mxu0 %v2367
        %2737 = vmatpush1.msra.mxu0 %v2366
        %2738 = vmatprep.subr.mxu0 %v2371
        %2739 = vmatpush1.msra.mxu0 %v2370
        %2740 = vmatprep.subr.mxu0 %v2375
        %2741 = vmatpush1.msra.mxu0 %v2374
        %2742 = vmatprep.subr.mxu0 %v2379
        %2743 = vmatpush1.msra.mxu0 %v2378
        %2744 = vmatprep.subr.mxu0 %v2383
        %2745 = vmatpush1.msra.mxu0 %v2382
        %2746 = vmatprep.subr.mxu0 %v2387
        %2747 = vmatpush1.msra.mxu0 %v2386
        %2748 = vmatprep.subr.mxu0 %v2391
        %2749 = vmatpush1.msra.mxu0 %v2390
        %2750 = vmatprep.subr.mxu0 %v2395
        %2751 = vmatpush1.msra.mxu0 %v2394
        %2752 = vmatprep.subr.mxu0 %v2399
        %2753 = vmatpush1.msra.mxu0 %v2398
        %2754 = vmatprep.subr.mxu0 %v2403
        %2755 = vmatpush1.msra.mxu0 %v2402
        %2756 = vmatprep.subr.mxu0 %v2407
        %2757 = vmatpush1.msra.mxu0 %v2406
        %2758 = vmatprep.subr.mxu0 %v2411
        %2759 = vmatpush1.msra.mxu0 %v2410
        %2760 = vmatprep.subr.mxu0 %v2415
        %2761 = vmatpush1.msra.mxu0 %v2414
        %2762 = vmatprep.mubr.f32.mxu0 %v2257
        %2763 = vmatmul.mubr.f32.gmra.mrb[0].mxu0 %v2256
        %v2764 = vpop.f32.mrb[0].mxu0
        %v2765 = vadd.f32 0.0, %v2764
        %v2766 = vpop.f32.mrb[0].mxu0
        %v2767 = vadd.f32 0.0, %v2766
        %2768 = vmatprep.mubr.f32.mxu0 %v2261
        %2769 = vmatmul.mubr.f32.gmra.mrb[0].mxu0 %v2260
        %v2770 = vpop.f32.mrb[0].mxu0
        %v2771 = vadd.f32 0.0, %v2770
        %v2772 = vpop.f32.mrb[0].mxu0
        %v2773 = vadd.f32 0.0, %v2772
        %2774 = vdwg.mxu0
        %2775 = vmatprep.subr.mxu0 %v2419
        %2776 = vmatpush1.msra.mxu0 %v2418
        %2777 = vmatprep.subr.mxu0 %v2423
        %2778 = vmatpush1.msra.mxu0 %v2422
        %2779 = vmatprep.subr.mxu0 %v2427
        %2780 = vmatpush1.msra.mxu0 %v2426
        %2781 = vmatprep.subr.mxu0 %v2431
        %2782 = vmatpush1.msra.mxu0 %v2430
        %2783 = vmatprep.subr.mxu0 %v2435
        %2784 = vmatpush1.msra.mxu0 %v2434
        %2785 = vmatprep.subr.mxu0 %v2439
        %2786 = vmatpush1.msra.mxu0 %v2438
        %2787 = vmatprep.subr.mxu0 %v2443
        %2788 = vmatpush1.msra.mxu0 %v2442
        %2789 = vmatprep.subr.mxu0 %v2447
        %2790 = vmatpush1.msra.mxu0 %v2446
        %2791 = vmatprep.subr.mxu0 %v2451
        %2792 = vmatpush1.msra.mxu0 %v2450
        %2793 = vmatprep.subr.mxu0 %v2455
        %2794 = vmatpush1.msra.mxu0 %v2454
        %2795 = vmatprep.subr.mxu0 %v2459
        %2796 = vmatpush1.msra.mxu0 %v2458
        %2797 = vmatprep.subr.mxu0 %v2463
        %2798 = vmatpush1.msra.mxu0 %v2462
        %2799 = vmatprep.subr.mxu0 %v2467
        %2800 = vmatpush1.msra.mxu0 %v2466
        %2801 = vmatprep.subr.mxu0 %v2471
        %2802 = vmatpush1.msra.mxu0 %v2470
        %2803 = vmatprep.subr.mxu0 %v2475
        %2804 = vmatpush1.msra.mxu0 %v2474
        %2805 = vmatprep.subr.mxu0 %v2479
        %2806 = vmatpush1.msra.mxu0 %v2478
        %2807 = vmatprep.subr.mxu0 %v2483
        %2808 = vmatpush1.msra.mxu0 %v2482
        %2809 = vmatprep.subr.mxu0 %v2487
        %2810 = vmatpush1.msra.mxu0 %v2486
        %2811 = vmatprep.subr.mxu0 %v2491
        %2812 = vmatpush1.msra.mxu0 %v2490
        %2813 = vmatprep.subr.mxu0 %v2495
        %2814 = vmatpush1.msra.mxu0 %v2494
        %2815 = vmatprep.subr.mxu0 %v2499
        %2816 = vmatpush1.msra.mxu0 %v2498
        %2817 = vmatprep.subr.mxu0 %v2503
        %2818 = vmatpush1.msra.mxu0 %v2502
        %2819 = vmatprep.subr.mxu0 %v2507
        %2820 = vmatpush1.msra.mxu0 %v2506
        %2821 = vmatprep.subr.mxu0 %v2511
        %2822 = vmatpush1.msra.mxu0 %v2510
        %2823 = vmatprep.subr.mxu0 %v2515
        %2824 = vmatpush1.msra.mxu0 %v2514
        %2825 = vmatprep.subr.mxu0 %v2519
        %2826 = vmatpush1.msra.mxu0 %v2518
        %2827 = vmatprep.subr.mxu0 %v2523
        %2828 = vmatpush1.msra.mxu0 %v2522
        %2829 = vmatprep.subr.mxu0 %v2527
        %2830 = vmatpush1.msra.mxu0 %v2526
        %2831 = vmatprep.subr.mxu0 %v2531
        %2832 = vmatpush1.msra.mxu0 %v2530
        %2833 = vmatprep.subr.mxu0 %v2535
        %2834 = vmatpush1.msra.mxu0 %v2534
        %2835 = vmatprep.subr.mxu0 %v2539
        %2836 = vmatpush1.msra.mxu0 %v2538
        %2837 = vmatprep.subr.mxu0 %v2543
        %2838 = vmatpush1.msra.mxu0 %v2542
        %2839 = vmatprep.mubr.f32.mxu0 %v2259
        %2840 = vmatmul.mubr.f32.gmra.mrb[0].mxu0 %v2258
        %v2841 = vpop.f32.mrb[0].mxu0
        %v2842 = vadd.f32 %v2765, %v2841
        %v2843 = vpop.f32.mrb[0].mxu0
        %v2844 = vadd.f32 %v2767, %v2843
        %2845 = vmatprep.mubr.f32.mxu0 %v2263
        %2846 = vmatmul.mubr.f32.gmra.mrb[0].mxu0 %v2262
        %v2847 = vpop.f32.mrb[0].mxu0
        %v2848 = vadd.f32 %v2771, %v2847
        %v2849 = vpop.f32.mrb[0].mxu0
        %v2850 = vadd.f32 %v2773, %v2849
        %2851 = vdwg.mxu0
        %vm2852 = vcmask 130048
        %v2854 = vsel %vm2852, %v2286, 0
        %v2857 = vsel %vm2852, %v2287, 0
        %2859 = vmatprep.subr.mxu0 %v2690
        %2860 = vmatpush1.msra.mxu0 %v2688
        %2861 = vmatprep.subr.mxu0 %v2696
        %2862 = vmatpush1.msra.mxu0 %v2694
        %2863 = vmatprep.subr.mxu0 0.0
        %2864 = vmatpush1.msra.mxu0 0.0
        %2865 = vmatprep.subr.mxu0 0.0
        %2866 = vmatpush1.msra.mxu0 0.0
        %2867 = vmatprep.subr.mxu0 0.0
        %2868 = vmatpush1.msra.mxu0 0.0
        %2869 = vmatprep.subr.mxu0 0.0
        %2870 = vmatpush1.msra.mxu0 0.0
        %2871 = vmatprep.subr.mxu0 0.0
        %2872 = vmatpush1.msra.mxu0 0.0
        %2873 = vmatprep.subr.mxu0 0.0
        %2874 = vmatpush1.msra.mxu0 0.0
        %2875 = vmatprep.subr.mxu0 0.0
        %2876 = vmatpush1.msra.mxu0 0.0
        %2877 = vmatprep.subr.mxu0 0.0
        %2878 = vmatpush1.msra.mxu0 0.0
        %2879 = vmatprep.subr.mxu0 0.0
        %2880 = vmatpush1.msra.mxu0 0.0
        %2881 = vmatprep.subr.mxu0 0.0
        %2882 = vmatpush1.msra.mxu0 0.0
        %2883 = vmatprep.subr.mxu0 0.0
        %2884 = vmatpush1.msra.mxu0 0.0
        %2885 = vmatprep.subr.mxu0 0.0
        %2886 = vmatpush1.msra.mxu0 0.0
        %2887 = vmatprep.subr.mxu0 0.0
        %2888 = vmatpush1.msra.mxu0 0.0
        %2889 = vmatprep.subr.mxu0 0.0
        %2890 = vmatpush1.msra.mxu0 0.0
        %2891 = vmatprep.subr.mxu0 0.0
        %2892 = vmatpush1.msra.mxu0 0.0
        %2893 = vmatprep.subr.mxu0 0.0
        %2894 = vmatpush1.msra.mxu0 0.0
        %2895 = vmatprep.subr.mxu0 0.0
        %2896 = vmatpush1.msra.mxu0 0.0
        %2897 = vmatprep.subr.mxu0 0.0
        %2898 = vmatpush1.msra.mxu0 0.0
        %2899 = vmatprep.subr.mxu0 0.0
        %2900 = vmatpush1.msra.mxu0 0.0
        %2901 = vmatprep.subr.mxu0 0.0
        %2902 = vmatpush1.msra.mxu0 0.0
        %2903 = vmatprep.subr.mxu0 0.0
        %2904 = vmatpush1.msra.mxu0 0.0
        %2905 = vmatprep.subr.mxu0 0.0
        %2906 = vmatpush1.msra.mxu0 0.0
        %2907 = vmatprep.subr.mxu0 0.0
        %2908 = vmatpush1.msra.mxu0 0.0
        %2909 = vmatprep.subr.mxu0 0.0
        %2910 = vmatpush1.msra.mxu0 0.0
        %2911 = vmatprep.subr.mxu0 0.0
        %2912 = vmatpush1.msra.mxu0 0.0
        %2913 = vmatprep.subr.mxu0 0.0
        %2914 = vmatpush1.msra.mxu0 0.0
        %2915 = vmatprep.subr.mxu0 0.0
        %2916 = vmatpush1.msra.mxu0 0.0
        %2917 = vmatprep.subr.mxu0 0.0
        %2918 = vmatpush1.msra.mxu0 0.0
        %2919 = vmatprep.subr.mxu0 0.0
        %2920 = vmatpush1.msra.mxu0 0.0
        %2921 = vmatprep.subr.mxu0 0.0
        %2922 = vmatpush1.msra.mxu0 0.0
        %2923 = vmatprep.mubr.f32.mxu0 0.0
        %2924 = vmatmul.mubr.f32.gmra.mrb[0].mxu0 %v2854
        %v2925 = vpop.f32.mrb[0].mxu0
        %v2926 = vadd.f32 0.0, %v2925
        %v2927 = vpop.f32.mrb[0].mxu0
        %v2928 = vadd.f32 0.0, %v2927
        %2929 = vmatprep.mubr.f32.mxu0 0.0
        %2930 = vmatmul.mubr.f32.gmra.mrb[0].mxu0 %v2857
        %v2931 = vpop.f32.mrb[0].mxu0
        %v2932 = vadd.f32 0.0, %v2931
        %v2933 = vpop.f32.mrb[0].mxu0
        %v2934 = vadd.f32 0.0, %v2933
        %2935 = vdwg.mxu0
        %2936 = vmatprep.subr.mxu0 %v2844
        %2937 = vmatpush1.msra.mxu0 %v2842
        %2938 = vmatprep.subr.mxu0 %v2850
        %2939 = vmatpush1.msra.mxu0 %v2848
        %2940 = vmatprep.subr.mxu0 0.0
        %2941 = vmatpush1.msra.mxu0 0.0
        %2942 = vmatprep.subr.mxu0 0.0
        %2943 = vmatpush1.msra.mxu0 0.0
        %2944 = vmatprep.subr.mxu0 0.0
        %2945 = vmatpush1.msra.mxu0 0.0
        %2946 = vmatprep.subr.mxu0 0.0
        %2947 = vmatpush1.msra.mxu0 0.0
        %2948 = vmatprep.subr.mxu0 0.0
        %2949 = vmatpush1.msra.mxu0 0.0
        %2950 = vmatprep.subr.mxu0 0.0
        %2951 = vmatpush1.msra.mxu0 0.0
        %2952 = vmatprep.subr.mxu0 0.0
        %2953 = vmatpush1.msra.mxu0 0.0
        %2954 = vmatprep.subr.mxu0 0.0
        %2955 = vmatpush1.msra.mxu0 0.0
        %2956 = vmatprep.subr.mxu0 0.0
        %2957 = vmatpush1.msra.mxu0 0.0
        %2958 = vmatprep.subr.mxu0 0.0
        %2959 = vmatpush1.msra.mxu0 0.0
        %2960 = vmatprep.subr.mxu0 0.0
        %2961 = vmatpush1.msra.mxu0 0.0
        %2962 = vmatprep.subr.mxu0 0.0
        %2963 = vmatpush1.msra.mxu0 0.0
        %2964 = vmatprep.subr.mxu0 0.0
        %2965 = vmatpush1.msra.mxu0 0.0
        %2966 = vmatprep.subr.mxu0 0.0
        %2967 = vmatpush1.msra.mxu0 0.0
        %2968 = vmatprep.subr.mxu0 0.0
        %2969 = vmatpush1.msra.mxu0 0.0
        %2970 = vmatprep.subr.mxu0 0.0
        %2971 = vmatpush1.msra.mxu0 0.0
        %2972 = vmatprep.subr.mxu0 0.0
        %2973 = vmatpush1.msra.mxu0 0.0
        %2974 = vmatprep.subr.mxu0 0.0
        %2975 = vmatpush1.msra.mxu0 0.0
        %2976 = vmatprep.subr.mxu0 0.0
        %2977 = vmatpush1.msra.mxu0 0.0
        %2978 = vmatprep.subr.mxu0 0.0
        %2979 = vmatpush1.msra.mxu0 0.0
        %2980 = vmatprep.subr.mxu0 0.0
        %2981 = vmatpush1.msra.mxu0 0.0
        %2982 = vmatprep.subr.mxu0 0.0
        %2983 = vmatpush1.msra.mxu0 0.0
        %2984 = vmatprep.subr.mxu0 0.0
        %2985 = vmatpush1.msra.mxu0 0.0
        %2986 = vmatprep.subr.mxu0 0.0
        %2987 = vmatpush1.msra.mxu0 0.0
        %2988 = vmatprep.subr.mxu0 0.0
        %2989 = vmatpush1.msra.mxu0 0.0
        %2990 = vmatprep.subr.mxu0 0.0
        %2991 = vmatpush1.msra.mxu0 0.0
        %2992 = vmatprep.subr.mxu0 0.0
        %2993 = vmatpush1.msra.mxu0 0.0
        %2994 = vmatprep.subr.mxu0 0.0
        %2995 = vmatpush1.msra.mxu0 0.0
        %2996 = vmatprep.subr.mxu0 0.0
        %2997 = vmatpush1.msra.mxu0 0.0
        %2998 = vmatprep.subr.mxu0 0.0
        %2999 = vmatpush1.msra.mxu0 0.0
        %3000 = vmatprep.mubr.f32.mxu0 0.0
        %3001 = vmatmul.mubr.f32.gmra.mrb[0].mxu0 %v2854
        %v3002 = vpop.f32.mrb[0].mxu0
        %v3003 = vadd.f32 0.0, %v3002
        %v3004 = vpop.f32.mrb[0].mxu0
        %v3005 = vadd.f32 0.0, %v3004
        %3006 = vmatprep.mubr.f32.mxu0 0.0
        %3007 = vmatmul.mubr.f32.gmra.mrb[0].mxu0 %v2857
        %v3008 = vpop.f32.mrb[0].mxu0
        %v3009 = vadd.f32 0.0, %v3008
        %v3010 = vpop.f32.mrb[0].mxu0
        %v3011 = vadd.f32 0.0, %v3010
        %3012 = vdwg.mxu0
        %v3013 = vadd.f32 %v2269, %v2926
        %v3014 = vadd.f32 %v2273, %v2928
        %v3015 = vadd.f32 %v2277, %v3003
        %v3016 = vadd.f32 %v2281, %v3005
        %v3017 = vadd.f32 %v2269, %v2932
        %v3018 = vadd.f32 %v2273, %v2934
        %v3019 = vadd.f32 %v2277, %v3009
        %v3020 = vadd.f32 %v2281, %v3011
        %s3021 = scalar_lea.vmem [#allocation26], 16
        %v3022 = vld [vmem:[%s3021] sm:$0xff]
        %v3023 = vld [vmem:[%s3021 + $0x8] sm:$0xff]
        %s3024 = scalar_lea.vmem [#allocation28], 2048
        %v3025 = vld [vmem:[%s3024] sm:$0xff]
        %v3026 = vld [vmem:[%s3024 + $0x8] sm:$0xff]
        %v3027 = vld [vmem:[%s3024 + $0x10] sm:$0xff]
        %v3028 = vld [vmem:[%s3024 + $0x18] sm:$0xff]
        %v3029 = vld [vmem:[%s3024 + $0x20] sm:$0xff]
        %v3030 = vld [vmem:[%s3024 + $0x28] sm:$0xff]
        %v3031 = vld [vmem:[%s3024 + $0x30] sm:$0xff]
        %v3032 = vld [vmem:[%s3024 + $0x38] sm:$0xff]
        %v3033 = vld [vmem:[%s3024 + $0x40] sm:$0xff]
        %v3034 = vld [vmem:[%s3024 + $0x48] sm:$0xff]
        %v3035 = vld [vmem:[%s3024 + $0x50] sm:$0xff]
        %v3036 = vld [vmem:[%s3024 + $0x58] sm:$0xff]
        %v3037 = vld [vmem:[%s3024 + $0x60] sm:$0xff]
        %v3038 = vld [vmem:[%s3024 + $0x68] sm:$0xff]
        %v3039 = vld [vmem:[%s3024 + $0x70] sm:$0xff]
        %v3040 = vld [vmem:[%s3024 + $0x78] sm:$0xff]
        %v3041 = vld [vmem:[%s3024 + $0x80] sm:$0xff]
        %v3042 = vld [vmem:[%s3024 + $0x88] sm:$0xff]
        %v3043 = vld [vmem:[%s3024 + $0x90] sm:$0xff]
        %v3044 = vld [vmem:[%s3024 + $0x98] sm:$0xff]
        %v3045 = vld [vmem:[%s3024 + $0xa0] sm:$0xff]
        %v3046 = vld [vmem:[%s3024 + $0xa8] sm:$0xff]
        %v3047 = vld [vmem:[%s3024 + $0xb0] sm:$0xff]
        %v3048 = vld [vmem:[%s3024 + $0xb8] sm:$0xff]
        %v3049 = vld [vmem:[%s3024 + $0xc0] sm:$0xff]
        %v3050 = vld [vmem:[%s3024 + $0xc8] sm:$0xff]
        %v3051 = vld [vmem:[%s3024 + $0xd0] sm:$0xff]
        %v3052 = vld [vmem:[%s3024 + $0xd8] sm:$0xff]
        %v3053 = vld [vmem:[%s3024 + $0xe0] sm:$0xff]
        %v3054 = vld [vmem:[%s3024 + $0xe8] sm:$0xff]
        %v3055 = vld [vmem:[%s3024 + $0xf0] sm:$0xff]
        %v3056 = vld [vmem:[%s3024 + $0xf8] sm:$0xff]
        %v3057 = vld [vmem:[%s3024 + $0x100] sm:$0xff]
        %v3058 = vld [vmem:[%s3024 + $0x108] sm:$0xff]
        %v3059 = vld [vmem:[%s3024 + $0x110] sm:$0xff]
        %v3060 = vld [vmem:[%s3024 + $0x118] sm:$0xff]
        %v3061 = vld [vmem:[%s3024 + $0x120] sm:$0xff]
        %v3062 = vld [vmem:[%s3024 + $0x128] sm:$0xff]
        %v3063 = vld [vmem:[%s3024 + $0x130] sm:$0xff]
        %v3064 = vld [vmem:[%s3024 + $0x138] sm:$0xff]
        %v3065 = vld [vmem:[%s3024 + $0x140] sm:$0xff]
        %v3066 = vld [vmem:[%s3024 + $0x148] sm:$0xff]
        %v3067 = vld [vmem:[%s3024 + $0x150] sm:$0xff]
        %v3068 = vld [vmem:[%s3024 + $0x158] sm:$0xff]
        %v3069 = vld [vmem:[%s3024 + $0x160] sm:$0xff]
        %v3070 = vld [vmem:[%s3024 + $0x168] sm:$0xff]
        %v3071 = vld [vmem:[%s3024 + $0x170] sm:$0xff]
        %v3072 = vld [vmem:[%s3024 + $0x178] sm:$0xff]
        %v3073 = vld [vmem:[%s3024 + $0x180] sm:$0xff]
        %v3074 = vld [vmem:[%s3024 + $0x188] sm:$0xff]
        %v3075 = vld [vmem:[%s3024 + $0x190] sm:$0xff]
        %v3076 = vld [vmem:[%s3024 + $0x198] sm:$0xff]
        %v3077 = vld [vmem:[%s3024 + $0x1a0] sm:$0xff]
        %v3078 = vld [vmem:[%s3024 + $0x1a8] sm:$0xff]
        %v3079 = vld [vmem:[%s3024 + $0x1b0] sm:$0xff]
        %v3080 = vld [vmem:[%s3024 + $0x1b8] sm:$0xff]
        %v3081 = vld [vmem:[%s3024 + $0x1c0] sm:$0xff]
        %v3082 = vld [vmem:[%s3024 + $0x1c8] sm:$0xff]
        %v3083 = vld [vmem:[%s3024 + $0x1d0] sm:$0xff]
        %v3084 = vld [vmem:[%s3024 + $0x1d8] sm:$0xff]
        %v3085 = vld [vmem:[%s3024 + $0x1e0] sm:$0xff]
        %v3086 = vld [vmem:[%s3024 + $0x1e8] sm:$0xff]
        %v3087 = vld [vmem:[%s3024 + $0x1f0] sm:$0xff]
        %v3088 = vld [vmem:[%s3024 + $0x1f8] sm:$0xff]
        %v3089 = vld [vmem:[%s3024 + $0x200] sm:$0xff]
        %v3090 = vld [vmem:[%s3024 + $0x208] sm:$0xff]
        %v3091 = vld [vmem:[%s3024 + $0x210] sm:$0xff]
        %v3092 = vld [vmem:[%s3024 + $0x218] sm:$0xff]
        %v3093 = vld [vmem:[%s3024 + $0x220] sm:$0xff]
        %v3094 = vld [vmem:[%s3024 + $0x228] sm:$0xff]
        %v3095 = vld [vmem:[%s3024 + $0x230] sm:$0xff]
        %v3096 = vld [vmem:[%s3024 + $0x238] sm:$0xff]
        %v3097 = vld [vmem:[%s3024 + $0x240] sm:$0xff]
        %v3098 = vld [vmem:[%s3024 + $0x248] sm:$0xff]
        %v3099 = vld [vmem:[%s3024 + $0x250] sm:$0xff]
        %v3100 = vld [vmem:[%s3024 + $0x258] sm:$0xff]
        %v3101 = vld [vmem:[%s3024 + $0x260] sm:$0xff]
        %v3102 = vld [vmem:[%s3024 + $0x268] sm:$0xff]
        %v3103 = vld [vmem:[%s3024 + $0x270] sm:$0xff]
        %v3104 = vld [vmem:[%s3024 + $0x278] sm:$0xff]
        %v3105 = vld [vmem:[%s3024 + $0x280] sm:$0xff]
        %v3106 = vld [vmem:[%s3024 + $0x288] sm:$0xff]
        %v3107 = vld [vmem:[%s3024 + $0x290] sm:$0xff]
        %v3108 = vld [vmem:[%s3024 + $0x298] sm:$0xff]
        %v3109 = vld [vmem:[%s3024 + $0x2a0] sm:$0xff]
        %v3110 = vld [vmem:[%s3024 + $0x2a8] sm:$0xff]
        %v3111 = vld [vmem:[%s3024 + $0x2b0] sm:$0xff]
        %v3112 = vld [vmem:[%s3024 + $0x2b8] sm:$0xff]
        %v3113 = vld [vmem:[%s3024 + $0x2c0] sm:$0xff]
        %v3114 = vld [vmem:[%s3024 + $0x2c8] sm:$0xff]
        %v3115 = vld [vmem:[%s3024 + $0x2d0] sm:$0xff]
        %v3116 = vld [vmem:[%s3024 + $0x2d8] sm:$0xff]
        %v3117 = vld [vmem:[%s3024 + $0x2e0] sm:$0xff]
        %v3118 = vld [vmem:[%s3024 + $0x2e8] sm:$0xff]
        %v3119 = vld [vmem:[%s3024 + $0x2f0] sm:$0xff]
        %v3120 = vld [vmem:[%s3024 + $0x2f8] sm:$0xff]
        %v3121 = vld [vmem:[%s3024 + $0x300] sm:$0xff]
        %v3122 = vld [vmem:[%s3024 + $0x308] sm:$0xff]
        %v3123 = vld [vmem:[%s3024 + $0x310] sm:$0xff]
        %v3124 = vld [vmem:[%s3024 + $0x318] sm:$0xff]
        %v3125 = vld [vmem:[%s3024 + $0x320] sm:$0xff]
        %v3126 = vld [vmem:[%s3024 + $0x328] sm:$0xff]
        %v3127 = vld [vmem:[%s3024 + $0x330] sm:$0xff]
        %v3128 = vld [vmem:[%s3024 + $0x338] sm:$0xff]
        %v3129 = vld [vmem:[%s3024 + $0x340] sm:$0xff]
        %v3130 = vld [vmem:[%s3024 + $0x348] sm:$0xff]
        %v3131 = vld [vmem:[%s3024 + $0x350] sm:$0xff]
        %v3132 = vld [vmem:[%s3024 + $0x358] sm:$0xff]
        %v3133 = vld [vmem:[%s3024 + $0x360] sm:$0xff]
        %v3134 = vld [vmem:[%s3024 + $0x368] sm:$0xff]
        %v3135 = vld [vmem:[%s3024 + $0x370] sm:$0xff]
        %v3136 = vld [vmem:[%s3024 + $0x378] sm:$0xff]
        %v3137 = vld [vmem:[%s3024 + $0x380] sm:$0xff]
        %v3138 = vld [vmem:[%s3024 + $0x388] sm:$0xff]
        %v3139 = vld [vmem:[%s3024 + $0x390] sm:$0xff]
        %v3140 = vld [vmem:[%s3024 + $0x398] sm:$0xff]
        %v3141 = vld [vmem:[%s3024 + $0x3a0] sm:$0xff]
        %v3142 = vld [vmem:[%s3024 + $0x3a8] sm:$0xff]
        %v3143 = vld [vmem:[%s3024 + $0x3b0] sm:$0xff]
        %v3144 = vld [vmem:[%s3024 + $0x3b8] sm:$0xff]
        %v3145 = vld [vmem:[%s3024 + $0x3c0] sm:$0xff]
        %v3146 = vld [vmem:[%s3024 + $0x3c8] sm:$0xff]
        %v3147 = vld [vmem:[%s3024 + $0x3d0] sm:$0xff]
        %v3148 = vld [vmem:[%s3024 + $0x3d8] sm:$0xff]
        %v3149 = vld [vmem:[%s3024 + $0x3e0] sm:$0xff]
        %v3150 = vld [vmem:[%s3024 + $0x3e8] sm:$0xff]
        %v3151 = vld [vmem:[%s3024 + $0x3f0] sm:$0xff]
        %v3152 = vld [vmem:[%s3024 + $0x3f8] sm:$0xff]
        %v3153 = vld [vmem:[%s3024 + $0x400] sm:$0xff]
        %v3154 = vld [vmem:[%s3024 + $0x408] sm:$0xff]
        %v3155 = vld [vmem:[%s3024 + $0x410] sm:$0xff]
        %v3156 = vld [vmem:[%s3024 + $0x418] sm:$0xff]
        %v3157 = vld [vmem:[%s3024 + $0x420] sm:$0xff]
        %v3158 = vld [vmem:[%s3024 + $0x428] sm:$0xff]
        %v3159 = vld [vmem:[%s3024 + $0x430] sm:$0xff]
        %v3160 = vld [vmem:[%s3024 + $0x438] sm:$0xff]
        %v3161 = vld [vmem:[%s3024 + $0x440] sm:$0xff]
        %v3162 = vld [vmem:[%s3024 + $0x448] sm:$0xff]
        %v3163 = vld [vmem:[%s3024 + $0x450] sm:$0xff]
        %v3164 = vld [vmem:[%s3024 + $0x458] sm:$0xff]
        %v3165 = vld [vmem:[%s3024 + $0x460] sm:$0xff]
        %v3166 = vld [vmem:[%s3024 + $0x468] sm:$0xff]
        %v3167 = vld [vmem:[%s3024 + $0x470] sm:$0xff]
        %v3168 = vld [vmem:[%s3024 + $0x478] sm:$0xff]
        %v3169 = vld [vmem:[%s3024 + $0x480] sm:$0xff]
        %v3170 = vld [vmem:[%s3024 + $0x488] sm:$0xff]
        %v3171 = vld [vmem:[%s3024 + $0x490] sm:$0xff]
        %v3172 = vld [vmem:[%s3024 + $0x498] sm:$0xff]
        %v3173 = vld [vmem:[%s3024 + $0x4a0] sm:$0xff]
        %v3174 = vld [vmem:[%s3024 + $0x4a8] sm:$0xff]
        %v3175 = vld [vmem:[%s3024 + $0x4b0] sm:$0xff]
        %v3176 = vld [vmem:[%s3024 + $0x4b8] sm:$0xff]
        %v3177 = vld [vmem:[%s3024 + $0x4c0] sm:$0xff]
        %v3178 = vld [vmem:[%s3024 + $0x4c8] sm:$0xff]
        %v3179 = vld [vmem:[%s3024 + $0x4d0] sm:$0xff]
        %v3180 = vld [vmem:[%s3024 + $0x4d8] sm:$0xff]
        %v3181 = vld [vmem:[%s3024 + $0x4e0] sm:$0xff]
        %v3182 = vld [vmem:[%s3024 + $0x4e8] sm:$0xff]
        %v3183 = vld [vmem:[%s3024 + $0x4f0] sm:$0xff]
        %v3184 = vld [vmem:[%s3024 + $0x4f8] sm:$0xff]
        %v3185 = vld [vmem:[%s3024 + $0x500] sm:$0xff]
        %v3186 = vld [vmem:[%s3024 + $0x508] sm:$0xff]
        %v3187 = vld [vmem:[%s3024 + $0x510] sm:$0xff]
        %v3188 = vld [vmem:[%s3024 + $0x518] sm:$0xff]
        %v3189 = vld [vmem:[%s3024 + $0x520] sm:$0xff]
        %v3190 = vld [vmem:[%s3024 + $0x528] sm:$0xff]
        %v3191 = vld [vmem:[%s3024 + $0x530] sm:$0xff]
        %v3192 = vld [vmem:[%s3024 + $0x538] sm:$0xff]
        %v3193 = vld [vmem:[%s3024 + $0x540] sm:$0xff]
        %v3194 = vld [vmem:[%s3024 + $0x548] sm:$0xff]
        %v3195 = vld [vmem:[%s3024 + $0x550] sm:$0xff]
        %v3196 = vld [vmem:[%s3024 + $0x558] sm:$0xff]
        %v3197 = vld [vmem:[%s3024 + $0x560] sm:$0xff]
        %v3198 = vld [vmem:[%s3024 + $0x568] sm:$0xff]
        %v3199 = vld [vmem:[%s3024 + $0x570] sm:$0xff]
        %v3200 = vld [vmem:[%s3024 + $0x578] sm:$0xff]
        %v3201 = vld [vmem:[%s3024 + $0x580] sm:$0xff]
        %v3202 = vld [vmem:[%s3024 + $0x588] sm:$0xff]
        %v3203 = vld [vmem:[%s3024 + $0x590] sm:$0xff]
        %v3204 = vld [vmem:[%s3024 + $0x598] sm:$0xff]
        %v3205 = vld [vmem:[%s3024 + $0x5a0] sm:$0xff]
        %v3206 = vld [vmem:[%s3024 + $0x5a8] sm:$0xff]
        %v3207 = vld [vmem:[%s3024 + $0x5b0] sm:$0xff]
        %v3208 = vld [vmem:[%s3024 + $0x5b8] sm:$0xff]
        %v3209 = vld [vmem:[%s3024 + $0x5c0] sm:$0xff]
        %v3210 = vld [vmem:[%s3024 + $0x5c8] sm:$0xff]
        %v3211 = vld [vmem:[%s3024 + $0x5d0] sm:$0xff]
        %v3212 = vld [vmem:[%s3024 + $0x5d8] sm:$0xff]
        %v3213 = vld [vmem:[%s3024 + $0x5e0] sm:$0xff]
        %v3214 = vld [vmem:[%s3024 + $0x5e8] sm:$0xff]
        %v3215 = vld [vmem:[%s3024 + $0x5f0] sm:$0xff]
        %v3216 = vld [vmem:[%s3024 + $0x5f8] sm:$0xff]
        %v3217 = vld [vmem:[%s3024 + $0x600] sm:$0xff]
        %v3218 = vld [vmem:[%s3024 + $0x608] sm:$0xff]
        %v3219 = vld [vmem:[%s3024 + $0x610] sm:$0xff]
        %v3220 = vld [vmem:[%s3024 + $0x618] sm:$0xff]
        %v3221 = vld [vmem:[%s3024 + $0x620] sm:$0xff]
        %v3222 = vld [vmem:[%s3024 + $0x628] sm:$0xff]
        %v3223 = vld [vmem:[%s3024 + $0x630] sm:$0xff]
        %v3224 = vld [vmem:[%s3024 + $0x638] sm:$0xff]
        %v3225 = vld [vmem:[%s3024 + $0x640] sm:$0xff]
        %v3226 = vld [vmem:[%s3024 + $0x648] sm:$0xff]
        %v3227 = vld [vmem:[%s3024 + $0x650] sm:$0xff]
        %v3228 = vld [vmem:[%s3024 + $0x658] sm:$0xff]
        %v3229 = vld [vmem:[%s3024 + $0x660] sm:$0xff]
        %v3230 = vld [vmem:[%s3024 + $0x668] sm:$0xff]
        %v3231 = vld [vmem:[%s3024 + $0x670] sm:$0xff]
        %v3232 = vld [vmem:[%s3024 + $0x678] sm:$0xff]
        %v3233 = vld [vmem:[%s3024 + $0x680] sm:$0xff]
        %v3234 = vld [vmem:[%s3024 + $0x688] sm:$0xff]
        %v3235 = vld [vmem:[%s3024 + $0x690] sm:$0xff]
        %v3236 = vld [vmem:[%s3024 + $0x698] sm:$0xff]
        %v3237 = vld [vmem:[%s3024 + $0x6a0] sm:$0xff]
        %v3238 = vld [vmem:[%s3024 + $0x6a8] sm:$0xff]
        %v3239 = vld [vmem:[%s3024 + $0x6b0] sm:$0xff]
        %v3240 = vld [vmem:[%s3024 + $0x6b8] sm:$0xff]
        %v3241 = vld [vmem:[%s3024 + $0x6c0] sm:$0xff]
        %v3242 = vld [vmem:[%s3024 + $0x6c8] sm:$0xff]
        %v3243 = vld [vmem:[%s3024 + $0x6d0] sm:$0xff]
        %v3244 = vld [vmem:[%s3024 + $0x6d8] sm:$0xff]
        %v3245 = vld [vmem:[%s3024 + $0x6e0] sm:$0xff]
        %v3246 = vld [vmem:[%s3024 + $0x6e8] sm:$0xff]
        %v3247 = vld [vmem:[%s3024 + $0x6f0] sm:$0xff]
        %v3248 = vld [vmem:[%s3024 + $0x6f8] sm:$0xff]
        %v3249 = vld [vmem:[%s3024 + $0x700] sm:$0xff]
        %v3250 = vld [vmem:[%s3024 + $0x708] sm:$0xff]
        %v3251 = vld [vmem:[%s3024 + $0x710] sm:$0xff]
        %v3252 = vld [vmem:[%s3024 + $0x718] sm:$0xff]
        %v3253 = vld [vmem:[%s3024 + $0x720] sm:$0xff]
        %v3254 = vld [vmem:[%s3024 + $0x728] sm:$0xff]
        %v3255 = vld [vmem:[%s3024 + $0x730] sm:$0xff]
        %v3256 = vld [vmem:[%s3024 + $0x738] sm:$0xff]
        %v3257 = vld [vmem:[%s3024 + $0x740] sm:$0xff]
        %v3258 = vld [vmem:[%s3024 + $0x748] sm:$0xff]
        %v3259 = vld [vmem:[%s3024 + $0x750] sm:$0xff]
        %v3260 = vld [vmem:[%s3024 + $0x758] sm:$0xff]
        %v3261 = vld [vmem:[%s3024 + $0x760] sm:$0xff]
        %v3262 = vld [vmem:[%s3024 + $0x768] sm:$0xff]
        %v3263 = vld [vmem:[%s3024 + $0x770] sm:$0xff]
        %v3264 = vld [vmem:[%s3024 + $0x778] sm:$0xff]
        %v3265 = vld [vmem:[%s3024 + $0x780] sm:$0xff]
        %v3266 = vld [vmem:[%s3024 + $0x788] sm:$0xff]
        %v3267 = vld [vmem:[%s3024 + $0x790] sm:$0xff]
        %v3268 = vld [vmem:[%s3024 + $0x798] sm:$0xff]
        %v3269 = vld [vmem:[%s3024 + $0x7a0] sm:$0xff]
        %v3270 = vld [vmem:[%s3024 + $0x7a8] sm:$0xff]
        %v3271 = vld [vmem:[%s3024 + $0x7b0] sm:$0xff]
        %v3272 = vld [vmem:[%s3024 + $0x7b8] sm:$0xff]
        %v3273 = vld [vmem:[%s3024 + $0x7c0] sm:$0xff]
        %v3274 = vld [vmem:[%s3024 + $0x7c8] sm:$0xff]
        %v3275 = vld [vmem:[%s3024 + $0x7d0] sm:$0xff]
        %v3276 = vld [vmem:[%s3024 + $0x7d8] sm:$0xff]
        %v3277 = vld [vmem:[%s3024 + $0x7e0] sm:$0xff]
        %v3278 = vld [vmem:[%s3024 + $0x7e8] sm:$0xff]
        %v3279 = vld [vmem:[%s3024 + $0x7f0] sm:$0xff]
        %v3280 = vld [vmem:[%s3024 + $0x7f8] sm:$0xff]
        %3281 = vmatprep.subr.mxu0 %v3026
        %3282 = vmatpush1.msra.mxu0 %v3025
        %3283 = vmatprep.subr.mxu0 %v3030
        %3284 = vmatpush1.msra.mxu0 %v3029
        %3285 = vmatprep.subr.mxu0 %v3034
        %3286 = vmatpush1.msra.mxu0 %v3033
        %3287 = vmatprep.subr.mxu0 %v3038
        %3288 = vmatpush1.msra.mxu0 %v3037
        %3289 = vmatprep.subr.mxu0 %v3042
        %3290 = vmatpush1.msra.mxu0 %v3041
        %3291 = vmatprep.subr.mxu0 %v3046
        %3292 = vmatpush1.msra.mxu0 %v3045
        %3293 = vmatprep.subr.mxu0 %v3050
        %3294 = vmatpush1.msra.mxu0 %v3049
        %3295 = vmatprep.subr.mxu0 %v3054
        %3296 = vmatpush1.msra.mxu0 %v3053
        %3297 = vmatprep.subr.mxu0 %v3058
        %3298 = vmatpush1.msra.mxu0 %v3057
        %3299 = vmatprep.subr.mxu0 %v3062
        %3300 = vmatpush1.msra.mxu0 %v3061
        %3301 = vmatprep.subr.mxu0 %v3066
        %3302 = vmatpush1.msra.mxu0 %v3065
        %3303 = vmatprep.subr.mxu0 %v3070
        %3304 = vmatpush1.msra.mxu0 %v3069
        %3305 = vmatprep.subr.mxu0 %v3074
        %3306 = vmatpush1.msra.mxu0 %v3073
        %3307 = vmatprep.subr.mxu0 %v3078
        %3308 = vmatpush1.msra.mxu0 %v3077
        %3309 = vmatprep.subr.mxu0 %v3082
        %3310 = vmatpush1.msra.mxu0 %v3081
        %3311 = vmatprep.subr.mxu0 %v3086
        %3312 = vmatpush1.msra.mxu0 %v3085
        %3313 = vmatprep.subr.mxu0 %v3090
        %3314 = vmatpush1.msra.mxu0 %v3089
        %3315 = vmatprep.subr.mxu0 %v3094
        %3316 = vmatpush1.msra.mxu0 %v3093
        %3317 = vmatprep.subr.mxu0 %v3098
        %3318 = vmatpush1.msra.mxu0 %v3097
        %3319 = vmatprep.subr.mxu0 %v3102
        %3320 = vmatpush1.msra.mxu0 %v3101
        %3321 = vmatprep.subr.mxu0 %v3106
        %3322 = vmatpush1.msra.mxu0 %v3105
        %3323 = vmatprep.subr.mxu0 %v3110
        %3324 = vmatpush1.msra.mxu0 %v3109
        %3325 = vmatprep.subr.mxu0 %v3114
        %3326 = vmatpush1.msra.mxu0 %v3113
        %3327 = vmatprep.subr.mxu0 %v3118
        %3328 = vmatpush1.msra.mxu0 %v3117
        %3329 = vmatprep.subr.mxu0 %v3122
        %3330 = vmatpush1.msra.mxu0 %v3121
        %3331 = vmatprep.subr.mxu0 %v3126
        %3332 = vmatpush1.msra.mxu0 %v3125
        %3333 = vmatprep.subr.mxu0 %v3130
        %3334 = vmatpush1.msra.mxu0 %v3129
        %3335 = vmatprep.subr.mxu0 %v3134
        %3336 = vmatpush1.msra.mxu0 %v3133
        %3337 = vmatprep.subr.mxu0 %v3138
        %3338 = vmatpush1.msra.mxu0 %v3137
        %3339 = vmatprep.subr.mxu0 %v3142
        %3340 = vmatpush1.msra.mxu0 %v3141
        %3341 = vmatprep.subr.mxu0 %v3146
        %3342 = vmatpush1.msra.mxu0 %v3145
        %3343 = vmatprep.subr.mxu0 %v3150
        %3344 = vmatpush1.msra.mxu0 %v3149
        %3345 = vmatprep.mubr.f32.mxu0 %v2257
        %3346 = vmatmul.mubr.f32.gmra.mrb[0].mxu0 %v2256
        %v3347 = vpop.f32.mrb[0].mxu0
        %v3348 = vadd.f32 0.0, %v3347
        %v3349 = vpop.f32.mrb[0].mxu0
        %v3350 = vadd.f32 0.0, %v3349
        %3351 = vmatprep.mubr.f32.mxu0 %v2261
        %3352 = vmatmul.mubr.f32.gmra.mrb[0].mxu0 %v2260
        %v3353 = vpop.f32.mrb[0].mxu0
        %v3354 = vadd.f32 0.0, %v3353
        %v3355 = vpop.f32.mrb[0].mxu0
        %v3356 = vadd.f32 0.0, %v3355
        %3357 = vdwg.mxu0
        %3358 = vmatprep.subr.mxu0 %v3154
        %3359 = vmatpush1.msra.mxu0 %v3153
        %3360 = vmatprep.subr.mxu0 %v3158
        %3361 = vmatpush1.msra.mxu0 %v3157
        %3362 = vmatprep.subr.mxu0 %v3162
        %3363 = vmatpush1.msra.mxu0 %v3161
        %3364 = vmatprep.subr.mxu0 %v3166
        %3365 = vmatpush1.msra.mxu0 %v3165
        %3366 = vmatprep.subr.mxu0 %v3170
        %3367 = vmatpush1.msra.mxu0 %v3169
        %3368 = vmatprep.subr.mxu0 %v3174
        %3369 = vmatpush1.msra.mxu0 %v3173
        %3370 = vmatprep.subr.mxu0 %v3178
        %3371 = vmatpush1.msra.mxu0 %v3177
        %3372 = vmatprep.subr.mxu0 %v3182
        %3373 = vmatpush1.msra.mxu0 %v3181
        %3374 = vmatprep.subr.mxu0 %v3186
        %3375 = vmatpush1.msra.mxu0 %v3185
        %3376 = vmatprep.subr.mxu0 %v3190
        %3377 = vmatpush1.msra.mxu0 %v3189
        %3378 = vmatprep.subr.mxu0 %v3194
        %3379 = vmatpush1.msra.mxu0 %v3193
        %3380 = vmatprep.subr.mxu0 %v3198
        %3381 = vmatpush1.msra.mxu0 %v3197
        %3382 = vmatprep.subr.mxu0 %v3202
        %3383 = vmatpush1.msra.mxu0 %v3201
        %3384 = vmatprep.subr.mxu0 %v3206
        %3385 = vmatpush1.msra.mxu0 %v3205
        %3386 = vmatprep.subr.mxu0 %v3210
        %3387 = vmatpush1.msra.mxu0 %v3209
        %3388 = vmatprep.subr.mxu0 %v3214
        %3389 = vmatpush1.msra.mxu0 %v3213
        %3390 = vmatprep.subr.mxu0 %v3218
        %3391 = vmatpush1.msra.mxu0 %v3217
        %3392 = vmatprep.subr.mxu0 %v3222
        %3393 = vmatpush1.msra.mxu0 %v3221
        %3394 = vmatprep.subr.mxu0 %v3226
        %3395 = vmatpush1.msra.mxu0 %v3225
        %3396 = vmatprep.subr.mxu0 %v3230
        %3397 = vmatpush1.msra.mxu0 %v3229
        %3398 = vmatprep.subr.mxu0 %v3234
        %3399 = vmatpush1.msra.mxu0 %v3233
        %3400 = vmatprep.subr.mxu0 %v3238
        %3401 = vmatpush1.msra.mxu0 %v3237
        %3402 = vmatprep.subr.mxu0 %v3242
        %3403 = vmatpush1.msra.mxu0 %v3241
        %3404 = vmatprep.subr.mxu0 %v3246
        %3405 = vmatpush1.msra.mxu0 %v3245
        %3406 = vmatprep.subr.mxu0 %v3250
        %3407 = vmatpush1.msra.mxu0 %v3249
        %3408 = vmatprep.subr.mxu0 %v3254
        %3409 = vmatpush1.msra.mxu0 %v3253
        %3410 = vmatprep.subr.mxu0 %v3258
        %3411 = vmatpush1.msra.mxu0 %v3257
        %3412 = vmatprep.subr.mxu0 %v3262
        %3413 = vmatpush1.msra.mxu0 %v3261
        %3414 = vmatprep.subr.mxu0 %v3266
        %3415 = vmatpush1.msra.mxu0 %v3265
        %3416 = vmatprep.subr.mxu0 %v3270
        %3417 = vmatpush1.msra.mxu0 %v3269
        %3418 = vmatprep.subr.mxu0 %v3274
        %3419 = vmatpush1.msra.mxu0 %v3273
        %3420 = vmatprep.subr.mxu0 %v3278
        %3421 = vmatpush1.msra.mxu0 %v3277
        %3422 = vmatprep.mubr.f32.mxu0 %v2259
        %3423 = vmatmul.mubr.f32.gmra.mrb[0].mxu0 %v2258
        %v3424 = vpop.f32.mrb[0].mxu0
        %v3425 = vadd.f32 %v3348, %v3424
        %v3426 = vpop.f32.mrb[0].mxu0
        %v3427 = vadd.f32 %v3350, %v3426
        %3428 = vmatprep.mubr.f32.mxu0 %v2263
        %3429 = vmatmul.mubr.f32.gmra.mrb[0].mxu0 %v2262
        %v3430 = vpop.f32.mrb[0].mxu0
        %v3431 = vadd.f32 %v3354, %v3430
        %v3432 = vpop.f32.mrb[0].mxu0
        %v3433 = vadd.f32 %v3356, %v3432
        %3434 = vdwg.mxu0
        %3435 = vmatprep.subr.mxu0 %v3028
        %3436 = vmatpush1.msra.mxu0 %v3027
        %3437 = vmatprep.subr.mxu0 %v3032
        %3438 = vmatpush1.msra.mxu0 %v3031
        %3439 = vmatprep.subr.mxu0 %v3036
        %3440 = vmatpush1.msra.mxu0 %v3035
        %3441 = vmatprep.subr.mxu0 %v3040
        %3442 = vmatpush1.msra.mxu0 %v3039
        %3443 = vmatprep.subr.mxu0 %v3044
        %3444 = vmatpush1.msra.mxu0 %v3043
        %3445 = vmatprep.subr.mxu0 %v3048
        %3446 = vmatpush1.msra.mxu0 %v3047
        %3447 = vmatprep.subr.mxu0 %v3052
        %3448 = vmatpush1.msra.mxu0 %v3051
        %3449 = vmatprep.subr.mxu0 %v3056
        %3450 = vmatpush1.msra.mxu0 %v3055
        %3451 = vmatprep.subr.mxu0 %v3060
        %3452 = vmatpush1.msra.mxu0 %v3059
        %3453 = vmatprep.subr.mxu0 %v3064
        %3454 = vmatpush1.msra.mxu0 %v3063
        %3455 = vmatprep.subr.mxu0 %v3068
        %3456 = vmatpush1.msra.mxu0 %v3067
        %3457 = vmatprep.subr.mxu0 %v3072
        %3458 = vmatpush1.msra.mxu0 %v3071
        %3459 = vmatprep.subr.mxu0 %v3076
        %3460 = vmatpush1.msra.mxu0 %v3075
        %3461 = vmatprep.subr.mxu0 %v3080
        %3462 = vmatpush1.msra.mxu0 %v3079
        %3463 = vmatprep.subr.mxu0 %v3084
        %3464 = vmatpush1.msra.mxu0 %v3083
        %3465 = vmatprep.subr.mxu0 %v3088
        %3466 = vmatpush1.msra.mxu0 %v3087
        %3467 = vmatprep.subr.mxu0 %v3092
        %3468 = vmatpush1.msra.mxu0 %v3091
        %3469 = vmatprep.subr.mxu0 %v3096
        %3470 = vmatpush1.msra.mxu0 %v3095
        %3471 = vmatprep.subr.mxu0 %v3100
        %3472 = vmatpush1.msra.mxu0 %v3099
        %3473 = vmatprep.subr.mxu0 %v3104
        %3474 = vmatpush1.msra.mxu0 %v3103
        %3475 = vmatprep.subr.mxu0 %v3108
        %3476 = vmatpush1.msra.mxu0 %v3107
        %3477 = vmatprep.subr.mxu0 %v3112
        %3478 = vmatpush1.msra.mxu0 %v3111
        %3479 = vmatprep.subr.mxu0 %v3116
        %3480 = vmatpush1.msra.mxu0 %v3115
        %3481 = vmatprep.subr.mxu0 %v3120
        %3482 = vmatpush1.msra.mxu0 %v3119
        %3483 = vmatprep.subr.mxu0 %v3124
        %3484 = vmatpush1.msra.mxu0 %v3123
        %3485 = vmatprep.subr.mxu0 %v3128
        %3486 = vmatpush1.msra.mxu0 %v3127
        %3487 = vmatprep.subr.mxu0 %v3132
        %3488 = vmatpush1.msra.mxu0 %v3131
        %3489 = vmatprep.subr.mxu0 %v3136
        %3490 = vmatpush1.msra.mxu0 %v3135
        %3491 = vmatprep.subr.mxu0 %v3140
        %3492 = vmatpush1.msra.mxu0 %v3139
        %3493 = vmatprep.subr.mxu0 %v3144
        %3494 = vmatpush1.msra.mxu0 %v3143
        %3495 = vmatprep.subr.mxu0 %v3148
        %3496 = vmatpush1.msra.mxu0 %v3147
        %3497 = vmatprep.subr.mxu0 %v3152
        %3498 = vmatpush1.msra.mxu0 %v3151
        %3499 = vmatprep.mubr.f32.mxu0 %v2257
        %3500 = vmatmul.mubr.f32.gmra.mrb[0].mxu0 %v2256
        %v3501 = vpop.f32.mrb[0].mxu0
        %v3502 = vadd.f32 0.0, %v3501
        %v3503 = vpop.f32.mrb[0].mxu0
        %v3504 = vadd.f32 0.0, %v3503
        %3505 = vmatprep.mubr.f32.mxu0 %v2261
        %3506 = vmatmul.mubr.f32.gmra.mrb[0].mxu0 %v2260
        %v3507 = vpop.f32.mrb[0].mxu0
        %v3508 = vadd.f32 0.0, %v3507
        %v3509 = vpop.f32.mrb[0].mxu0
        %v3510 = vadd.f32 0.0, %v3509
        %3511 = vdwg.mxu0
        %3512 = vmatprep.subr.mxu0 %v3156
        %3513 = vmatpush1.msra.mxu0 %v3155
        %3514 = vmatprep.subr.mxu0 %v3160
        %3515 = vmatpush1.msra.mxu0 %v3159
        %3516 = vmatprep.subr.mxu0 %v3164
        %3517 = vmatpush1.msra.mxu0 %v3163
        %3518 = vmatprep.subr.mxu0 %v3168
        %3519 = vmatpush1.msra.mxu0 %v3167
        %3520 = vmatprep.subr.mxu0 %v3172
        %3521 = vmatpush1.msra.mxu0 %v3171
        %3522 = vmatprep.subr.mxu0 %v3176
        %3523 = vmatpush1.msra.mxu0 %v3175
        %3524 = vmatprep.subr.mxu0 %v3180
        %3525 = vmatpush1.msra.mxu0 %v3179
        %3526 = vmatprep.subr.mxu0 %v3184
        %3527 = vmatpush1.msra.mxu0 %v3183
        %3528 = vmatprep.subr.mxu0 %v3188
        %3529 = vmatpush1.msra.mxu0 %v3187
        %3530 = vmatprep.subr.mxu0 %v3192
        %3531 = vmatpush1.msra.mxu0 %v3191
        %3532 = vmatprep.subr.mxu0 %v3196
        %3533 = vmatpush1.msra.mxu0 %v3195
        %3534 = vmatprep.subr.mxu0 %v3200
        %3535 = vmatpush1.msra.mxu0 %v3199
        %3536 = vmatprep.subr.mxu0 %v3204
        %3537 = vmatpush1.msra.mxu0 %v3203
        %3538 = vmatprep.subr.mxu0 %v3208
        %3539 = vmatpush1.msra.mxu0 %v3207
        %3540 = vmatprep.subr.mxu0 %v3212
        %3541 = vmatpush1.msra.mxu0 %v3211
        %3542 = vmatprep.subr.mxu0 %v3216
        %3543 = vmatpush1.msra.mxu0 %v3215
        %3544 = vmatprep.subr.mxu0 %v3220
        %3545 = vmatpush1.msra.mxu0 %v3219
        %3546 = vmatprep.subr.mxu0 %v3224
        %3547 = vmatpush1.msra.mxu0 %v3223
        %3548 = vmatprep.subr.mxu0 %v3228
        %3549 = vmatpush1.msra.mxu0 %v3227
        %3550 = vmatprep.subr.mxu0 %v3232
        %3551 = vmatpush1.msra.mxu0 %v3231
        %3552 = vmatprep.subr.mxu0 %v3236
        %3553 = vmatpush1.msra.mxu0 %v3235
        %3554 = vmatprep.subr.mxu0 %v3240
        %3555 = vmatpush1.msra.mxu0 %v3239
        %3556 = vmatprep.subr.mxu0 %v3244
        %3557 = vmatpush1.msra.mxu0 %v3243
        %3558 = vmatprep.subr.mxu0 %v3248
        %3559 = vmatpush1.msra.mxu0 %v3247
        %3560 = vmatprep.subr.mxu0 %v3252
        %3561 = vmatpush1.msra.mxu0 %v3251
        %3562 = vmatprep.subr.mxu0 %v3256
        %3563 = vmatpush1.msra.mxu0 %v3255
        %3564 = vmatprep.subr.mxu0 %v3260
        %3565 = vmatpush1.msra.mxu0 %v3259
        %3566 = vmatprep.subr.mxu0 %v3264
        %3567 = vmatpush1.msra.mxu0 %v3263
        %3568 = vmatprep.subr.mxu0 %v3268
        %3569 = vmatpush1.msra.mxu0 %v3267
        %3570 = vmatprep.subr.mxu0 %v3272
        %3571 = vmatpush1.msra.mxu0 %v3271
        %3572 = vmatprep.subr.mxu0 %v3276
        %3573 = vmatpush1.msra.mxu0 %v3275
        %3574 = vmatprep.subr.mxu0 %v3280
        %3575 = vmatpush1.msra.mxu0 %v3279
        %3576 = vmatprep.mubr.f32.mxu0 %v2259
        %3577 = vmatmul.mubr.f32.gmra.mrb[0].mxu0 %v2258
        %v3578 = vpop.f32.mrb[0].mxu0
        %v3579 = vadd.f32 %v3502, %v3578
        %v3580 = vpop.f32.mrb[0].mxu0
        %v3581 = vadd.f32 %v3504, %v3580
        %3582 = vmatprep.mubr.f32.mxu0 %v2263
        %3583 = vmatmul.mubr.f32.gmra.mrb[0].mxu0 %v2262
        %v3584 = vpop.f32.mrb[0].mxu0
        %v3585 = vadd.f32 %v3508, %v3584
        %v3586 = vpop.f32.mrb[0].mxu0
        %v3587 = vadd.f32 %v3510, %v3586
        %3588 = vdwg.mxu0
        %v3590 = vsel %vm2852, %v3022, 0
        %v3593 = vsel %vm2852, %v3023, 0
        %3595 = vmatprep.subr.mxu0 %v3427
        %3596 = vmatpush1.msra.mxu0 %v3425
        %3597 = vmatprep.subr.mxu0 %v3433
        %3598 = vmatpush1.msra.mxu0 %v3431
        %3599 = vmatprep.subr.mxu0 0.0
        %3600 = vmatpush1.msra.mxu0 0.0
        %3601 = vmatprep.subr.mxu0 0.0
        %3602 = vmatpush1.msra.mxu0 0.0
        %3603 = vmatprep.subr.mxu0 0.0
        %3604 = vmatpush1.msra.mxu0 0.0
        %3605 = vmatprep.subr.mxu0 0.0
        %3606 = vmatpush1.msra.mxu0 0.0
        %3607 = vmatprep.subr.mxu0 0.0
        %3608 = vmatpush1.msra.mxu0 0.0
        %3609 = vmatprep.subr.mxu0 0.0
        %3610 = vmatpush1.msra.mxu0 0.0
        %3611 = vmatprep.subr.mxu0 0.0
        %3612 = vmatpush1.msra.mxu0 0.0
        %3613 = vmatprep.subr.mxu0 0.0
        %3614 = vmatpush1.msra.mxu0 0.0
        %3615 = vmatprep.subr.mxu0 0.0
        %3616 = vmatpush1.msra.mxu0 0.0
        %3617 = vmatprep.subr.mxu0 0.0
        %3618 = vmatpush1.msra.mxu0 0.0
        %3619 = vmatprep.subr.mxu0 0.0
        %3620 = vmatpush1.msra.mxu0 0.0
        %3621 = vmatprep.subr.mxu0 0.0
        %3622 = vmatpush1.msra.mxu0 0.0
        %3623 = vmatprep.subr.mxu0 0.0
        %3624 = vmatpush1.msra.mxu0 0.0
        %3625 = vmatprep.subr.mxu0 0.0
        %3626 = vmatpush1.msra.mxu0 0.0
        %3627 = vmatprep.subr.mxu0 0.0
        %3628 = vmatpush1.msra.mxu0 0.0
        %3629 = vmatprep.subr.mxu0 0.0
        %3630 = vmatpush1.msra.mxu0 0.0
        %3631 = vmatprep.subr.mxu0 0.0
        %3632 = vmatpush1.msra.mxu0 0.0
        %3633 = vmatprep.subr.mxu0 0.0
        %3634 = vmatpush1.msra.mxu0 0.0
        %3635 = vmatprep.subr.mxu0 0.0
        %3636 = vmatpush1.msra.mxu0 0.0
        %3637 = vmatprep.subr.mxu0 0.0
        %3638 = vmatpush1.msra.mxu0 0.0
        %3639 = vmatprep.subr.mxu0 0.0
        %3640 = vmatpush1.msra.mxu0 0.0
        %3641 = vmatprep.subr.mxu0 0.0
        %3642 = vmatpush1.msra.mxu0 0.0
        %3643 = vmatprep.subr.mxu0 0.0
        %3644 = vmatpush1.msra.mxu0 0.0
        %3645 = vmatprep.subr.mxu0 0.0
        %3646 = vmatpush1.msra.mxu0 0.0
        %3647 = vmatprep.subr.mxu0 0.0
        %3648 = vmatpush1.msra.mxu0 0.0
        %3649 = vmatprep.subr.mxu0 0.0
        %3650 = vmatpush1.msra.mxu0 0.0
        %3651 = vmatprep.subr.mxu0 0.0
        %3652 = vmatpush1.msra.mxu0 0.0
        %3653 = vmatprep.subr.mxu0 0.0
        %3654 = vmatpush1.msra.mxu0 0.0
        %3655 = vmatprep.subr.mxu0 0.0
        %3656 = vmatpush1.msra.mxu0 0.0
        %3657 = vmatprep.subr.mxu0 0.0
        %3658 = vmatpush1.msra.mxu0 0.0
        %3659 = vmatprep.mubr.f32.mxu0 0.0
        %3660 = vmatmul.mubr.f32.gmra.mrb[0].mxu0 %v3590
        %v3661 = vpop.f32.mrb[0].mxu0
        %v3662 = vadd.f32 0.0, %v3661
        %v3663 = vpop.f32.mrb[0].mxu0
        %v3664 = vadd.f32 0.0, %v3663
        %3665 = vmatprep.mubr.f32.mxu0 0.0
        %3666 = vmatmul.mubr.f32.gmra.mrb[0].mxu0 %v3593
        %v3667 = vpop.f32.mrb[0].mxu0
        %v3668 = vadd.f32 0.0, %v3667
        %v3669 = vpop.f32.mrb[0].mxu0
        %v3670 = vadd.f32 0.0, %v3669
        %3671 = vdwg.mxu0
        %3672 = vmatprep.subr.mxu0 %v3581
        %3673 = vmatpush1.msra.mxu0 %v3579
        %3674 = vmatprep.subr.mxu0 %v3587
        %3675 = vmatpush1.msra.mxu0 %v3585
        %3676 = vmatprep.subr.mxu0 0.0
        %3677 = vmatpush1.msra.mxu0 0.0
        %3678 = vmatprep.subr.mxu0 0.0
        %3679 = vmatpush1.msra.mxu0 0.0
        %3680 = vmatprep.subr.mxu0 0.0
        %3681 = vmatpush1.msra.mxu0 0.0
        %3682 = vmatprep.subr.mxu0 0.0
        %3683 = vmatpush1.msra.mxu0 0.0
        %3684 = vmatprep.subr.mxu0 0.0
        %3685 = vmatpush1.msra.mxu0 0.0
        %3686 = vmatprep.subr.mxu0 0.0
        %3687 = vmatpush1.msra.mxu0 0.0
        %3688 = vmatprep.subr.mxu0 0.0
        %3689 = vmatpush1.msra.mxu0 0.0
        %3690 = vmatprep.subr.mxu0 0.0
        %3691 = vmatpush1.msra.mxu0 0.0
        %3692 = vmatprep.subr.mxu0 0.0
        %3693 = vmatpush1.msra.mxu0 0.0
        %3694 = vmatprep.subr.mxu0 0.0
        %3695 = vmatpush1.msra.mxu0 0.0
        %3696 = vmatprep.subr.mxu0 0.0
        %3697 = vmatpush1.msra.mxu0 0.0
        %3698 = vmatprep.subr.mxu0 0.0
        %3699 = vmatpush1.msra.mxu0 0.0
        %3700 = vmatprep.subr.mxu0 0.0
        %3701 = vmatpush1.msra.mxu0 0.0
        %3702 = vmatprep.subr.mxu0 0.0
        %3703 = vmatpush1.msra.mxu0 0.0
        %3704 = vmatprep.subr.mxu0 0.0
        %3705 = vmatpush1.msra.mxu0 0.0
        %3706 = vmatprep.subr.mxu0 0.0
        %3707 = vmatpush1.msra.mxu0 0.0
        %3708 = vmatprep.subr.mxu0 0.0
        %3709 = vmatpush1.msra.mxu0 0.0
        %3710 = vmatprep.subr.mxu0 0.0
        %3711 = vmatpush1.msra.mxu0 0.0
        %3712 = vmatprep.subr.mxu0 0.0
        %3713 = vmatpush1.msra.mxu0 0.0
        %3714 = vmatprep.subr.mxu0 0.0
        %3715 = vmatpush1.msra.mxu0 0.0
        %3716 = vmatprep.subr.mxu0 0.0
        %3717 = vmatpush1.msra.mxu0 0.0
        %3718 = vmatprep.subr.mxu0 0.0
        %3719 = vmatpush1.msra.mxu0 0.0
        %3720 = vmatprep.subr.mxu0 0.0
        %3721 = vmatpush1.msra.mxu0 0.0
        %3722 = vmatprep.subr.mxu0 0.0
        %3723 = vmatpush1.msra.mxu0 0.0
        %3724 = vmatprep.subr.mxu0 0.0
        %3725 = vmatpush1.msra.mxu0 0.0
        %3726 = vmatprep.subr.mxu0 0.0
        %3727 = vmatpush1.msra.mxu0 0.0
        %3728 = vmatprep.subr.mxu0 0.0
        %3729 = vmatpush1.msra.mxu0 0.0
        %3730 = vmatprep.subr.mxu0 0.0
        %3731 = vmatpush1.msra.mxu0 0.0
        %3732 = vmatprep.subr.mxu0 0.0
        %3733 = vmatpush1.msra.mxu0 0.0
        %3734 = vmatprep.subr.mxu0 0.0
        %3735 = vmatpush1.msra.mxu0 0.0
        %3736 = vmatprep.mubr.f32.mxu0 0.0
        %3737 = vmatmul.mubr.f32.gmra.mrb[0].mxu0 %v3590
        %v3738 = vpop.f32.mrb[0].mxu0
        %v3739 = vadd.f32 0.0, %v3738
        %v3740 = vpop.f32.mrb[0].mxu0
        %v3741 = vadd.f32 0.0, %v3740
        %3742 = vmatprep.mubr.f32.mxu0 0.0
        %3743 = vmatmul.mubr.f32.gmra.mrb[0].mxu0 %v3593
        %v3744 = vpop.f32.mrb[0].mxu0
        %v3745 = vadd.f32 0.0, %v3744
        %v3746 = vpop.f32.mrb[0].mxu0
        %v3747 = vadd.f32 0.0, %v3746
        %3748 = vdwg.mxu0
        %v3749 = vadd.f32 %v3013, %v3662
        %v3750 = vadd.f32 %v3014, %v3664
        %v3751 = vadd.f32 %v3015, %v3739
        %v3752 = vadd.f32 %v3016, %v3741
        %v3753 = vadd.f32 %v3017, %v3668
        %v3754 = vadd.f32 %v3018, %v3670
        %v3755 = vadd.f32 %v3019, %v3745
        %v3756 = vadd.f32 %v3020, %v3747
        %s3757 = scalar_lea.vmem [#allocation26], 32
        %v3758 = vld [vmem:[%s3757] sm:$0xff]
        %v3759 = vld [vmem:[%s3757 + $0x8] sm:$0xff]
        %s3760 = scalar_lea.vmem [#allocation28], 4096
        %v3761 = vld [vmem:[%s3760] sm:$0xff]
        %v3762 = vld [vmem:[%s3760 + $0x8] sm:$0xff]
        %v3763 = vld [vmem:[%s3760 + $0x10] sm:$0xff]
        %v3764 = vld [vmem:[%s3760 + $0x18] sm:$0xff]
        %v3765 = vld [vmem:[%s3760 + $0x20] sm:$0xff]
        %v3766 = vld [vmem:[%s3760 + $0x28] sm:$0xff]
        %v3767 = vld [vmem:[%s3760 + $0x30] sm:$0xff]
        %v3768 = vld [vmem:[%s3760 + $0x38] sm:$0xff]
        %v3769 = vld [vmem:[%s3760 + $0x40] sm:$0xff]
        %v3770 = vld [vmem:[%s3760 + $0x48] sm:$0xff]
        %v3771 = vld [vmem:[%s3760 + $0x50] sm:$0xff]
        %v3772 = vld [vmem:[%s3760 + $0x58] sm:$0xff]
        %v3773 = vld [vmem:[%s3760 + $0x60] sm:$0xff]
        %v3774 = vld [vmem:[%s3760 + $0x68] sm:$0xff]
        %v3775 = vld [vmem:[%s3760 + $0x70] sm:$0xff]
        %v3776 = vld [vmem:[%s3760 + $0x78] sm:$0xff]
        %v3777 = vld [vmem:[%s3760 + $0x80] sm:$0xff]
        %v3778 = vld [vmem:[%s3760 + $0x88] sm:$0xff]
        %v3779 = vld [vmem:[%s3760 + $0x90] sm:$0xff]
        %v3780 = vld [vmem:[%s3760 + $0x98] sm:$0xff]
        %v3781 = vld [vmem:[%s3760 + $0xa0] sm:$0xff]
        %v3782 = vld [vmem:[%s3760 + $0xa8] sm:$0xff]
        %v3783 = vld [vmem:[%s3760 + $0xb0] sm:$0xff]
        %v3784 = vld [vmem:[%s3760 + $0xb8] sm:$0xff]
        %v3785 = vld [vmem:[%s3760 + $0xc0] sm:$0xff]
        %v3786 = vld [vmem:[%s3760 + $0xc8] sm:$0xff]
        %v3787 = vld [vmem:[%s3760 + $0xd0] sm:$0xff]
        %v3788 = vld [vmem:[%s3760 + $0xd8] sm:$0xff]
        %v3789 = vld [vmem:[%s3760 + $0xe0] sm:$0xff]
        %v3790 = vld [vmem:[%s3760 + $0xe8] sm:$0xff]
        %v3791 = vld [vmem:[%s3760 + $0xf0] sm:$0xff]
        %v3792 = vld [vmem:[%s3760 + $0xf8] sm:$0xff]
        %v3793 = vld [vmem:[%s3760 + $0x100] sm:$0xff]
        %v3794 = vld [vmem:[%s3760 + $0x108] sm:$0xff]
        %v3795 = vld [vmem:[%s3760 + $0x110] sm:$0xff]
        %v3796 = vld [vmem:[%s3760 + $0x118] sm:$0xff]
        %v3797 = vld [vmem:[%s3760 + $0x120] sm:$0xff]
        %v3798 = vld [vmem:[%s3760 + $0x128] sm:$0xff]
        %v3799 = vld [vmem:[%s3760 + $0x130] sm:$0xff]
        %v3800 = vld [vmem:[%s3760 + $0x138] sm:$0xff]
        %v3801 = vld [vmem:[%s3760 + $0x140] sm:$0xff]
        %v3802 = vld [vmem:[%s3760 + $0x148] sm:$0xff]
        %v3803 = vld [vmem:[%s3760 + $0x150] sm:$0xff]
        %v3804 = vld [vmem:[%s3760 + $0x158] sm:$0xff]
        %v3805 = vld [vmem:[%s3760 + $0x160] sm:$0xff]
        %v3806 = vld [vmem:[%s3760 + $0x168] sm:$0xff]
        %v3807 = vld [vmem:[%s3760 + $0x170] sm:$0xff]
        %v3808 = vld [vmem:[%s3760 + $0x178] sm:$0xff]
        %v3809 = vld [vmem:[%s3760 + $0x180] sm:$0xff]
        %v3810 = vld [vmem:[%s3760 + $0x188] sm:$0xff]
        %v3811 = vld [vmem:[%s3760 + $0x190] sm:$0xff]
        %v3812 = vld [vmem:[%s3760 + $0x198] sm:$0xff]
        %v3813 = vld [vmem:[%s3760 + $0x1a0] sm:$0xff]
        %v3814 = vld [vmem:[%s3760 + $0x1a8] sm:$0xff]
        %v3815 = vld [vmem:[%s3760 + $0x1b0] sm:$0xff]
        %v3816 = vld [vmem:[%s3760 + $0x1b8] sm:$0xff]
        %v3817 = vld [vmem:[%s3760 + $0x1c0] sm:$0xff]
        %v3818 = vld [vmem:[%s3760 + $0x1c8] sm:$0xff]
        %v3819 = vld [vmem:[%s3760 + $0x1d0] sm:$0xff]
        %v3820 = vld [vmem:[%s3760 + $0x1d8] sm:$0xff]
        %v3821 = vld [vmem:[%s3760 + $0x1e0] sm:$0xff]
        %v3822 = vld [vmem:[%s3760 + $0x1e8] sm:$0xff]
        %v3823 = vld [vmem:[%s3760 + $0x1f0] sm:$0xff]
        %v3824 = vld [vmem:[%s3760 + $0x1f8] sm:$0xff]
        %v3825 = vld [vmem:[%s3760 + $0x200] sm:$0xff]
        %v3826 = vld [vmem:[%s3760 + $0x208] sm:$0xff]
        %v3827 = vld [vmem:[%s3760 + $0x210] sm:$0xff]
        %v3828 = vld [vmem:[%s3760 + $0x218] sm:$0xff]
        %v3829 = vld [vmem:[%s3760 + $0x220] sm:$0xff]
        %v3830 = vld [vmem:[%s3760 + $0x228] sm:$0xff]
        %v3831 = vld [vmem:[%s3760 + $0x230] sm:$0xff]
        %v3832 = vld [vmem:[%s3760 + $0x238] sm:$0xff]
        %v3833 = vld [vmem:[%s3760 + $0x240] sm:$0xff]
        %v3834 = vld [vmem:[%s3760 + $0x248] sm:$0xff]
        %v3835 = vld [vmem:[%s3760 + $0x250] sm:$0xff]
        %v3836 = vld [vmem:[%s3760 + $0x258] sm:$0xff]
        %v3837 = vld [vmem:[%s3760 + $0x260] sm:$0xff]
        %v3838 = vld [vmem:[%s3760 + $0x268] sm:$0xff]
        %v3839 = vld [vmem:[%s3760 + $0x270] sm:$0xff]
        %v3840 = vld [vmem:[%s3760 + $0x278] sm:$0xff]
        %v3841 = vld [vmem:[%s3760 + $0x280] sm:$0xff]
        %v3842 = vld [vmem:[%s3760 + $0x288] sm:$0xff]
        %v3843 = vld [vmem:[%s3760 + $0x290] sm:$0xff]
        %v3844 = vld [vmem:[%s3760 + $0x298] sm:$0xff]
        %v3845 = vld [vmem:[%s3760 + $0x2a0] sm:$0xff]
        %v3846 = vld [vmem:[%s3760 + $0x2a8] sm:$0xff]
        %v3847 = vld [vmem:[%s3760 + $0x2b0] sm:$0xff]
        %v3848 = vld [vmem:[%s3760 + $0x2b8] sm:$0xff]
        %v3849 = vld [vmem:[%s3760 + $0x2c0] sm:$0xff]
        %v3850 = vld [vmem:[%s3760 + $0x2c8] sm:$0xff]
        %v3851 = vld [vmem:[%s3760 + $0x2d0] sm:$0xff]
        %v3852 = vld [vmem:[%s3760 + $0x2d8] sm:$0xff]
        %v3853 = vld [vmem:[%s3760 + $0x2e0] sm:$0xff]
        %v3854 = vld [vmem:[%s3760 + $0x2e8] sm:$0xff]
        %v3855 = vld [vmem:[%s3760 + $0x2f0] sm:$0xff]
        %v3856 = vld [vmem:[%s3760 + $0x2f8] sm:$0xff]
        %v3857 = vld [vmem:[%s3760 + $0x300] sm:$0xff]
        %v3858 = vld [vmem:[%s3760 + $0x308] sm:$0xff]
        %v3859 = vld [vmem:[%s3760 + $0x310] sm:$0xff]
        %v3860 = vld [vmem:[%s3760 + $0x318] sm:$0xff]
        %v3861 = vld [vmem:[%s3760 + $0x320] sm:$0xff]
        %v3862 = vld [vmem:[%s3760 + $0x328] sm:$0xff]
        %v3863 = vld [vmem:[%s3760 + $0x330] sm:$0xff]
        %v3864 = vld [vmem:[%s3760 + $0x338] sm:$0xff]
        %v3865 = vld [vmem:[%s3760 + $0x340] sm:$0xff]
        %v3866 = vld [vmem:[%s3760 + $0x348] sm:$0xff]
        %v3867 = vld [vmem:[%s3760 + $0x350] sm:$0xff]
        %v3868 = vld [vmem:[%s3760 + $0x358] sm:$0xff]
        %v3869 = vld [vmem:[%s3760 + $0x360] sm:$0xff]
        %v3870 = vld [vmem:[%s3760 + $0x368] sm:$0xff]
        %v3871 = vld [vmem:[%s3760 + $0x370] sm:$0xff]
        %v3872 = vld [vmem:[%s3760 + $0x378] sm:$0xff]
        %v3873 = vld [vmem:[%s3760 + $0x380] sm:$0xff]
        %v3874 = vld [vmem:[%s3760 + $0x388] sm:$0xff]
        %v3875 = vld [vmem:[%s3760 + $0x390] sm:$0xff]
        %v3876 = vld [vmem:[%s3760 + $0x398] sm:$0xff]
        %v3877 = vld [vmem:[%s3760 + $0x3a0] sm:$0xff]
        %v3878 = vld [vmem:[%s3760 + $0x3a8] sm:$0xff]
        %v3879 = vld [vmem:[%s3760 + $0x3b0] sm:$0xff]
        %v3880 = vld [vmem:[%s3760 + $0x3b8] sm:$0xff]
        %v3881 = vld [vmem:[%s3760 + $0x3c0] sm:$0xff]
        %v3882 = vld [vmem:[%s3760 + $0x3c8] sm:$0xff]
        %v3883 = vld [vmem:[%s3760 + $0x3d0] sm:$0xff]
        %v3884 = vld [vmem:[%s3760 + $0x3d8] sm:$0xff]
        %v3885 = vld [vmem:[%s3760 + $0x3e0] sm:$0xff]
        %v3886 = vld [vmem:[%s3760 + $0x3e8] sm:$0xff]
        %v3887 = vld [vmem:[%s3760 + $0x3f0] sm:$0xff]
        %v3888 = vld [vmem:[%s3760 + $0x3f8] sm:$0xff]
        %v3889 = vld [vmem:[%s3760 + $0x400] sm:$0xff]
        %v3890 = vld [vmem:[%s3760 + $0x408] sm:$0xff]
        %v3891 = vld [vmem:[%s3760 + $0x410] sm:$0xff]
        %v3892 = vld [vmem:[%s3760 + $0x418] sm:$0xff]
        %v3893 = vld [vmem:[%s3760 + $0x420] sm:$0xff]
        %v3894 = vld [vmem:[%s3760 + $0x428] sm:$0xff]
        %v3895 = vld [vmem:[%s3760 + $0x430] sm:$0xff]
        %v3896 = vld [vmem:[%s3760 + $0x438] sm:$0xff]
        %v3897 = vld [vmem:[%s3760 + $0x440] sm:$0xff]
        %v3898 = vld [vmem:[%s3760 + $0x448] sm:$0xff]
        %v3899 = vld [vmem:[%s3760 + $0x450] sm:$0xff]
        %v3900 = vld [vmem:[%s3760 + $0x458] sm:$0xff]
        %v3901 = vld [vmem:[%s3760 + $0x460] sm:$0xff]
        %v3902 = vld [vmem:[%s3760 + $0x468] sm:$0xff]
        %v3903 = vld [vmem:[%s3760 + $0x470] sm:$0xff]
        %v3904 = vld [vmem:[%s3760 + $0x478] sm:$0xff]
        %v3905 = vld [vmem:[%s3760 + $0x480] sm:$0xff]
        %v3906 = vld [vmem:[%s3760 + $0x488] sm:$0xff]
        %v3907 = vld [vmem:[%s3760 + $0x490] sm:$0xff]
        %v3908 = vld [vmem:[%s3760 + $0x498] sm:$0xff]
        %v3909 = vld [vmem:[%s3760 + $0x4a0] sm:$0xff]
        %v3910 = vld [vmem:[%s3760 + $0x4a8] sm:$0xff]
        %v3911 = vld [vmem:[%s3760 + $0x4b0] sm:$0xff]
        %v3912 = vld [vmem:[%s3760 + $0x4b8] sm:$0xff]
        %v3913 = vld [vmem:[%s3760 + $0x4c0] sm:$0xff]
        %v3914 = vld [vmem:[%s3760 + $0x4c8] sm:$0xff]
        %v3915 = vld [vmem:[%s3760 + $0x4d0] sm:$0xff]
        %v3916 = vld [vmem:[%s3760 + $0x4d8] sm:$0xff]
        %v3917 = vld [vmem:[%s3760 + $0x4e0] sm:$0xff]
        %v3918 = vld [vmem:[%s3760 + $0x4e8] sm:$0xff]
        %v3919 = vld [vmem:[%s3760 + $0x4f0] sm:$0xff]
        %v3920 = vld [vmem:[%s3760 + $0x4f8] sm:$0xff]
        %v3921 = vld [vmem:[%s3760 + $0x500] sm:$0xff]
        %v3922 = vld [vmem:[%s3760 + $0x508] sm:$0xff]
        %v3923 = vld [vmem:[%s3760 + $0x510] sm:$0xff]
        %v3924 = vld [vmem:[%s3760 + $0x518] sm:$0xff]
        %v3925 = vld [vmem:[%s3760 + $0x520] sm:$0xff]
        %v3926 = vld [vmem:[%s3760 + $0x528] sm:$0xff]
        %v3927 = vld [vmem:[%s3760 + $0x530] sm:$0xff]
        %v3928 = vld [vmem:[%s3760 + $0x538] sm:$0xff]
        %v3929 = vld [vmem:[%s3760 + $0x540] sm:$0xff]
        %v3930 = vld [vmem:[%s3760 + $0x548] sm:$0xff]
        %v3931 = vld [vmem:[%s3760 + $0x550] sm:$0xff]
        %v3932 = vld [vmem:[%s3760 + $0x558] sm:$0xff]
        %v3933 = vld [vmem:[%s3760 + $0x560] sm:$0xff]
        %v3934 = vld [vmem:[%s3760 + $0x568] sm:$0xff]
        %v3935 = vld [vmem:[%s3760 + $0x570] sm:$0xff]
        %v3936 = vld [vmem:[%s3760 + $0x578] sm:$0xff]
        %v3937 = vld [vmem:[%s3760 + $0x580] sm:$0xff]
        %v3938 = vld [vmem:[%s3760 + $0x588] sm:$0xff]
        %v3939 = vld [vmem:[%s3760 + $0x590] sm:$0xff]
        %v3940 = vld [vmem:[%s3760 + $0x598] sm:$0xff]
        %v3941 = vld [vmem:[%s3760 + $0x5a0] sm:$0xff]
        %v3942 = vld [vmem:[%s3760 + $0x5a8] sm:$0xff]
        %v3943 = vld [vmem:[%s3760 + $0x5b0] sm:$0xff]
        %v3944 = vld [vmem:[%s3760 + $0x5b8] sm:$0xff]
        %v3945 = vld [vmem:[%s3760 + $0x5c0] sm:$0xff]
        %v3946 = vld [vmem:[%s3760 + $0x5c8] sm:$0xff]
        %v3947 = vld [vmem:[%s3760 + $0x5d0] sm:$0xff]
        %v3948 = vld [vmem:[%s3760 + $0x5d8] sm:$0xff]
        %v3949 = vld [vmem:[%s3760 + $0x5e0] sm:$0xff]
        %v3950 = vld [vmem:[%s3760 + $0x5e8] sm:$0xff]
        %v3951 = vld [vmem:[%s3760 + $0x5f0] sm:$0xff]
        %v3952 = vld [vmem:[%s3760 + $0x5f8] sm:$0xff]
        %v3953 = vld [vmem:[%s3760 + $0x600] sm:$0xff]
        %v3954 = vld [vmem:[%s3760 + $0x608] sm:$0xff]
        %v3955 = vld [vmem:[%s3760 + $0x610] sm:$0xff]
        %v3956 = vld [vmem:[%s3760 + $0x618] sm:$0xff]
        %v3957 = vld [vmem:[%s3760 + $0x620] sm:$0xff]
        %v3958 = vld [vmem:[%s3760 + $0x628] sm:$0xff]
        %v3959 = vld [vmem:[%s3760 + $0x630] sm:$0xff]
        %v3960 = vld [vmem:[%s3760 + $0x638] sm:$0xff]
        %v3961 = vld [vmem:[%s3760 + $0x640] sm:$0xff]
        %v3962 = vld [vmem:[%s3760 + $0x648] sm:$0xff]
        %v3963 = vld [vmem:[%s3760 + $0x650] sm:$0xff]
        %v3964 = vld [vmem:[%s3760 + $0x658] sm:$0xff]
        %v3965 = vld [vmem:[%s3760 + $0x660] sm:$0xff]
        %v3966 = vld [vmem:[%s3760 + $0x668] sm:$0xff]
        %v3967 = vld [vmem:[%s3760 + $0x670] sm:$0xff]
        %v3968 = vld [vmem:[%s3760 + $0x678] sm:$0xff]
        %v3969 = vld [vmem:[%s3760 + $0x680] sm:$0xff]
        %v3970 = vld [vmem:[%s3760 + $0x688] sm:$0xff]
        %v3971 = vld [vmem:[%s3760 + $0x690] sm:$0xff]
        %v3972 = vld [vmem:[%s3760 + $0x698] sm:$0xff]
        %v3973 = vld [vmem:[%s3760 + $0x6a0] sm:$0xff]
        %v3974 = vld [vmem:[%s3760 + $0x6a8] sm:$0xff]
        %v3975 = vld [vmem:[%s3760 + $0x6b0] sm:$0xff]
        %v3976 = vld [vmem:[%s3760 + $0x6b8] sm:$0xff]
        %v3977 = vld [vmem:[%s3760 + $0x6c0] sm:$0xff]
        %v3978 = vld [vmem:[%s3760 + $0x6c8] sm:$0xff]
        %v3979 = vld [vmem:[%s3760 + $0x6d0] sm:$0xff]
        %v3980 = vld [vmem:[%s3760 + $0x6d8] sm:$0xff]
        %v3981 = vld [vmem:[%s3760 + $0x6e0] sm:$0xff]
        %v3982 = vld [vmem:[%s3760 + $0x6e8] sm:$0xff]
        %v3983 = vld [vmem:[%s3760 + $0x6f0] sm:$0xff]
        %v3984 = vld [vmem:[%s3760 + $0x6f8] sm:$0xff]
        %v3985 = vld [vmem:[%s3760 + $0x700] sm:$0xff]
        %v3986 = vld [vmem:[%s3760 + $0x708] sm:$0xff]
        %v3987 = vld [vmem:[%s3760 + $0x710] sm:$0xff]
        %v3988 = vld [vmem:[%s3760 + $0x718] sm:$0xff]
        %v3989 = vld [vmem:[%s3760 + $0x720] sm:$0xff]
        %v3990 = vld [vmem:[%s3760 + $0x728] sm:$0xff]
        %v3991 = vld [vmem:[%s3760 + $0x730] sm:$0xff]
        %v3992 = vld [vmem:[%s3760 + $0x738] sm:$0xff]
        %v3993 = vld [vmem:[%s3760 + $0x740] sm:$0xff]
        %v3994 = vld [vmem:[%s3760 + $0x748] sm:$0xff]
        %v3995 = vld [vmem:[%s3760 + $0x750] sm:$0xff]
        %v3996 = vld [vmem:[%s3760 + $0x758] sm:$0xff]
        %v3997 = vld [vmem:[%s3760 + $0x760] sm:$0xff]
        %v3998 = vld [vmem:[%s3760 + $0x768] sm:$0xff]
        %v3999 = vld [vmem:[%s3760 + $0x770] sm:$0xff]
        %v4000 = vld [vmem:[%s3760 + $0x778] sm:$0xff]
        %v4001 = vld [vmem:[%s3760 + $0x780] sm:$0xff]
        %v4002 = vld [vmem:[%s3760 + $0x788] sm:$0xff]
        %v4003 = vld [vmem:[%s3760 + $0x790] sm:$0xff]
        %v4004 = vld [vmem:[%s3760 + $0x798] sm:$0xff]
        %v4005 = vld [vmem:[%s3760 + $0x7a0] sm:$0xff]
        %v4006 = vld [vmem:[%s3760 + $0x7a8] sm:$0xff]
        %v4007 = vld [vmem:[%s3760 + $0x7b0] sm:$0xff]
        %v4008 = vld [vmem:[%s3760 + $0x7b8] sm:$0xff]
        %v4009 = vld [vmem:[%s3760 + $0x7c0] sm:$0xff]
        %v4010 = vld [vmem:[%s3760 + $0x7c8] sm:$0xff]
        %v4011 = vld [vmem:[%s3760 + $0x7d0] sm:$0xff]
        %v4012 = vld [vmem:[%s3760 + $0x7d8] sm:$0xff]
        %v4013 = vld [vmem:[%s3760 + $0x7e0] sm:$0xff]
        %v4014 = vld [vmem:[%s3760 + $0x7e8] sm:$0xff]
        %v4015 = vld [vmem:[%s3760 + $0x7f0] sm:$0xff]
        %v4016 = vld [vmem:[%s3760 + $0x7f8] sm:$0xff]
        %4017 = vmatprep.subr.mxu0 %v3762
        %4018 = vmatpush1.msra.mxu0 %v3761
        %4019 = vmatprep.subr.mxu0 %v3766
        %4020 = vmatpush1.msra.mxu0 %v3765
        %4021 = vmatprep.subr.mxu0 %v3770
        %4022 = vmatpush1.msra.mxu0 %v3769
        %4023 = vmatprep.subr.mxu0 %v3774
        %4024 = vmatpush1.msra.mxu0 %v3773
        %4025 = vmatprep.subr.mxu0 %v3778
        %4026 = vmatpush1.msra.mxu0 %v3777
        %4027 = vmatprep.subr.mxu0 %v3782
        %4028 = vmatpush1.msra.mxu0 %v3781
        %4029 = vmatprep.subr.mxu0 %v3786
        %4030 = vmatpush1.msra.mxu0 %v3785
        %4031 = vmatprep.subr.mxu0 %v3790
        %4032 = vmatpush1.msra.mxu0 %v3789
        %4033 = vmatprep.subr.mxu0 %v3794
        %4034 = vmatpush1.msra.mxu0 %v3793
        %4035 = vmatprep.subr.mxu0 %v3798
        %4036 = vmatpush1.msra.mxu0 %v3797
        %4037 = vmatprep.subr.mxu0 %v3802
        %4038 = vmatpush1.msra.mxu0 %v3801
        %4039 = vmatprep.subr.mxu0 %v3806
        %4040 = vmatpush1.msra.mxu0 %v3805
        %4041 = vmatprep.subr.mxu0 %v3810
        %4042 = vmatpush1.msra.mxu0 %v3809
        %4043 = vmatprep.subr.mxu0 %v3814
        %4044 = vmatpush1.msra.mxu0 %v3813
        %4045 = vmatprep.subr.mxu0 %v3818
        %4046 = vmatpush1.msra.mxu0 %v3817
        %4047 = vmatprep.subr.mxu0 %v3822
        %4048 = vmatpush1.msra.mxu0 %v3821
        %4049 = vmatprep.subr.mxu0 %v3826
        %4050 = vmatpush1.msra.mxu0 %v3825
        %4051 = vmatprep.subr.mxu0 %v3830
        %4052 = vmatpush1.msra.mxu0 %v3829
        %4053 = vmatprep.subr.mxu0 %v3834
        %4054 = vmatpush1.msra.mxu0 %v3833
        %4055 = vmatprep.subr.mxu0 %v3838
        %4056 = vmatpush1.msra.mxu0 %v3837
        %4057 = vmatprep.subr.mxu0 %v3842
        %4058 = vmatpush1.msra.mxu0 %v3841
        %4059 = vmatprep.subr.mxu0 %v3846
        %4060 = vmatpush1.msra.mxu0 %v3845
        %4061 = vmatprep.subr.mxu0 %v3850
        %4062 = vmatpush1.msra.mxu0 %v3849
        %4063 = vmatprep.subr.mxu0 %v3854
        %4064 = vmatpush1.msra.mxu0 %v3853
        %4065 = vmatprep.subr.mxu0 %v3858
        %4066 = vmatpush1.msra.mxu0 %v3857
        %4067 = vmatprep.subr.mxu0 %v3862
        %4068 = vmatpush1.msra.mxu0 %v3861
        %4069 = vmatprep.subr.mxu0 %v3866
        %4070 = vmatpush1.msra.mxu0 %v3865
        %4071 = vmatprep.subr.mxu0 %v3870
        %4072 = vmatpush1.msra.mxu0 %v3869
        %4073 = vmatprep.subr.mxu0 %v3874
        %4074 = vmatpush1.msra.mxu0 %v3873
        %4075 = vmatprep.subr.mxu0 %v3878
        %4076 = vmatpush1.msra.mxu0 %v3877
        %4077 = vmatprep.subr.mxu0 %v3882
        %4078 = vmatpush1.msra.mxu0 %v3881
        %4079 = vmatprep.subr.mxu0 %v3886
        %4080 = vmatpush1.msra.mxu0 %v3885
        %4081 = vmatprep.mubr.f32.mxu0 %v2257
        %4082 = vmatmul.mubr.f32.gmra.mrb[0].mxu0 %v2256
        %v4083 = vpop.f32.mrb[0].mxu0
        %v4084 = vadd.f32 0.0, %v4083
        %v4085 = vpop.f32.mrb[0].mxu0
        %v4086 = vadd.f32 0.0, %v4085
        %4087 = vmatprep.mubr.f32.mxu0 %v2261
        %4088 = vmatmul.mubr.f32.gmra.mrb[0].mxu0 %v2260
        %v4089 = vpop.f32.mrb[0].mxu0
        %v4090 = vadd.f32 0.0, %v4089
        %v4091 = vpop.f32.mrb[0].mxu0
        %v4092 = vadd.f32 0.0, %v4091
        %4093 = vdwg.mxu0
        %4094 = vmatprep.subr.mxu0 %v3890
        %4095 = vmatpush1.msra.mxu0 %v3889
        %4096 = vmatprep.subr.mxu0 %v3894
        %4097 = vmatpush1.msra.mxu0 %v3893
        %4098 = vmatprep.subr.mxu0 %v3898
        %4099 = vmatpush1.msra.mxu0 %v3897
        %4100 = vmatprep.subr.mxu0 %v3902
        %4101 = vmatpush1.msra.mxu0 %v3901
        %4102 = vmatprep.subr.mxu0 %v3906
        %4103 = vmatpush1.msra.mxu0 %v3905
        %4104 = vmatprep.subr.mxu0 %v3910
        %4105 = vmatpush1.msra.mxu0 %v3909
        %4106 = vmatprep.subr.mxu0 %v3914
        %4107 = vmatpush1.msra.mxu0 %v3913
        %4108 = vmatprep.subr.mxu0 %v3918
        %4109 = vmatpush1.msra.mxu0 %v3917
        %4110 = vmatprep.subr.mxu0 %v3922
        %4111 = vmatpush1.msra.mxu0 %v3921
        %4112 = vmatprep.subr.mxu0 %v3926
        %4113 = vmatpush1.msra.mxu0 %v3925
        %4114 = vmatprep.subr.mxu0 %v3930
        %4115 = vmatpush1.msra.mxu0 %v3929
        %4116 = vmatprep.subr.mxu0 %v3934
        %4117 = vmatpush1.msra.mxu0 %v3933
        %4118 = vmatprep.subr.mxu0 %v3938
        %4119 = vmatpush1.msra.mxu0 %v3937
        %4120 = vmatprep.subr.mxu0 %v3942
        %4121 = vmatpush1.msra.mxu0 %v3941
        %4122 = vmatprep.subr.mxu0 %v3946
        %4123 = vmatpush1.msra.mxu0 %v3945
        %4124 = vmatprep.subr.mxu0 %v3950
        %4125 = vmatpush1.msra.mxu0 %v3949
        %4126 = vmatprep.subr.mxu0 %v3954
        %4127 = vmatpush1.msra.mxu0 %v3953
        %4128 = vmatprep.subr.mxu0 %v3958
        %4129 = vmatpush1.msra.mxu0 %v3957
        %4130 = vmatprep.subr.mxu0 %v3962
        %4131 = vmatpush1.msra.mxu0 %v3961
        %4132 = vmatprep.subr.mxu0 %v3966
        %4133 = vmatpush1.msra.mxu0 %v3965
        %4134 = vmatprep.subr.mxu0 %v3970
        %4135 = vmatpush1.msra.mxu0 %v3969
        %4136 = vmatprep.subr.mxu0 %v3974
        %4137 = vmatpush1.msra.mxu0 %v3973
        %4138 = vmatprep.subr.mxu0 %v3978
        %4139 = vmatpush1.msra.mxu0 %v3977
        %4140 = vmatprep.subr.mxu0 %v3982
        %4141 = vmatpush1.msra.mxu0 %v3981
        %4142 = vmatprep.subr.mxu0 %v3986
        %4143 = vmatpush1.msra.mxu0 %v3985
        %4144 = vmatprep.subr.mxu0 %v3990
        %4145 = vmatpush1.msra.mxu0 %v3989
        %4146 = vmatprep.subr.mxu0 %v3994
        %4147 = vmatpush1.msra.mxu0 %v3993
        %4148 = vmatprep.subr.mxu0 %v3998
        %4149 = vmatpush1.msra.mxu0 %v3997
        %4150 = vmatprep.subr.mxu0 %v4002
        %4151 = vmatpush1.msra.mxu0 %v4001
        %4152 = vmatprep.subr.mxu0 %v4006
        %4153 = vmatpush1.msra.mxu0 %v4005
        %4154 = vmatprep.subr.mxu0 %v4010
        %4155 = vmatpush1.msra.mxu0 %v4009
        %4156 = vmatprep.subr.mxu0 %v4014
        %4157 = vmatpush1.msra.mxu0 %v4013
        %4158 = vmatprep.mubr.f32.mxu0 %v2259
        %4159 = vmatmul.mubr.f32.gmra.mrb[0].mxu0 %v2258
        %v4160 = vpop.f32.mrb[0].mxu0
        %v4161 = vadd.f32 %v4084, %v4160
        %v4162 = vpop.f32.mrb[0].mxu0
        %v4163 = vadd.f32 %v4086, %v4162
        %4164 = vmatprep.mubr.f32.mxu0 %v2263
        %4165 = vmatmul.mubr.f32.gmra.mrb[0].mxu0 %v2262
        %v4166 = vpop.f32.mrb[0].mxu0
        %v4167 = vadd.f32 %v4090, %v4166
        %v4168 = vpop.f32.mrb[0].mxu0
        %v4169 = vadd.f32 %v4092, %v4168
        %4170 = vdwg.mxu0
        %4171 = vmatprep.subr.mxu0 %v3764
        %4172 = vmatpush1.msra.mxu0 %v3763
        %4173 = vmatprep.subr.mxu0 %v3768
        %4174 = vmatpush1.msra.mxu0 %v3767
        %4175 = vmatprep.subr.mxu0 %v3772
        %4176 = vmatpush1.msra.mxu0 %v3771
        %4177 = vmatprep.subr.mxu0 %v3776
        %4178 = vmatpush1.msra.mxu0 %v3775
        %4179 = vmatprep.subr.mxu0 %v3780
        %4180 = vmatpush1.msra.mxu0 %v3779
        %4181 = vmatprep.subr.mxu0 %v3784
        %4182 = vmatpush1.msra.mxu0 %v3783
        %4183 = vmatprep.subr.mxu0 %v3788
        %4184 = vmatpush1.msra.mxu0 %v3787
        %4185 = vmatprep.subr.mxu0 %v3792
        %4186 = vmatpush1.msra.mxu0 %v3791
        %4187 = vmatprep.subr.mxu0 %v3796
        %4188 = vmatpush1.msra.mxu0 %v3795
        %4189 = vmatprep.subr.mxu0 %v3800
        %4190 = vmatpush1.msra.mxu0 %v3799
        %4191 = vmatprep.subr.mxu0 %v3804
        %4192 = vmatpush1.msra.mxu0 %v3803
        %4193 = vmatprep.subr.mxu0 %v3808
        %4194 = vmatpush1.msra.mxu0 %v3807
        %4195 = vmatprep.subr.mxu0 %v3812
        %4196 = vmatpush1.msra.mxu0 %v3811
        %4197 = vmatprep.subr.mxu0 %v3816
        %4198 = vmatpush1.msra.mxu0 %v3815
        %4199 = vmatprep.subr.mxu0 %v3820
        %4200 = vmatpush1.msra.mxu0 %v3819
        %4201 = vmatprep.subr.mxu0 %v3824
        %4202 = vmatpush1.msra.mxu0 %v3823
        %4203 = vmatprep.subr.mxu0 %v3828
        %4204 = vmatpush1.msra.mxu0 %v3827
        %4205 = vmatprep.subr.mxu0 %v3832
        %4206 = vmatpush1.msra.mxu0 %v3831
        %4207 = vmatprep.subr.mxu0 %v3836
        %4208 = vmatpush1.msra.mxu0 %v3835
        %4209 = vmatprep.subr.mxu0 %v3840
        %4210 = vmatpush1.msra.mxu0 %v3839
        %4211 = vmatprep.subr.mxu0 %v3844
        %4212 = vmatpush1.msra.mxu0 %v3843
        %4213 = vmatprep.subr.mxu0 %v3848
        %4214 = vmatpush1.msra.mxu0 %v3847
        %4215 = vmatprep.subr.mxu0 %v3852
        %4216 = vmatpush1.msra.mxu0 %v3851
        %4217 = vmatprep.subr.mxu0 %v3856
        %4218 = vmatpush1.msra.mxu0 %v3855
        %4219 = vmatprep.subr.mxu0 %v3860
        %4220 = vmatpush1.msra.mxu0 %v3859
        %4221 = vmatprep.subr.mxu0 %v3864
        %4222 = vmatpush1.msra.mxu0 %v3863
        %4223 = vmatprep.subr.mxu0 %v3868
        %4224 = vmatpush1.msra.mxu0 %v3867
        %4225 = vmatprep.subr.mxu0 %v3872
        %4226 = vmatpush1.msra.mxu0 %v3871
        %4227 = vmatprep.subr.mxu0 %v3876
        %4228 = vmatpush1.msra.mxu0 %v3875
        %4229 = vmatprep.subr.mxu0 %v3880
        %4230 = vmatpush1.msra.mxu0 %v3879
        %4231 = vmatprep.subr.mxu0 %v3884
        %4232 = vmatpush1.msra.mxu0 %v3883
        %4233 = vmatprep.subr.mxu0 %v3888
        %4234 = vmatpush1.msra.mxu0 %v3887
        %4235 = vmatprep.mubr.f32.mxu0 %v2257
        %4236 = vmatmul.mubr.f32.gmra.mrb[0].mxu0 %v2256
        %v4237 = vpop.f32.mrb[0].mxu0
        %v4238 = vadd.f32 0.0, %v4237
        %v4239 = vpop.f32.mrb[0].mxu0
        %v4240 = vadd.f32 0.0, %v4239
        %4241 = vmatprep.mubr.f32.mxu0 %v2261
        %4242 = vmatmul.mubr.f32.gmra.mrb[0].mxu0 %v2260
        %v4243 = vpop.f32.mrb[0].mxu0
        %v4244 = vadd.f32 0.0, %v4243
        %v4245 = vpop.f32.mrb[0].mxu0
        %v4246 = vadd.f32 0.0, %v4245
        %4247 = vdwg.mxu0
        %4248 = vmatprep.subr.mxu0 %v3892
        %4249 = vmatpush1.msra.mxu0 %v3891
        %4250 = vmatprep.subr.mxu0 %v3896
        %4251 = vmatpush1.msra.mxu0 %v3895
        %4252 = vmatprep.subr.mxu0 %v3900
        %4253 = vmatpush1.msra.mxu0 %v3899
        %4254 = vmatprep.subr.mxu0 %v3904
        %4255 = vmatpush1.msra.mxu0 %v3903
        %4256 = vmatprep.subr.mxu0 %v3908
        %4257 = vmatpush1.msra.mxu0 %v3907
        %4258 = vmatprep.subr.mxu0 %v3912
        %4259 = vmatpush1.msra.mxu0 %v3911
        %4260 = vmatprep.subr.mxu0 %v3916
        %4261 = vmatpush1.msra.mxu0 %v3915
        %4262 = vmatprep.subr.mxu0 %v3920
        %4263 = vmatpush1.msra.mxu0 %v3919
        %4264 = vmatprep.subr.mxu0 %v3924
        %4265 = vmatpush1.msra.mxu0 %v3923
        %4266 = vmatprep.subr.mxu0 %v3928
        %4267 = vmatpush1.msra.mxu0 %v3927
        %4268 = vmatprep.subr.mxu0 %v3932
        %4269 = vmatpush1.msra.mxu0 %v3931
        %4270 = vmatprep.subr.mxu0 %v3936
        %4271 = vmatpush1.msra.mxu0 %v3935
        %4272 = vmatprep.subr.mxu0 %v3940
        %4273 = vmatpush1.msra.mxu0 %v3939
        %4274 = vmatprep.subr.mxu0 %v3944
        %4275 = vmatpush1.msra.mxu0 %v3943
        %4276 = vmatprep.subr.mxu0 %v3948
        %4277 = vmatpush1.msra.mxu0 %v3947
        %4278 = vmatprep.subr.mxu0 %v3952
        %4279 = vmatpush1.msra.mxu0 %v3951
        %4280 = vmatprep.subr.mxu0 %v3956
        %4281 = vmatpush1.msra.mxu0 %v3955
        %4282 = vmatprep.subr.mxu0 %v3960
        %4283 = vmatpush1.msra.mxu0 %v3959
        %4284 = vmatprep.subr.mxu0 %v3964
        %4285 = vmatpush1.msra.mxu0 %v3963
        %4286 = vmatprep.subr.mxu0 %v3968
        %4287 = vmatpush1.msra.mxu0 %v3967
        %4288 = vmatprep.subr.mxu0 %v3972
        %4289 = vmatpush1.msra.mxu0 %v3971
        %4290 = vmatprep.subr.mxu0 %v3976
        %4291 = vmatpush1.msra.mxu0 %v3975
        %4292 = vmatprep.subr.mxu0 %v3980
        %4293 = vmatpush1.msra.mxu0 %v3979
        %4294 = vmatprep.subr.mxu0 %v3984
        %4295 = vmatpush1.msra.mxu0 %v3983
        %4296 = vmatprep.subr.mxu0 %v3988
        %4297 = vmatpush1.msra.mxu0 %v3987
        %4298 = vmatprep.subr.mxu0 %v3992
        %4299 = vmatpush1.msra.mxu0 %v3991
        %4300 = vmatprep.subr.mxu0 %v3996
        %4301 = vmatpush1.msra.mxu0 %v3995
        %4302 = vmatprep.subr.mxu0 %v4000
        %4303 = vmatpush1.msra.mxu0 %v3999
        %4304 = vmatprep.subr.mxu0 %v4004
        %4305 = vmatpush1.msra.mxu0 %v4003
        %4306 = vmatprep.subr.mxu0 %v4008
        %4307 = vmatpush1.msra.mxu0 %v4007
        %4308 = vmatprep.subr.mxu0 %v4012
        %4309 = vmatpush1.msra.mxu0 %v4011
        %4310 = vmatprep.subr.mxu0 %v4016
        %4311 = vmatpush1.msra.mxu0 %v4015
        %4312 = vmatprep.mubr.f32.mxu0 %v2259
        %4313 = vmatmul.mubr.f32.gmra.mrb[0].mxu0 %v2258
        %v4314 = vpop.f32.mrb[0].mxu0
        %v4315 = vadd.f32 %v4238, %v4314
        %v4316 = vpop.f32.mrb[0].mxu0
        %v4317 = vadd.f32 %v4240, %v4316
        %4318 = vmatprep.mubr.f32.mxu0 %v2263
        %4319 = vmatmul.mubr.f32.gmra.mrb[0].mxu0 %v2262
        %v4320 = vpop.f32.mrb[0].mxu0
        %v4321 = vadd.f32 %v4244, %v4320
        %v4322 = vpop.f32.mrb[0].mxu0
        %v4323 = vadd.f32 %v4246, %v4322
        %4324 = vdwg.mxu0
        %v4326 = vsel %vm2852, %v3758, 0
        %v4329 = vsel %vm2852, %v3759, 0
        %4331 = vmatprep.subr.mxu0 %v4163
        %4332 = vmatpush1.msra.mxu0 %v4161
        %4333 = vmatprep.subr.mxu0 %v4169
        %4334 = vmatpush1.msra.mxu0 %v4167
        %4335 = vmatprep.subr.mxu0 0.0
        %4336 = vmatpush1.msra.mxu0 0.0
        %4337 = vmatprep.subr.mxu0 0.0
        %4338 = vmatpush1.msra.mxu0 0.0
        %4339 = vmatprep.subr.mxu0 0.0
        %4340 = vmatpush1.msra.mxu0 0.0
        %4341 = vmatprep.subr.mxu0 0.0
        %4342 = vmatpush1.msra.mxu0 0.0
        %4343 = vmatprep.subr.mxu0 0.0
        %4344 = vmatpush1.msra.mxu0 0.0
        %4345 = vmatprep.subr.mxu0 0.0
        %4346 = vmatpush1.msra.mxu0 0.0
        %4347 = vmatprep.subr.mxu0 0.0
        %4348 = vmatpush1.msra.mxu0 0.0
        %4349 = vmatprep.subr.mxu0 0.0
        %4350 = vmatpush1.msra.mxu0 0.0
        %4351 = vmatprep.subr.mxu0 0.0
        %4352 = vmatpush1.msra.mxu0 0.0
        %4353 = vmatprep.subr.mxu0 0.0
        %4354 = vmatpush1.msra.mxu0 0.0
        %4355 = vmatprep.subr.mxu0 0.0
        %4356 = vmatpush1.msra.mxu0 0.0
        %4357 = vmatprep.subr.mxu0 0.0
        %4358 = vmatpush1.msra.mxu0 0.0
        %4359 = vmatprep.subr.mxu0 0.0
        %4360 = vmatpush1.msra.mxu0 0.0
        %4361 = vmatprep.subr.mxu0 0.0
        %4362 = vmatpush1.msra.mxu0 0.0
        %4363 = vmatprep.subr.mxu0 0.0
        %4364 = vmatpush1.msra.mxu0 0.0
        %4365 = vmatprep.subr.mxu0 0.0
        %4366 = vmatpush1.msra.mxu0 0.0
        %4367 = vmatprep.subr.mxu0 0.0
        %4368 = vmatpush1.msra.mxu0 0.0
        %4369 = vmatprep.subr.mxu0 0.0
        %4370 = vmatpush1.msra.mxu0 0.0
        %4371 = vmatprep.subr.mxu0 0.0
        %4372 = vmatpush1.msra.mxu0 0.0
        %4373 = vmatprep.subr.mxu0 0.0
        %4374 = vmatpush1.msra.mxu0 0.0
        %4375 = vmatprep.subr.mxu0 0.0
        %4376 = vmatpush1.msra.mxu0 0.0
        %4377 = vmatprep.subr.mxu0 0.0
        %4378 = vmatpush1.msra.mxu0 0.0
        %4379 = vmatprep.subr.mxu0 0.0
        %4380 = vmatpush1.msra.mxu0 0.0
        %4381 = vmatprep.subr.mxu0 0.0
        %4382 = vmatpush1.msra.mxu0 0.0
        %4383 = vmatprep.subr.mxu0 0.0
        %4384 = vmatpush1.msra.mxu0 0.0
        %4385 = vmatprep.subr.mxu0 0.0
        %4386 = vmatpush1.msra.mxu0 0.0
        %4387 = vmatprep.subr.mxu0 0.0
        %4388 = vmatpush1.msra.mxu0 0.0
        %4389 = vmatprep.subr.mxu0 0.0
        %4390 = vmatpush1.msra.mxu0 0.0
        %4391 = vmatprep.subr.mxu0 0.0
        %4392 = vmatpush1.msra.mxu0 0.0
        %4393 = vmatprep.subr.mxu0 0.0
        %4394 = vmatpush1.msra.mxu0 0.0
        %4395 = vmatprep.mubr.f32.mxu0 0.0
        %4396 = vmatmul.mubr.f32.gmra.mrb[0].mxu0 %v4326
        %v4397 = vpop.f32.mrb[0].mxu0
        %v4398 = vadd.f32 0.0, %v4397
        %v4399 = vpop.f32.mrb[0].mxu0
        %v4400 = vadd.f32 0.0, %v4399
        %4401 = vmatprep.mubr.f32.mxu0 0.0
        %4402 = vmatmul.mubr.f32.gmra.mrb[0].mxu0 %v4329
        %v4403 = vpop.f32.mrb[0].mxu0
        %v4404 = vadd.f32 0.0, %v4403
        %v4405 = vpop.f32.mrb[0].mxu0
        %v4406 = vadd.f32 0.0, %v4405
        %4407 = vdwg.mxu0
        %4408 = vmatprep.subr.mxu0 %v4317
        %4409 = vmatpush1.msra.mxu0 %v4315
        %4410 = vmatprep.subr.mxu0 %v4323
        %4411 = vmatpush1.msra.mxu0 %v4321
        %4412 = vmatprep.subr.mxu0 0.0
        %4413 = vmatpush1.msra.mxu0 0.0
        %4414 = vmatprep.subr.mxu0 0.0
        %4415 = vmatpush1.msra.mxu0 0.0
        %4416 = vmatprep.subr.mxu0 0.0
        %4417 = vmatpush1.msra.mxu0 0.0
        %4418 = vmatprep.subr.mxu0 0.0
        %4419 = vmatpush1.msra.mxu0 0.0
        %4420 = vmatprep.subr.mxu0 0.0
        %4421 = vmatpush1.msra.mxu0 0.0
        %4422 = vmatprep.subr.mxu0 0.0
        %4423 = vmatpush1.msra.mxu0 0.0
        %4424 = vmatprep.subr.mxu0 0.0
        %4425 = vmatpush1.msra.mxu0 0.0
        %4426 = vmatprep.subr.mxu0 0.0
        %4427 = vmatpush1.msra.mxu0 0.0
        %4428 = vmatprep.subr.mxu0 0.0
        %4429 = vmatpush1.msra.mxu0 0.0
        %4430 = vmatprep.subr.mxu0 0.0
        %4431 = vmatpush1.msra.mxu0 0.0
        %4432 = vmatprep.subr.mxu0 0.0
        %4433 = vmatpush1.msra.mxu0 0.0
        %4434 = vmatprep.subr.mxu0 0.0
        %4435 = vmatpush1.msra.mxu0 0.0
        %4436 = vmatprep.subr.mxu0 0.0
        %4437 = vmatpush1.msra.mxu0 0.0
        %4438 = vmatprep.subr.mxu0 0.0
        %4439 = vmatpush1.msra.mxu0 0.0
        %4440 = vmatprep.subr.mxu0 0.0
        %4441 = vmatpush1.msra.mxu0 0.0
        %4442 = vmatprep.subr.mxu0 0.0
        %4443 = vmatpush1.msra.mxu0 0.0
        %4444 = vmatprep.subr.mxu0 0.0
        %4445 = vmatpush1.msra.mxu0 0.0
        %4446 = vmatprep.subr.mxu0 0.0
        %4447 = vmatpush1.msra.mxu0 0.0
        %4448 = vmatprep.subr.mxu0 0.0
        %4449 = vmatpush1.msra.mxu0 0.0
        %4450 = vmatprep.subr.mxu0 0.0
        %4451 = vmatpush1.msra.mxu0 0.0
        %4452 = vmatprep.subr.mxu0 0.0
        %4453 = vmatpush1.msra.mxu0 0.0
        %4454 = vmatprep.subr.mxu0 0.0
        %4455 = vmatpush1.msra.mxu0 0.0
        %4456 = vmatprep.subr.mxu0 0.0
        %4457 = vmatpush1.msra.mxu0 0.0
        %4458 = vmatprep.subr.mxu0 0.0
        %4459 = vmatpush1.msra.mxu0 0.0
        %4460 = vmatprep.subr.mxu0 0.0
        %4461 = vmatpush1.msra.mxu0 0.0
        %4462 = vmatprep.subr.mxu0 0.0
        %4463 = vmatpush1.msra.mxu0 0.0
        %4464 = vmatprep.subr.mxu0 0.0
        %4465 = vmatpush1.msra.mxu0 0.0
        %4466 = vmatprep.subr.mxu0 0.0
        %4467 = vmatpush1.msra.mxu0 0.0
        %4468 = vmatprep.subr.mxu0 0.0
        %4469 = vmatpush1.msra.mxu0 0.0
        %4470 = vmatprep.subr.mxu0 0.0
        %4471 = vmatpush1.msra.mxu0 0.0
        %4472 = vmatprep.mubr.f32.mxu0 0.0
        %4473 = vmatmul.mubr.f32.gmra.mrb[0].mxu0 %v4326
        %v4474 = vpop.f32.mrb[0].mxu0
        %v4475 = vadd.f32 0.0, %v4474
        %v4476 = vpop.f32.mrb[0].mxu0
        %v4477 = vadd.f32 0.0, %v4476
        %4478 = vmatprep.mubr.f32.mxu0 0.0
        %4479 = vmatmul.mubr.f32.gmra.mrb[0].mxu0 %v4329
        %v4480 = vpop.f32.mrb[0].mxu0
        %v4481 = vadd.f32 0.0, %v4480
        %v4482 = vpop.f32.mrb[0].mxu0
        %v4483 = vadd.f32 0.0, %v4482
        %4484 = vdwg.mxu0
        %v4485 = vadd.f32 %v3749, %v4398
        %v4486 = vadd.f32 %v3750, %v4400
        %v4487 = vadd.f32 %v3751, %v4475
        %v4488 = vadd.f32 %v3752, %v4477
        %v4489 = vadd.f32 %v3753, %v4404
        %v4490 = vadd.f32 %v3754, %v4406
        %v4491 = vadd.f32 %v3755, %v4481
        %v4492 = vadd.f32 %v3756, %v4483
        %4493 = vst [vmem:[%s975] sm:$0xff] %v4485
        %4494 = vst [vmem:[%s975 + $0x8] sm:$0xff] %v4486
        %4495 = vst [vmem:[%s975 + $0x10] sm:$0xff] %v4487
        %4496 = vst [vmem:[%s975 + $0x18] sm:$0xff] %v4488
        %4497 = vst [vmem:[%s975 + $0x20] sm:$0xff] %v4489
        %4498 = vst [vmem:[%s975 + $0x28] sm:$0xff] %v4490
        %4499 = vst [vmem:[%s975 + $0x30] sm:$0xff] %v4491
        %4500 = vst [vmem:[%s975 + $0x38] sm:$0xff] %v4492
        %s4501 = sand.u32 %s520, 1
        %s4502 = scalar_lea.sflag [#allocation4], %s4501
        %s4503 = sand.u32 %s520, 1
        %s4504 = smul.addr %s4503, 64
        %s4505 = scalar_lea.vmem [#allocation31], %s4504
        // Predicated region
        $region177: #{tpu_custom_call.1} parent=103 // pred_check
          %p4506 = pneg %p530
        $region178: #{tpu_custom_call.1} parent=103 // pred_check_branch
          %4508 = sbr.rel (%p4506) target = $region180
        $region179: #{tpu_custom_call.1} parent=103 // pred_region
          %s4510 = ssub.s32 1024, 1024
          %4511 = vsyncadd %s4502, %s4510
          %s4512 = smul.addr %s51, 8
          %s4513 = smul.addr %s4512, 128
          %s4514 = scalar_lea.hbm %s21, %s4513
          %s4515 = sshll.u32 %s4505, 4
          %s4516 = int_to_ptr.vmem [resolvable:$true] %s4515
          %4521 = dma.vmem_to_hbm [thread:$0]  %s4516, 1024, %s4514, %s4502, 512, 512, 32
        $region180: #{tpu_custom_call.1} parent=103 // pred_fallthru
          _
      $region104: #{tpu_custom_call.1} parent=5 // pred_fallthru
        _
      %p4522 = scmp.le.s32.totalorder 2, %s46
      // Predicated region
      $region181: #{tpu_custom_call.1} parent=5 // pred_check
        %p4523 = pneg %p4522
      $region182: #{tpu_custom_call.1} parent=5 // pred_check_branch
        %4525 = sbr.rel (%p4523) target = $region184
      $region183: #{tpu_custom_call.1} parent=5 // pred_region
        %s4526 = ssub.s32 %s46, 2
        // Predicated region
        $region185: #{tpu_custom_call.1} parent=183 // pred_check
          %p4527 = pneg %p536
        $region186: #{tpu_custom_call.1} parent=183 // pred_check_branch
          %4529 = sbr.rel (%p4527) target = $region188
        $region187: #{tpu_custom_call.1} parent=183 // pred_region
          %s4530 = sand.u32 %s521, 1
          %s4531 = scalar_lea.sflag [#allocation4], %s4530
          %s4532 = sand.u32 %s521, 1
          %s4533 = smul.addr %s4532, 64
          %s4534 = scalar_lea.vmem [#allocation31], %s4533
          %4535 = dma.done %s4531, 1024
        $region188: #{tpu_custom_call.1} parent=183 // pred_fallthru
          _
      $region184: #{tpu_custom_call.1} parent=5 // pred_fallthru
        _
    $region6: #{tpu_custom_call.1} parent=1 // loop_footer
      %s50 = sadd.s32 1, %s46
    $region7: #{tpu_custom_call.1} parent=1 // loop_footer_branch
      %45 = sbr.rel target = $region3
    $region8: #{tpu_custom_call.1} parent=1 // loop_exit
      _
    %4536 = vsyncpa [#allocation3], 1
    %s4537 = scalar_lea.sflag [#allocation3], 1
    %4538 = vsyncpa %s4537, 1
    %4539 = vsyncpa [#allocation6], 1
    %s4540 = scalar_lea.sflag [#allocation6], 1
    %4541 = vsyncpa %s4540, 1
    %4542 = vsyncpa [#allocation9], 1
    %s4543 = scalar_lea.sflag [#allocation9], 1
    %4544 = vsyncpa %s4543, 1
    %4545 = vsyncpa [#allocation12], 1
    %4546 = vsyncpa [#allocation15], 1
    %4547 = vsyncpa [#allocation18], 1
    %4548 = vsyncpa [#allocation21], 1
    %4549 = vsyncpa [#allocation24], 1
    %4550 = vsyncpa [#allocation27], 1
    %4551 = vsyncpa [#allocation30], 1
    %4552 = vsyncpa [#allocation4], 1
    %s4553 = scalar_lea.sflag [#allocation4], 1
    %4554 = vsyncpa %s4553, 1

</llo_original>
